<compile_context>
chip_gen: v5e
topology: v5e:2x2
jax: 0.10.0
libtpu: 0.0.40
codegen_flags: <defaults>
</compile_context>

<pallas_src>
import numpy as np

import jax
import jax.numpy as jnp
from jax.experimental import pallas as pl
from jax.experimental.pallas import tpu as pltpu


# ----------------------------------------------------------------------------
# Model configuration (synthetic SK backbone/head).
# ----------------------------------------------------------------------------
CHANS = [3, 8, 16, 32, 64]   # backbone channels (input -> 4 stride-2 stages)
C_HEAD = 16                  # per-branch projection channels
CR = 8                       # SK reduction channels
NB = 4                       # number of branches / scales
NJ = 4                       # number of joints / heatmaps

PARAM_ORDER = [
    "bb_w0", "bb_b0",
    "bb_wg1", "bb_b1", "S1",
    "bb_wg2", "bb_b2", "S2",
    "bb_wg3", "bb_b3", "S3",
    "hd_wp0", "hd_wp1", "hd_wp2", "hd_wp3", "hd_bp",
    "sk_w1t", "sk_b1", "sk_w2", "sk_b2",
    "hd_wh", "hd_bh",
    "U1", "U2", "U3",
]


# ----------------------------------------------------------------------------
# Host-side constant builders (0/1 selection matrices; tiny).
# ----------------------------------------------------------------------------
def _make_sel_mats(H, W):
    """S[t, h*W+w, a*Wo+b] = 1 iff (h, w) == (2a+i-1, 2b+j-1), t = i*3+j.

    Encodes the padded stride-2 3x3 im2col gather as 9 tiny 0/1 matmuls.
    """
    Ho, Wo = H // 2, W // 2
    S = np.zeros((9, H * W, Ho * Wo), np.float32)
    for i in range(3):
        for j in range(3):
            t = i * 3 + j
            for a in range(Ho):
                h = 2 * a + i - 1
                if h < 0 or h >= H:
                    continue
                for b in range(Wo):
                    w = 2 * b + j - 1
                    if w < 0 or w >= W:
                        continue
                    S[t, h * W + w, a * Wo + b] = 1.0
    return S


def _make_upsample_mat(Hn, Wn, f):
    """U[src, dst] = 1 iff nearest-neighbor source of dst pixel is src (x f)."""
    H0, W0 = Hn * f, Wn * f
    U = np.zeros((Hn * Wn, H0 * W0), np.float32)
    for a0 in range(H0):
        for b0 in range(W0):
            U[(a0 // f) * Wn + (b0 // f), a0 * W0 + b0] = 1.0
    return U


# ----------------------------------------------------------------------------
# XLA glue: stage-0 im2col on the raw input (input only; everything else is
# computed inside the fused kernel).  col rows ordered (tap, cin), columns
# ordered (B, ho, wo) so per-batch lane blocks are contiguous.
# ----------------------------------------------------------------------------
def im2col_T(x_t, kh, kw, stride, pad):
    Cin, B, H, W = x_t.shape
    xp = jnp.pad(x_t, ((0, 0), (0, 0), (pad, pad), (pad, pad)))
    Ho = (H + 2 * pad - kh) // stride + 1
    Wo = (W + 2 * pad - kw) // stride + 1
    taps = []
    for i in range(kh):
        for j in range(kw):
            taps.append(xp[:, :, i:i + stride * Ho:stride, j:j + stride * Wo:stride])
    col = jnp.stack(taps, axis=0)                       # [9, Cin, B, Ho, Wo]
    return col.reshape(kh * kw * Cin, B * Ho * Wo), Ho, Wo


# ----------------------------------------------------------------------------
# The fused MSKNet kernel: backbone (4 stride-2 convs) + SK head, one batch
# element per grid step.  All matmul inputs bf16, accumulation f32.
# ----------------------------------------------------------------------------
def msknet_kernel(col0_ref, w0_ref, b0_ref,
                  wg1_ref, b1_ref, s1_ref,
                  wg2_ref, b2_ref, s2_ref,
                  wg3_ref, b3_ref, s3_ref,
                  wp0_ref, wp1_ref, wp2_ref, wp3_ref, bp_ref,
                  skw1t_ref, skb1_ref, skw2_ref, skb2_ref,
                  wh_ref, bh_ref,
                  u1_ref, u2_ref, u3_ref,
                  o_ref):
    f32 = jnp.float32
    bf16 = jnp.bfloat16

    # --- backbone stage 0: plain im2col matmul (col prepared outside) -------
    acc0 = jnp.dot(w0_ref[...], col0_ref[...], preferred_element_type=f32)
    x0 = jnp.maximum(acc0 + b0_ref[...], 0.0)                      # (8, 256)

    # --- backbone stages 1..3: stride-2 3x3 conv as matmuls only ------------
    #   g   = Wg @ f            (applies all 9 tap weight blocks at once)
    #   out = relu( sum_t g[t*Cout:(t+1)*Cout] @ S_t  + b )
    # S_t are 0/1 matrices encoding the padded strided gather, so no strided
    # slicing / reshape is needed inside the kernel.
    def conv_stage(wg_ref, s_ref, b_ref, f_prev, cout):
        g = jnp.dot(wg_ref[...], f_prev.astype(bf16),
                    preferred_element_type=f32).astype(bf16)       # (9*Cout, HWin)
        acc = jnp.dot(g[0:cout, :], s_ref[0], preferred_element_type=f32)
        for t in range(1, 9):
            acc = acc + jnp.dot(g[t * cout:(t + 1) * cout, :], s_ref[t],
                                preferred_element_type=f32)
        return jnp.maximum(acc + b_ref[...], 0.0)                  # (Cout, HWout)

    x1 = conv_stage(wg1_ref, s1_ref, b1_ref, x0, CHANS[2])         # (16, 64)
    x2 = conv_stage(wg2_ref, s2_ref, b2_ref, x1, CHANS[3])         # (32, 16)
    x3 = conv_stage(wg3_ref, s3_ref, b3_ref, x2, CHANS[4])         # (64, 4)

    # --- SK head -------------------------------------------------------------
    # Per-branch 1x1 projections at NATIVE resolution (upsample commutes with
    # 1x1 convs, per-channel scaling and global average pooling).
    feats = (x0, x1, x2, x3)
    wps = (wp0_ref, wp1_ref, wp2_ref, wp3_ref)
    bp = bp_ref[...]                                               # (NB*C, 1)
    projs = []
    for n in range(NB):
        p = jnp.dot(wps[n][...], feats[n].astype(bf16),
                    preferred_element_type=f32)                    # (C, HW_n)
        projs.append(jnp.maximum(p + bp[n * C_HEAD:(n + 1) * C_HEAD, :], 0.0))

    # Squeeze: GAP of the upsampled sum == sum of native-resolution means.
    s = projs[0].mean(axis=1, keepdims=True)
    for n in range(1, NB):
        s = s + projs[n].mean(axis=1, keepdims=True)               # (C, 1)

    # Excitation without N=1 MXU matmuls: broadcast-multiply + axis reductions
    # (VPU + XLU), f32 throughout.
    z = jnp.maximum(jnp.sum(skw1t_ref[...] * s, axis=0, keepdims=True)
                    + skb1_ref[...], 0.0)                          # (1, Cr)
    logits = (jnp.sum(skw2_ref[...] * z, axis=1, keepdims=True)
              + skb2_ref[...])                                     # (NB*C, 1)

    # Softmax over the NB branches, per channel (exact division).
    m = logits[0:C_HEAD, :]
    for n in range(1, NB):
        m = jnp.maximum(m, logits[n * C_HEAD:(n + 1) * C_HEAD, :])
    es = [jnp.exp(logits[n * C_HEAD:(n + 1) * C_HEAD, :] - m) for n in range(NB)]
    denom = es[0]
    for n in range(1, NB):
        denom = denom + es[n]

    # heat = sum_n upsample_n( Wh @ (a_n * p_n) ) + bh : only the tiny (J,HW_n)
    # branch results are upsampled (0/1 matmuls U_n), never the features.
    wh = wh_ref[...]                                               # (J, C) bf16
    ups = (None, u1_ref, u2_ref, u3_ref)
    heat = None
    for n in range(NB):
        a_n = es[n] / denom                                        # (C, 1)
        q = jnp.dot(wh, (a_n * projs[n]).astype(bf16),
                    preferred_element_type=f32)                    # (J, HW_n)
        if n > 0:
            q = jnp.dot(q.astype(bf16), ups[n][...],
                        preferred_element_type=f32)                # (J, HW0)
        heat = q if heat is None else heat + q

    o_ref[...] = (heat + bh_ref[...]).astype(o_ref.dtype)          # (J, 256)


# ----------------------------------------------------------------------------
# Parameters (synthetic, deterministic).
# ----------------------------------------------------------------------------
def init_params(key):
    ks = list(jax.random.split(key, 12))

    def nrm(k, shape, scale=0.1):
        return (scale * jax.random.normal(k, shape)).astype(jnp.float32)

    p = {}

    # Stage 0: w (Cout, Cin, 3, 3) -> (Cout, 9*Cin), columns ordered (tap, cin)
    # to match im2col_T's row ordering.
    w0 = nrm(ks[0], (CHANS[1], CHANS[0], 3, 3))
    p["bb_w0"] = jnp.transpose(w0, (0, 2, 3, 1)).reshape(
        CHANS[1], 9 * CHANS[0]).astype(jnp.bfloat16)
    p["bb_b0"] = jnp.zeros((CHANS[1], 1), jnp.float32)

    # Stages 1..3: Wg (9*Cout, Cin), rows ordered (tap, cout); plus selection
    # matrices S_s (9, HW_in, HW_out) encoding the strided/padded gather.
    spatial_in = [(16, 16), (8, 8), (4, 4)]
    for s in range(1, 4):
        cin, cout = CHANS[s], CHANS[s + 1]
        w = nrm(ks[s], (cout, cin, 3, 3))
        p[f"bb_wg{s}"] = jnp.transpose(w, (2, 3, 0, 1)).reshape(
            9 * cout, cin).astype(jnp.bfloat16)
        p[f"bb_b{s}"] = jnp.zeros((cout, 1), jnp.float32)
        h, wdim = spatial_in[s - 1]
        p[f"S{s}"] = jnp.asarray(_make_sel_mats(h, wdim), jnp.bfloat16)

    # Head: per-branch 1x1 projections (native resolution).
    for n in range(NB):
        p[f"hd_wp{n}"] = nrm(ks[4 + n], (C_HEAD, CHANS[n + 1])).astype(jnp.bfloat16)
    p["hd_bp"] = jnp.zeros((NB * C_HEAD, 1), jnp.float32)

    # SK attention (kept f32; computed on VPU/XLU in-kernel).
    p["sk_w1t"] = nrm(ks[8], (C_HEAD, CR))          # W1^T, shape (C, Cr)
    p["sk_b1"] = jnp.zeros((1, CR), jnp.float32)
    p["sk_w2"] = nrm(ks[9], (NB * C_HEAD, CR))
    p["sk_b2"] = jnp.zeros((NB * C_HEAD, 1), jnp.float32)

    # Final 1x1 heatmap conv.
    p["hd_wh"] = nrm(ks[10], (NJ, C_HEAD)).astype(jnp.bfloat16)
    p["hd_bh"] = jnp.zeros((NJ, 1), jnp.float32)

    # Nearest-neighbour upsample matrices to the x0 (16x16) resolution.
    p["U1"] = jnp.asarray(_make_upsample_mat(8, 8, 2), jnp.bfloat16)
    p["U2"] = jnp.asarray(_make_upsample_mat(4, 4, 4), jnp.bfloat16)
    p["U3"] = jnp.asarray(_make_upsample_mat(2, 2, 8), jnp.bfloat16)
    return p


# ----------------------------------------------------------------------------
# Forward pass: one fused pallas_call (grid over batch) + trivial glue.
# ----------------------------------------------------------------------------
def msknet_forward(params, x, target, target_weight):
    """x: NCHW [B, 3, H, W] -> heatmaps NCHW [B, J, H/2, W/2].

    target / target_weight are accepted (as in the PyTorch forward signature)
    but, like the reference forward, are not used to produce y.
    """
    del target, target_weight
    x = x.astype(jnp.float32)                       # torch.Tensor.float(x)
    B = x.shape[0]

    # Stage-0 im2col as cheap XLA glue on the 24 KB input.
    x_t = jnp.transpose(x, (1, 0, 2, 3))            # [Cin, B, H, W]
    col0, Ho, Wo = im2col_T(x_t, 3, 3, 2, 1)        # [27, B*Ho*Wo]
    col0 = col0.astype(jnp.bfloat16)
    HW0 = Ho * Wo
    K0 = col0.shape[0]

    ordered = [params[k] for k in PARAM_ORDER]
    in_specs = [pl.BlockSpec((K0, HW0), lambda b: (0, b))]          # per-batch lanes
    for a in ordered:                                               # full-array consts
        in_specs.append(pl.BlockSpec(a.shape, lambda b, _n=a.ndim: (0,) * _n))

    heat = pl.pallas_call(
        msknet_kernel,
        out_shape=jax.ShapeDtypeStruct((B, NJ, HW0), jnp.float32),
        grid=(B,),
        in_specs=in_specs,
        out_specs=pl.BlockSpec((pl.Squeezed(), NJ, HW0), lambda b: (b, 0, 0)),
        compiler_params=pltpu.CompilerParams(dimension_semantics=("parallel",)),
    )(col0, *ordered)

    return heat.reshape(B, NJ, Ho, Wo)              # already NCHW, free reshape


if __name__ == "__main__":
    key = jax.random.PRNGKey(0)
    k_x, k_t, k_p = jax.random.split(key, 3)

    B, Cin, H, W = 2, 3, 32, 32
    x = jax.random.normal(k_x, (B, Cin, H, W), dtype=jnp.float32)
    target = jax.random.uniform(k_t, (B, NJ, H // 2, W // 2), dtype=jnp.float32)
    target_weight = jnp.ones((B, NJ, 1), dtype=jnp.float32)

    params = init_params(k_p)

    out = jax.jit(msknet_forward)(params, x, target, target_weight)
    out = jax.block_until_ready(out)
    assert out.shape == (B, NJ, H // 2, W // 2), out.shape
    assert jnp.all(jnp.isfinite(out))
    print("KERNEL_OK")
</pallas_src>

<mosaic_0001>
module attributes {stable_mosaic.version = 11 : i64} {
  func.func @msknet_kernel(%arg0: i32, %arg1: memref<27x256xbf16, #tpu.memory_space<vmem>>, %arg2: memref<8x27xbf16, #tpu.memory_space<vmem>>, %arg3: memref<8x1xf32, #tpu.memory_space<vmem>>, %arg4: memref<144x8xbf16, #tpu.memory_space<vmem>>, %arg5: memref<16x1xf32, #tpu.memory_space<vmem>>, %arg6: memref<9x256x64xbf16, #tpu.memory_space<vmem>>, %arg7: memref<288x16xbf16, #tpu.memory_space<vmem>>, %arg8: memref<32x1xf32, #tpu.memory_space<vmem>>, %arg9: memref<9x64x16xbf16, #tpu.memory_space<vmem>>, %arg10: memref<576x32xbf16, #tpu.memory_space<vmem>>, %arg11: memref<64x1xf32, #tpu.memory_space<vmem>>, %arg12: memref<9x16x4xbf16, #tpu.memory_space<vmem>>, %arg13: memref<16x8xbf16, #tpu.memory_space<vmem>>, %arg14: memref<16x16xbf16, #tpu.memory_space<vmem>>, %arg15: memref<16x32xbf16, #tpu.memory_space<vmem>>, %arg16: memref<16x64xbf16, #tpu.memory_space<vmem>>, %arg17: memref<64x1xf32, #tpu.memory_space<vmem>>, %arg18: memref<16x8xf32, #tpu.memory_space<vmem>>, %arg19: memref<1x8xf32, #tpu.memory_space<vmem>>, %arg20: memref<64x8xf32, #tpu.memory_space<vmem>>, %arg21: memref<64x1xf32, #tpu.memory_space<vmem>>, %arg22: memref<4x16xbf16, #tpu.memory_space<vmem>>, %arg23: memref<4x1xf32, #tpu.memory_space<vmem>>, %arg24: memref<64x256xbf16, #tpu.memory_space<vmem>>, %arg25: memref<16x256xbf16, #tpu.memory_space<vmem>>, %arg26: memref<4x256xbf16, #tpu.memory_space<vmem>>, %arg27: memref<1x4x256xf32, #tpu.memory_space<vmem>>) attributes {dimension_semantics = [#tpu.dimension_semantics<parallel>], iteration_bounds = array<i64: 2>, scalar_prefetch = 0 : i64, scratch_operands = 0 : i64, tpu.core_type = #tpu.core_type<tc>, window_params = [{transform_indices = @transform_0, window_bounds = array<i64: 27, 256>}, {pipeline_mode = #tpu.pipeline_mode<synchronous>, transform_indices = @transform_1, window_bounds = array<i64: 8, 27>}, {pipeline_mode = #tpu.pipeline_mode<synchronous>, transform_indices = @transform_2, window_bounds = array<i64: 8, 1>}, {pipeline_mode = #tpu.pipeline_mode<synchronous>, transform_indices = @transform_3, window_bounds = array<i64: 144, 8>}, {pipeline_mode = #tpu.pipeline_mode<synchronous>, transform_indices = @transform_4, window_bounds = array<i64: 16, 1>}, {pipeline_mode = #tpu.pipeline_mode<synchronous>, transform_indices = @transform_5, window_bounds = array<i64: 9, 256, 64>}, {pipeline_mode = #tpu.pipeline_mode<synchronous>, transform_indices = @transform_6, window_bounds = array<i64: 288, 16>}, {pipeline_mode = #tpu.pipeline_mode<synchronous>, transform_indices = @transform_7, window_bounds = array<i64: 32, 1>}, {pipeline_mode = #tpu.pipeline_mode<synchronous>, transform_indices = @transform_8, window_bounds = array<i64: 9, 64, 16>}, {pipeline_mode = #tpu.pipeline_mode<synchronous>, transform_indices = @transform_9, window_bounds = array<i64: 576, 32>}, {pipeline_mode = #tpu.pipeline_mode<synchronous>, transform_indices = @transform_10, window_bounds = array<i64: 64, 1>}, {pipeline_mode = #tpu.pipeline_mode<synchronous>, transform_indices = @transform_11, window_bounds = array<i64: 9, 16, 4>}, {pipeline_mode = #tpu.pipeline_mode<synchronous>, transform_indices = @transform_12, window_bounds = array<i64: 16, 8>}, {pipeline_mode = #tpu.pipeline_mode<synchronous>, transform_indices = @transform_13, window_bounds = array<i64: 16, 16>}, {pipeline_mode = #tpu.pipeline_mode<synchronous>, transform_indices = @transform_14, window_bounds = array<i64: 16, 32>}, {pipeline_mode = #tpu.pipeline_mode<synchronous>, transform_indices = @transform_15, window_bounds = array<i64: 16, 64>}, {pipeline_mode = #tpu.pipeline_mode<synchronous>, transform_indices = @transform_16, window_bounds = array<i64: 64, 1>}, {pipeline_mode = #tpu.pipeline_mode<synchronous>, transform_indices = @transform_17, window_bounds = array<i64: 16, 8>}, {pipeline_mode = #tpu.pipeline_mode<synchronous>, transform_indices = @transform_18, window_bounds = array<i64: 1, 8>}, {pipeline_mode = #tpu.pipeline_mode<synchronous>, transform_indices = @transform_19, window_bounds = array<i64: 64, 8>}, {pipeline_mode = #tpu.pipeline_mode<synchronous>, transform_indices = @transform_20, window_bounds = array<i64: 64, 1>}, {pipeline_mode = #tpu.pipeline_mode<synchronous>, transform_indices = @transform_21, window_bounds = array<i64: 4, 16>}, {pipeline_mode = #tpu.pipeline_mode<synchronous>, transform_indices = @transform_22, window_bounds = array<i64: 4, 1>}, {pipeline_mode = #tpu.pipeline_mode<synchronous>, transform_indices = @transform_23, window_bounds = array<i64: 64, 256>}, {pipeline_mode = #tpu.pipeline_mode<synchronous>, transform_indices = @transform_24, window_bounds = array<i64: 16, 256>}, {pipeline_mode = #tpu.pipeline_mode<synchronous>, transform_indices = @transform_25, window_bounds = array<i64: 4, 256>}, {transform_indices = @transform_26, window_bounds = array<i64: 1, 4, 256>}]} {
    %c0 = arith.constant 0 : index
    %c0_0 = arith.constant 0 : index
    %0 = vector.load %arg2[%c0, %c0_0] : memref<8x27xbf16, #tpu.memory_space<vmem>>, vector<8x27xbf16>
    %c0_1 = arith.constant 0 : index
    %c0_2 = arith.constant 0 : index
    %1 = vector.load %arg1[%c0_1, %c0_2] : memref<27x256xbf16, #tpu.memory_space<vmem>>, vector<27x256xbf16>
    %cst = arith.constant dense<0.000000e+00> : vector<8x256xf32>
    %2 = tpu.matmul %0, %1, %cst {dimension_numbers = #tpu.dot_dimension_numbers<[1], [0], [0], [1], [0, 0, 1, 1], [], []>} : vector<8x27xbf16>, vector<27x256xbf16>, vector<8x256xf32> -> vector<8x256xf32>
    %c0_3 = arith.constant 0 : index
    %c0_4 = arith.constant 0 : index
    %3 = vector.load %arg3[%c0_3, %c0_4] : memref<8x1xf32, #tpu.memory_space<vmem>>, vector<8x1xf32>
    %4 = vector.broadcast %3 : vector<8x1xf32> to vector<8x256xf32>
    %5 = arith.addf %2, %4 : vector<8x256xf32>
    %cst_5 = arith.constant 0.000000e+00 : f32
    %6 = vector.broadcast %cst_5 : f32 to vector<8x256xf32>
    %7 = arith.maximumf %5, %6 : vector<8x256xf32>
    %c0_6 = arith.constant 0 : index
    %c0_7 = arith.constant 0 : index
    %8 = vector.load %arg4[%c0_6, %c0_7] : memref<144x8xbf16, #tpu.memory_space<vmem>>, vector<144x8xbf16>
    %9 = arith.truncf %7 : vector<8x256xf32> to vector<8x256xbf16>
    %cst_8 = arith.constant dense<0.000000e+00> : vector<144x256xf32>
    %10 = tpu.matmul %8, %9, %cst_8 {dimension_numbers = #tpu.dot_dimension_numbers<[1], [0], [0], [1], [0, 0, 1, 1], [], []>} : vector<144x8xbf16>, vector<8x256xbf16>, vector<144x256xf32> -> vector<144x256xf32>
    %11 = arith.truncf %10 : vector<144x256xf32> to vector<144x256xbf16>
    %12 = vector.extract_strided_slice %11 {offsets = [0, 0], sizes = [16, 256], strides = [1, 1]} : vector<144x256xbf16> to vector<16x256xbf16>
    %c0_9 = arith.constant 0 : index
    %c0_10 = arith.constant 0 : index
    %c0_11 = arith.constant 0 : index
    %13 = vector.load %arg6[%c0_9, %c0_10, %c0_11] : memref<9x256x64xbf16, #tpu.memory_space<vmem>>, vector<1x256x64xbf16>
    %14 = vector.shape_cast %13 : vector<1x256x64xbf16> to vector<256x64xbf16>
    %cst_12 = arith.constant dense<0.000000e+00> : vector<16x64xf32>
    %15 = tpu.matmul %12, %14, %cst_12 {dimension_numbers = #tpu.dot_dimension_numbers<[1], [0], [0], [1], [0, 0, 1, 1], [], []>} : vector<16x256xbf16>, vector<256x64xbf16>, vector<16x64xf32> -> vector<16x64xf32>
    %16 = vector.extract_strided_slice %11 {offsets = [16, 0], sizes = [16, 256], strides = [1, 1]} : vector<144x256xbf16> to vector<16x256xbf16>
    %c1 = arith.constant 1 : index
    %c0_13 = arith.constant 0 : index
    %c0_14 = arith.constant 0 : index
    %17 = vector.load %arg6[%c1, %c0_13, %c0_14] : memref<9x256x64xbf16, #tpu.memory_space<vmem>>, vector<1x256x64xbf16>
    %18 = vector.shape_cast %17 : vector<1x256x64xbf16> to vector<256x64xbf16>
    %cst_15 = arith.constant dense<0.000000e+00> : vector<16x64xf32>
    %19 = tpu.matmul %16, %18, %cst_15 {dimension_numbers = #tpu.dot_dimension_numbers<[1], [0], [0], [1], [0, 0, 1, 1], [], []>} : vector<16x256xbf16>, vector<256x64xbf16>, vector<16x64xf32> -> vector<16x64xf32>
    %20 = arith.addf %15, %19 : vector<16x64xf32>
    %21 = vector.extract_strided_slice %11 {offsets = [32, 0], sizes = [16, 256], strides = [1, 1]} : vector<144x256xbf16> to vector<16x256xbf16>
    %c2 = arith.constant 2 : index
    %c0_16 = arith.constant 0 : index
    %c0_17 = arith.constant 0 : index
    %22 = vector.load %arg6[%c2, %c0_16, %c0_17] : memref<9x256x64xbf16, #tpu.memory_space<vmem>>, vector<1x256x64xbf16>
    %23 = vector.shape_cast %22 : vector<1x256x64xbf16> to vector<256x64xbf16>
    %cst_18 = arith.constant dense<0.000000e+00> : vector<16x64xf32>
    %24 = tpu.matmul %21, %23, %cst_18 {dimension_numbers = #tpu.dot_dimension_numbers<[1], [0], [0], [1], [0, 0, 1, 1], [], []>} : vector<16x256xbf16>, vector<256x64xbf16>, vector<16x64xf32> -> vector<16x64xf32>
    %25 = arith.addf %20, %24 : vector<16x64xf32>
    %26 = vector.extract_strided_slice %11 {offsets = [48, 0], sizes = [16, 256], strides = [1, 1]} : vector<144x256xbf16> to vector<16x256xbf16>
    %c3 = arith.constant 3 : index
    %c0_19 = arith.constant 0 : index
    %c0_20 = arith.constant 0 : index
    %27 = vector.load %arg6[%c3, %c0_19, %c0_20] : memref<9x256x64xbf16, #tpu.memory_space<vmem>>, vector<1x256x64xbf16>
    %28 = vector.shape_cast %27 : vector<1x256x64xbf16> to vector<256x64xbf16>
    %cst_21 = arith.constant dense<0.000000e+00> : vector<16x64xf32>
    %29 = tpu.matmul %26, %28, %cst_21 {dimension_numbers = #tpu.dot_dimension_numbers<[1], [0], [0], [1], [0, 0, 1, 1], [], []>} : vector<16x256xbf16>, vector<256x64xbf16>, vector<16x64xf32> -> vector<16x64xf32>
    %30 = arith.addf %25, %29 : vector<16x64xf32>
    %31 = vector.extract_strided_slice %11 {offsets = [64, 0], sizes = [16, 256], strides = [1, 1]} : vector<144x256xbf16> to vector<16x256xbf16>
    %c4 = arith.constant 4 : index
    %c0_22 = arith.constant 0 : index
    %c0_23 = arith.constant 0 : index
    %32 = vector.load %arg6[%c4, %c0_22, %c0_23] : memref<9x256x64xbf16, #tpu.memory_space<vmem>>, vector<1x256x64xbf16>
    %33 = vector.shape_cast %32 : vector<1x256x64xbf16> to vector<256x64xbf16>
    %cst_24 = arith.constant dense<0.000000e+00> : vector<16x64xf32>
    %34 = tpu.matmul %31, %33, %cst_24 {dimension_numbers = #tpu.dot_dimension_numbers<[1], [0], [0], [1], [0, 0, 1, 1], [], []>} : vector<16x256xbf16>, vector<256x64xbf16>, vector<16x64xf32> -> vector<16x64xf32>
    %35 = arith.addf %30, %34 : vector<16x64xf32>
    %36 = vector.extract_strided_slice %11 {offsets = [80, 0], sizes = [16, 256], strides = [1, 1]} : vector<144x256xbf16> to vector<16x256xbf16>
    %c5 = arith.constant 5 : index
    %c0_25 = arith.constant 0 : index
    %c0_26 = arith.constant 0 : index
    %37 = vector.load %arg6[%c5, %c0_25, %c0_26] : memref<9x256x64xbf16, #tpu.memory_space<vmem>>, vector<1x256x64xbf16>
    %38 = vector.shape_cast %37 : vector<1x256x64xbf16> to vector<256x64xbf16>
    %cst_27 = arith.constant dense<0.000000e+00> : vector<16x64xf32>
    %39 = tpu.matmul %36, %38, %cst_27 {dimension_numbers = #tpu.dot_dimension_numbers<[1], [0], [0], [1], [0, 0, 1, 1], [], []>} : vector<16x256xbf16>, vector<256x64xbf16>, vector<16x64xf32> -> vector<16x64xf32>
    %40 = arith.addf %35, %39 : vector<16x64xf32>
    %41 = vector.extract_strided_slice %11 {offsets = [96, 0], sizes = [16, 256], strides = [1, 1]} : vector<144x256xbf16> to vector<16x256xbf16>
    %c6 = arith.constant 6 : index
    %c0_28 = arith.constant 0 : index
    %c0_29 = arith.constant 0 : index
    %42 = vector.load %arg6[%c6, %c0_28, %c0_29] : memref<9x256x64xbf16, #tpu.memory_space<vmem>>, vector<1x256x64xbf16>
    %43 = vector.shape_cast %42 : vector<1x256x64xbf16> to vector<256x64xbf16>
    %cst_30 = arith.constant dense<0.000000e+00> : vector<16x64xf32>
    %44 = tpu.matmul %41, %43, %cst_30 {dimension_numbers = #tpu.dot_dimension_numbers<[1], [0], [0], [1], [0, 0, 1, 1], [], []>} : vector<16x256xbf16>, vector<256x64xbf16>, vector<16x64xf32> -> vector<16x64xf32>
    %45 = arith.addf %40, %44 : vector<16x64xf32>
    %46 = vector.extract_strided_slice %11 {offsets = [112, 0], sizes = [16, 256], strides = [1, 1]} : vector<144x256xbf16> to vector<16x256xbf16>
    %c7 = arith.constant 7 : index
    %c0_31 = arith.constant 0 : index
    %c0_32 = arith.constant 0 : index
    %47 = vector.load %arg6[%c7, %c0_31, %c0_32] : memref<9x256x64xbf16, #tpu.memory_space<vmem>>, vector<1x256x64xbf16>
    %48 = vector.shape_cast %47 : vector<1x256x64xbf16> to vector<256x64xbf16>
    %cst_33 = arith.constant dense<0.000000e+00> : vector<16x64xf32>
    %49 = tpu.matmul %46, %48, %cst_33 {dimension_numbers = #tpu.dot_dimension_numbers<[1], [0], [0], [1], [0, 0, 1, 1], [], []>} : vector<16x256xbf16>, vector<256x64xbf16>, vector<16x64xf32> -> vector<16x64xf32>
    %50 = arith.addf %45, %49 : vector<16x64xf32>
    %51 = vector.extract_strided_slice %11 {offsets = [128, 0], sizes = [16, 256], strides = [1, 1]} : vector<144x256xbf16> to vector<16x256xbf16>
    %c8 = arith.constant 8 : index
    %c0_34 = arith.constant 0 : index
    %c0_35 = arith.constant 0 : index
    %52 = vector.load %arg6[%c8, %c0_34, %c0_35] : memref<9x256x64xbf16, #tpu.memory_space<vmem>>, vector<1x256x64xbf16>
    %53 = vector.shape_cast %52 : vector<1x256x64xbf16> to vector<256x64xbf16>
    %cst_36 = arith.constant dense<0.000000e+00> : vector<16x64xf32>
    %54 = tpu.matmul %51, %53, %cst_36 {dimension_numbers = #tpu.dot_dimension_numbers<[1], [0], [0], [1], [0, 0, 1, 1], [], []>} : vector<16x256xbf16>, vector<256x64xbf16>, vector<16x64xf32> -> vector<16x64xf32>
    %55 = arith.addf %50, %54 : vector<16x64xf32>
    %c0_37 = arith.constant 0 : index
    %c0_38 = arith.constant 0 : index
    %56 = vector.load %arg5[%c0_37, %c0_38] : memref<16x1xf32, #tpu.memory_space<vmem>>, vector<16x1xf32>
    %57 = vector.broadcast %56 : vector<16x1xf32> to vector<16x64xf32>
    %58 = arith.addf %55, %57 : vector<16x64xf32>
    %cst_39 = arith.constant 0.000000e+00 : f32
    %59 = vector.broadcast %cst_39 : f32 to vector<16x64xf32>
    %60 = arith.maximumf %58, %59 : vector<16x64xf32>
    %c0_40 = arith.constant 0 : index
    %c0_41 = arith.constant 0 : index
    %61 = vector.load %arg7[%c0_40, %c0_41] : memref<288x16xbf16, #tpu.memory_space<vmem>>, vector<288x16xbf16>
    %62 = arith.truncf %60 : vector<16x64xf32> to vector<16x64xbf16>
    %cst_42 = arith.constant dense<0.000000e+00> : vector<288x64xf32>
    %63 = tpu.matmul %61, %62, %cst_42 {dimension_numbers = #tpu.dot_dimension_numbers<[1], [0], [0], [1], [0, 0, 1, 1], [], []>} : vector<288x16xbf16>, vector<16x64xbf16>, vector<288x64xf32> -> vector<288x64xf32>
    %64 = arith.truncf %63 : vector<288x64xf32> to vector<288x64xbf16>
    %65 = vector.extract_strided_slice %64 {offsets = [0, 0], sizes = [32, 64], strides = [1, 1]} : vector<288x64xbf16> to vector<32x64xbf16>
    %c0_43 = arith.constant 0 : index
    %c0_44 = arith.constant 0 : index
    %c0_45 = arith.constant 0 : index
    %66 = vector.load %arg9[%c0_43, %c0_44, %c0_45] : memref<9x64x16xbf16, #tpu.memory_space<vmem>>, vector<1x64x16xbf16>
    %67 = vector.shape_cast %66 : vector<1x64x16xbf16> to vector<64x16xbf16>
    %cst_46 = arith.constant dense<0.000000e+00> : vector<32x16xf32>
    %68 = tpu.matmul %65, %67, %cst_46 {dimension_numbers = #tpu.dot_dimension_numbers<[1], [0], [0], [1], [0, 0, 1, 1], [], []>} : vector<32x64xbf16>, vector<64x16xbf16>, vector<32x16xf32> -> vector<32x16xf32>
    %69 = vector.extract_strided_slice %64 {offsets = [32, 0], sizes = [32, 64], strides = [1, 1]} : vector<288x64xbf16> to vector<32x64xbf16>
    %c1_47 = arith.constant 1 : index
    %c0_48 = arith.constant 0 : index
    %c0_49 = arith.constant 0 : index
    %70 = vector.load %arg9[%c1_47, %c0_48, %c0_49] : memref<9x64x16xbf16, #tpu.memory_space<vmem>>, vector<1x64x16xbf16>
    %71 = vector.shape_cast %70 : vector<1x64x16xbf16> to vector<64x16xbf16>
    %cst_50 = arith.constant dense<0.000000e+00> : vector<32x16xf32>
    %72 = tpu.matmul %69, %71, %cst_50 {dimension_numbers = #tpu.dot_dimension_numbers<[1], [0], [0], [1], [0, 0, 1, 1], [], []>} : vector<32x64xbf16>, vector<64x16xbf16>, vector<32x16xf32> -> vector<32x16xf32>
    %73 = arith.addf %68, %72 : vector<32x16xf32>
    %74 = vector.extract_strided_slice %64 {offsets = [64, 0], sizes = [32, 64], strides = [1, 1]} : vector<288x64xbf16> to vector<32x64xbf16>
    %c2_51 = arith.constant 2 : index
    %c0_52 = arith.constant 0 : index
    %c0_53 = arith.constant 0 : index
    %75 = vector.load %arg9[%c2_51, %c0_52, %c0_53] : memref<9x64x16xbf16, #tpu.memory_space<vmem>>, vector<1x64x16xbf16>
    %76 = vector.shape_cast %75 : vector<1x64x16xbf16> to vector<64x16xbf16>
    %cst_54 = arith.constant dense<0.000000e+00> : vector<32x16xf32>
    %77 = tpu.matmul %74, %76, %cst_54 {dimension_numbers = #tpu.dot_dimension_numbers<[1], [0], [0], [1], [0, 0, 1, 1], [], []>} : vector<32x64xbf16>, vector<64x16xbf16>, vector<32x16xf32> -> vector<32x16xf32>
    %78 = arith.addf %73, %77 : vector<32x16xf32>
    %79 = vector.extract_strided_slice %64 {offsets = [96, 0], sizes = [32, 64], strides = [1, 1]} : vector<288x64xbf16> to vector<32x64xbf16>
    %c3_55 = arith.constant 3 : index
    %c0_56 = arith.constant 0 : index
    %c0_57 = arith.constant 0 : index
    %80 = vector.load %arg9[%c3_55, %c0_56, %c0_57] : memref<9x64x16xbf16, #tpu.memory_space<vmem>>, vector<1x64x16xbf16>
    %81 = vector.shape_cast %80 : vector<1x64x16xbf16> to vector<64x16xbf16>
    %cst_58 = arith.constant dense<0.000000e+00> : vector<32x16xf32>
    %82 = tpu.matmul %79, %81, %cst_58 {dimension_numbers = #tpu.dot_dimension_numbers<[1], [0], [0], [1], [0, 0, 1, 1], [], []>} : vector<32x64xbf16>, vector<64x16xbf16>, vector<32x16xf32> -> vector<32x16xf32>
    %83 = arith.addf %78, %82 : vector<32x16xf32>
    %84 = vector.extract_strided_slice %64 {offsets = [128, 0], sizes = [32, 64], strides = [1, 1]} : vector<288x64xbf16> to vector<32x64xbf16>
    %c4_59 = arith.constant 4 : index
    %c0_60 = arith.constant 0 : index
    %c0_61 = arith.constant 0 : index
    %85 = vector.load %arg9[%c4_59, %c0_60, %c0_61] : memref<9x64x16xbf16, #tpu.memory_space<vmem>>, vector<1x64x16xbf16>
    %86 = vector.shape_cast %85 : vector<1x64x16xbf16> to vector<64x16xbf16>
    %cst_62 = arith.constant dense<0.000000e+00> : vector<32x16xf32>
    %87 = tpu.matmul %84, %86, %cst_62 {dimension_numbers = #tpu.dot_dimension_numbers<[1], [0], [0], [1], [0, 0, 1, 1], [], []>} : vector<32x64xbf16>, vector<64x16xbf16>, vector<32x16xf32> -> vector<32x16xf32>
    %88 = arith.addf %83, %87 : vector<32x16xf32>
    %89 = vector.extract_strided_slice %64 {offsets = [160, 0], sizes = [32, 64], strides = [1, 1]} : vector<288x64xbf16> to vector<32x64xbf16>
    %c5_63 = arith.constant 5 : index
    %c0_64 = arith.constant 0 : index
    %c0_65 = arith.constant 0 : index
    %90 = vector.load %arg9[%c5_63, %c0_64, %c0_65] : memref<9x64x16xbf16, #tpu.memory_space<vmem>>, vector<1x64x16xbf16>
    %91 = vector.shape_cast %90 : vector<1x64x16xbf16> to vector<64x16xbf16>
    %cst_66 = arith.constant dense<0.000000e+00> : vector<32x16xf32>
    %92 = tpu.matmul %89, %91, %cst_66 {dimension_numbers = #tpu.dot_dimension_numbers<[1], [0], [0], [1], [0, 0, 1, 1], [], []>} : vector<32x64xbf16>, vector<64x16xbf16>, vector<32x16xf32> -> vector<32x16xf32>
    %93 = arith.addf %88, %92 : vector<32x16xf32>
    %94 = vector.extract_strided_slice %64 {offsets = [192, 0], sizes = [32, 64], strides = [1, 1]} : vector<288x64xbf16> to vector<32x64xbf16>
    %c6_67 = arith.constant 6 : index
    %c0_68 = arith.constant 0 : index
    %c0_69 = arith.constant 0 : index
    %95 = vector.load %arg9[%c6_67, %c0_68, %c0_69] : memref<9x64x16xbf16, #tpu.memory_space<vmem>>, vector<1x64x16xbf16>
    %96 = vector.shape_cast %95 : vector<1x64x16xbf16> to vector<64x16xbf16>
    %cst_70 = arith.constant dense<0.000000e+00> : vector<32x16xf32>
    %97 = tpu.matmul %94, %96, %cst_70 {dimension_numbers = #tpu.dot_dimension_numbers<[1], [0], [0], [1], [0, 0, 1, 1], [], []>} : vector<32x64xbf16>, vector<64x16xbf16>, vector<32x16xf32> -> vector<32x16xf32>
    %98 = arith.addf %93, %97 : vector<32x16xf32>
    %99 = vector.extract_strided_slice %64 {offsets = [224, 0], sizes = [32, 64], strides = [1, 1]} : vector<288x64xbf16> to vector<32x64xbf16>
    %c7_71 = arith.constant 7 : index
    %c0_72 = arith.constant 0 : index
    %c0_73 = arith.constant 0 : index
    %100 = vector.load %arg9[%c7_71, %c0_72, %c0_73] : memref<9x64x16xbf16, #tpu.memory_space<vmem>>, vector<1x64x16xbf16>
    %101 = vector.shape_cast %100 : vector<1x64x16xbf16> to vector<64x16xbf16>
    %cst_74 = arith.constant dense<0.000000e+00> : vector<32x16xf32>
    %102 = tpu.matmul %99, %101, %cst_74 {dimension_numbers = #tpu.dot_dimension_numbers<[1], [0], [0], [1], [0, 0, 1, 1], [], []>} : vector<32x64xbf16>, vector<64x16xbf16>, vector<32x16xf32> -> vector<32x16xf32>
    %103 = arith.addf %98, %102 : vector<32x16xf32>
    %104 = vector.extract_strided_slice %64 {offsets = [256, 0], sizes = [32, 64], strides = [1, 1]} : vector<288x64xbf16> to vector<32x64xbf16>
    %c8_75 = arith.constant 8 : index
    %c0_76 = arith.constant 0 : index
    %c0_77 = arith.constant 0 : index
    %105 = vector.load %arg9[%c8_75, %c0_76, %c0_77] : memref<9x64x16xbf16, #tpu.memory_space<vmem>>, vector<1x64x16xbf16>
    %106 = vector.shape_cast %105 : vector<1x64x16xbf16> to vector<64x16xbf16>
    %cst_78 = arith.constant dense<0.000000e+00> : vector<32x16xf32>
    %107 = tpu.matmul %104, %106, %cst_78 {dimension_numbers = #tpu.dot_dimension_numbers<[1], [0], [0], [1], [0, 0, 1, 1], [], []>} : vector<32x64xbf16>, vector<64x16xbf16>, vector<32x16xf32> -> vector<32x16xf32>
    %108 = arith.addf %103, %107 : vector<32x16xf32>
    %c0_79 = arith.constant 0 : index
    %c0_80 = arith.constant 0 : index
    %109 = vector.load %arg8[%c0_79, %c0_80] : memref<32x1xf32, #tpu.memory_space<vmem>>, vector<32x1xf32>
    %110 = vector.broadcast %109 : vector<32x1xf32> to vector<32x16xf32>
    %111 = arith.addf %108, %110 : vector<32x16xf32>
    %cst_81 = arith.constant 0.000000e+00 : f32
    %112 = vector.broadcast %cst_81 : f32 to vector<32x16xf32>
    %113 = arith.maximumf %111, %112 : vector<32x16xf32>
    %c0_82 = arith.constant 0 : index
    %c0_83 = arith.constant 0 : index
    %114 = vector.load %arg10[%c0_82, %c0_83] : memref<576x32xbf16, #tpu.memory_space<vmem>>, vector<576x32xbf16>
    %115 = arith.truncf %113 : vector<32x16xf32> to vector<32x16xbf16>
    %cst_84 = arith.constant dense<0.000000e+00> : vector<576x16xf32>
    %116 = tpu.matmul %114, %115, %cst_84 {dimension_numbers = #tpu.dot_dimension_numbers<[1], [0], [0], [1], [0, 0, 1, 1], [], []>} : vector<576x32xbf16>, vector<32x16xbf16>, vector<576x16xf32> -> vector<576x16xf32>
    %117 = arith.truncf %116 : vector<576x16xf32> to vector<576x16xbf16>
    %118 = vector.extract_strided_slice %117 {offsets = [0, 0], sizes = [64, 16], strides = [1, 1]} : vector<576x16xbf16> to vector<64x16xbf16>
    %c0_85 = arith.constant 0 : index
    %c0_86 = arith.constant 0 : index
    %c0_87 = arith.constant 0 : index
    %119 = vector.load %arg12[%c0_85, %c0_86, %c0_87] : memref<9x16x4xbf16, #tpu.memory_space<vmem>>, vector<1x16x4xbf16>
    %120 = vector.shape_cast %119 : vector<1x16x4xbf16> to vector<16x4xbf16>
    %cst_88 = arith.constant dense<0.000000e+00> : vector<64x4xf32>
    %121 = tpu.matmul %118, %120, %cst_88 {dimension_numbers = #tpu.dot_dimension_numbers<[1], [0], [0], [1], [0, 0, 1, 1], [], []>} : vector<64x16xbf16>, vector<16x4xbf16>, vector<64x4xf32> -> vector<64x4xf32>
    %122 = vector.extract_strided_slice %117 {offsets = [64, 0], sizes = [64, 16], strides = [1, 1]} : vector<576x16xbf16> to vector<64x16xbf16>
    %c1_89 = arith.constant 1 : index
    %c0_90 = arith.constant 0 : index
    %c0_91 = arith.constant 0 : index
    %123 = vector.load %arg12[%c1_89, %c0_90, %c0_91] : memref<9x16x4xbf16, #tpu.memory_space<vmem>>, vector<1x16x4xbf16>
    %124 = vector.shape_cast %123 : vector<1x16x4xbf16> to vector<16x4xbf16>
    %cst_92 = arith.constant dense<0.000000e+00> : vector<64x4xf32>
    %125 = tpu.matmul %122, %124, %cst_92 {dimension_numbers = #tpu.dot_dimension_numbers<[1], [0], [0], [1], [0, 0, 1, 1], [], []>} : vector<64x16xbf16>, vector<16x4xbf16>, vector<64x4xf32> -> vector<64x4xf32>
    %126 = arith.addf %121, %125 : vector<64x4xf32>
    %127 = vector.extract_strided_slice %117 {offsets = [128, 0], sizes = [64, 16], strides = [1, 1]} : vector<576x16xbf16> to vector<64x16xbf16>
    %c2_93 = arith.constant 2 : index
    %c0_94 = arith.constant 0 : index
    %c0_95 = arith.constant 0 : index
    %128 = vector.load %arg12[%c2_93, %c0_94, %c0_95] : memref<9x16x4xbf16, #tpu.memory_space<vmem>>, vector<1x16x4xbf16>
    %129 = vector.shape_cast %128 : vector<1x16x4xbf16> to vector<16x4xbf16>
    %cst_96 = arith.constant dense<0.000000e+00> : vector<64x4xf32>
    %130 = tpu.matmul %127, %129, %cst_96 {dimension_numbers = #tpu.dot_dimension_numbers<[1], [0], [0], [1], [0, 0, 1, 1], [], []>} : vector<64x16xbf16>, vector<16x4xbf16>, vector<64x4xf32> -> vector<64x4xf32>
    %131 = arith.addf %126, %130 : vector<64x4xf32>
    %132 = vector.extract_strided_slice %117 {offsets = [192, 0], sizes = [64, 16], strides = [1, 1]} : vector<576x16xbf16> to vector<64x16xbf16>
    %c3_97 = arith.constant 3 : index
    %c0_98 = arith.constant 0 : index
    %c0_99 = arith.constant 0 : index
    %133 = vector.load %arg12[%c3_97, %c0_98, %c0_99] : memref<9x16x4xbf16, #tpu.memory_space<vmem>>, vector<1x16x4xbf16>
    %134 = vector.shape_cast %133 : vector<1x16x4xbf16> to vector<16x4xbf16>
    %cst_100 = arith.constant dense<0.000000e+00> : vector<64x4xf32>
    %135 = tpu.matmul %132, %134, %cst_100 {dimension_numbers = #tpu.dot_dimension_numbers<[1], [0], [0], [1], [0, 0, 1, 1], [], []>} : vector<64x16xbf16>, vector<16x4xbf16>, vector<64x4xf32> -> vector<64x4xf32>
    %136 = arith.addf %131, %135 : vector<64x4xf32>
    %137 = vector.extract_strided_slice %117 {offsets = [256, 0], sizes = [64, 16], strides = [1, 1]} : vector<576x16xbf16> to vector<64x16xbf16>
    %c4_101 = arith.constant 4 : index
    %c0_102 = arith.constant 0 : index
    %c0_103 = arith.constant 0 : index
    %138 = vector.load %arg12[%c4_101, %c0_102, %c0_103] : memref<9x16x4xbf16, #tpu.memory_space<vmem>>, vector<1x16x4xbf16>
    %139 = vector.shape_cast %138 : vector<1x16x4xbf16> to vector<16x4xbf16>
    %cst_104 = arith.constant dense<0.000000e+00> : vector<64x4xf32>
    %140 = tpu.matmul %137, %139, %cst_104 {dimension_numbers = #tpu.dot_dimension_numbers<[1], [0], [0], [1], [0, 0, 1, 1], [], []>} : vector<64x16xbf16>, vector<16x4xbf16>, vector<64x4xf32> -> vector<64x4xf32>
    %141 = arith.addf %136, %140 : vector<64x4xf32>
    %142 = vector.extract_strided_slice %117 {offsets = [320, 0], sizes = [64, 16], strides = [1, 1]} : vector<576x16xbf16> to vector<64x16xbf16>
    %c5_105 = arith.constant 5 : index
    %c0_106 = arith.constant 0 : index
    %c0_107 = arith.constant 0 : index
    %143 = vector.load %arg12[%c5_105, %c0_106, %c0_107] : memref<9x16x4xbf16, #tpu.memory_space<vmem>>, vector<1x16x4xbf16>
    %144 = vector.shape_cast %143 : vector<1x16x4xbf16> to vector<16x4xbf16>
    %cst_108 = arith.constant dense<0.000000e+00> : vector<64x4xf32>
    %145 = tpu.matmul %142, %144, %cst_108 {dimension_numbers = #tpu.dot_dimension_numbers<[1], [0], [0], [1], [0, 0, 1, 1], [], []>} : vector<64x16xbf16>, vector<16x4xbf16>, vector<64x4xf32> -> vector<64x4xf32>
    %146 = arith.addf %141, %145 : vector<64x4xf32>
    %147 = vector.extract_strided_slice %117 {offsets = [384, 0], sizes = [64, 16], strides = [1, 1]} : vector<576x16xbf16> to vector<64x16xbf16>
    %c6_109 = arith.constant 6 : index
    %c0_110 = arith.constant 0 : index
    %c0_111 = arith.constant 0 : index
    %148 = vector.load %arg12[%c6_109, %c0_110, %c0_111] : memref<9x16x4xbf16, #tpu.memory_space<vmem>>, vector<1x16x4xbf16>
    %149 = vector.shape_cast %148 : vector<1x16x4xbf16> to vector<16x4xbf16>
    %cst_112 = arith.constant dense<0.000000e+00> : vector<64x4xf32>
    %150 = tpu.matmul %147, %149, %cst_112 {dimension_numbers = #tpu.dot_dimension_numbers<[1], [0], [0], [1], [0, 0, 1, 1], [], []>} : vector<64x16xbf16>, vector<16x4xbf16>, vector<64x4xf32> -> vector<64x4xf32>
    %151 = arith.addf %146, %150 : vector<64x4xf32>
    %152 = vector.extract_strided_slice %117 {offsets = [448, 0], sizes = [64, 16], strides = [1, 1]} : vector<576x16xbf16> to vector<64x16xbf16>
    %c7_113 = arith.constant 7 : index
    %c0_114 = arith.constant 0 : index
    %c0_115 = arith.constant 0 : index
    %153 = vector.load %arg12[%c7_113, %c0_114, %c0_115] : memref<9x16x4xbf16, #tpu.memory_space<vmem>>, vector<1x16x4xbf16>
    %154 = vector.shape_cast %153 : vector<1x16x4xbf16> to vector<16x4xbf16>
    %cst_116 = arith.constant dense<0.000000e+00> : vector<64x4xf32>
    %155 = tpu.matmul %152, %154, %cst_116 {dimension_numbers = #tpu.dot_dimension_numbers<[1], [0], [0], [1], [0, 0, 1, 1], [], []>} : vector<64x16xbf16>, vector<16x4xbf16>, vector<64x4xf32> -> vector<64x4xf32>
    %156 = arith.addf %151, %155 : vector<64x4xf32>
    %157 = vector.extract_strided_slice %117 {offsets = [512, 0], sizes = [64, 16], strides = [1, 1]} : vector<576x16xbf16> to vector<64x16xbf16>
    %c8_117 = arith.constant 8 : index
    %c0_118 = arith.constant 0 : index
    %c0_119 = arith.constant 0 : index
    %158 = vector.load %arg12[%c8_117, %c0_118, %c0_119] : memref<9x16x4xbf16, #tpu.memory_space<vmem>>, vector<1x16x4xbf16>
    %159 = vector.shape_cast %158 : vector<1x16x4xbf16> to vector<16x4xbf16>
    %cst_120 = arith.constant dense<0.000000e+00> : vector<64x4xf32>
    %160 = tpu.matmul %157, %159, %cst_120 {dimension_numbers = #tpu.dot_dimension_numbers<[1], [0], [0], [1], [0, 0, 1, 1], [], []>} : vector<64x16xbf16>, vector<16x4xbf16>, vector<64x4xf32> -> vector<64x4xf32>
    %161 = arith.addf %156, %160 : vector<64x4xf32>
    %c0_121 = arith.constant 0 : index
    %c0_122 = arith.constant 0 : index
    %162 = vector.load %arg11[%c0_121, %c0_122] : memref<64x1xf32, #tpu.memory_space<vmem>>, vector<64x1xf32>
    %163 = vector.broadcast %162 : vector<64x1xf32> to vector<64x4xf32>
    %164 = arith.addf %161, %163 : vector<64x4xf32>
    %cst_123 = arith.constant 0.000000e+00 : f32
    %165 = vector.broadcast %cst_123 : f32 to vector<64x4xf32>
    %166 = arith.maximumf %164, %165 : vector<64x4xf32>
    %c0_124 = arith.constant 0 : index
    %c0_125 = arith.constant 0 : index
    %167 = vector.load %arg17[%c0_124, %c0_125] : memref<64x1xf32, #tpu.memory_space<vmem>>, vector<64x1xf32>
    %c0_126 = arith.constant 0 : index
    %c0_127 = arith.constant 0 : index
    %168 = vector.load %arg13[%c0_126, %c0_127] : memref<16x8xbf16, #tpu.memory_space<vmem>>, vector<16x8xbf16>
    %169 = arith.truncf %7 : vector<8x256xf32> to vector<8x256xbf16>
    %cst_128 = arith.constant dense<0.000000e+00> : vector<16x256xf32>
    %170 = tpu.matmul %168, %169, %cst_128 {dimension_numbers = #tpu.dot_dimension_numbers<[1], [0], [0], [1], [0, 0, 1, 1], [], []>} : vector<16x8xbf16>, vector<8x256xbf16>, vector<16x256xf32> -> vector<16x256xf32>
    %171 = vector.extract_strided_slice %167 {offsets = [0, 0], sizes = [16, 1], strides = [1, 1]} : vector<64x1xf32> to vector<16x1xf32>
    %172 = vector.broadcast %171 : vector<16x1xf32> to vector<16x256xf32>
    %173 = arith.addf %170, %172 : vector<16x256xf32>
    %cst_129 = arith.constant 0.000000e+00 : f32
    %174 = vector.broadcast %cst_129 : f32 to vector<16x256xf32>
    %175 = arith.maximumf %173, %174 : vector<16x256xf32>
    %c0_130 = arith.constant 0 : index
    %c0_131 = arith.constant 0 : index
    %176 = vector.load %arg14[%c0_130, %c0_131] : memref<16x16xbf16, #tpu.memory_space<vmem>>, vector<16x16xbf16>
    %177 = arith.truncf %60 : vector<16x64xf32> to vector<16x64xbf16>
    %cst_132 = arith.constant dense<0.000000e+00> : vector<16x64xf32>
    %178 = tpu.matmul %176, %177, %cst_132 {dimension_numbers = #tpu.dot_dimension_numbers<[1], [0], [0], [1], [0, 0, 1, 1], [], []>} : vector<16x16xbf16>, vector<16x64xbf16>, vector<16x64xf32> -> vector<16x64xf32>
    %179 = vector.extract_strided_slice %167 {offsets = [16, 0], sizes = [16, 1], strides = [1, 1]} : vector<64x1xf32> to vector<16x1xf32>
    %180 = vector.broadcast %179 : vector<16x1xf32> to vector<16x64xf32>
    %181 = arith.addf %178, %180 : vector<16x64xf32>
    %cst_133 = arith.constant 0.000000e+00 : f32
    %182 = vector.broadcast %cst_133 : f32 to vector<16x64xf32>
    %183 = arith.maximumf %181, %182 : vector<16x64xf32>
    %c0_134 = arith.constant 0 : index
    %c0_135 = arith.constant 0 : index
    %184 = vector.load %arg15[%c0_134, %c0_135] : memref<16x32xbf16, #tpu.memory_space<vmem>>, vector<16x32xbf16>
    %185 = arith.truncf %113 : vector<32x16xf32> to vector<32x16xbf16>
    %cst_136 = arith.constant dense<0.000000e+00> : vector<16x16xf32>
    %186 = tpu.matmul %184, %185, %cst_136 {dimension_numbers = #tpu.dot_dimension_numbers<[1], [0], [0], [1], [0, 0, 1, 1], [], []>} : vector<16x32xbf16>, vector<32x16xbf16>, vector<16x16xf32> -> vector<16x16xf32>
    %187 = vector.extract_strided_slice %167 {offsets = [32, 0], sizes = [16, 1], strides = [1, 1]} : vector<64x1xf32> to vector<16x1xf32>
    %188 = vector.broadcast %187 : vector<16x1xf32> to vector<16x16xf32>
    %189 = arith.addf %186, %188 : vector<16x16xf32>
    %cst_137 = arith.constant 0.000000e+00 : f32
    %190 = vector.broadcast %cst_137 : f32 to vector<16x16xf32>
    %191 = arith.maximumf %189, %190 : vector<16x16xf32>
    %c0_138 = arith.constant 0 : index
    %c0_139 = arith.constant 0 : index
    %192 = vector.load %arg16[%c0_138, %c0_139] : memref<16x64xbf16, #tpu.memory_space<vmem>>, vector<16x64xbf16>
    %193 = arith.truncf %166 : vector<64x4xf32> to vector<64x4xbf16>
    %cst_140 = arith.constant dense<0.000000e+00> : vector<16x4xf32>
    %194 = tpu.matmul %192, %193, %cst_140 {dimension_numbers = #tpu.dot_dimension_numbers<[1], [0], [0], [1], [0, 0, 1, 1], [], []>} : vector<16x64xbf16>, vector<64x4xbf16>, vector<16x4xf32> -> vector<16x4xf32>
    %195 = vector.extract_strided_slice %167 {offsets = [48, 0], sizes = [16, 1], strides = [1, 1]} : vector<64x1xf32> to vector<16x1xf32>
    %196 = vector.broadcast %195 : vector<16x1xf32> to vector<16x4xf32>
    %197 = arith.addf %194, %196 : vector<16x4xf32>
    %cst_141 = arith.constant 0.000000e+00 : f32
    %198 = vector.broadcast %cst_141 : f32 to vector<16x4xf32>
    %199 = arith.maximumf %197, %198 : vector<16x4xf32>
    %cst_142 = arith.constant dense<0.000000e+00> : vector<16xf32>
    %200 = vector.multi_reduction <add>, %175, %cst_142 [1] : vector<16x256xf32> to vector<16xf32>
    %201 = vector.shape_cast %200 : vector<16xf32> to vector<16x1xf32>
    %cst_143 = arith.constant 2.560000e+02 : f32
    %202 = vector.broadcast %cst_143 : f32 to vector<16x1xf32>
    %203 = arith.divf %201, %202 : vector<16x1xf32>
    %cst_144 = arith.constant dense<0.000000e+00> : vector<16xf32>
    %204 = vector.multi_reduction <add>, %183, %cst_144 [1] : vector<16x64xf32> to vector<16xf32>
    %205 = vector.shape_cast %204 : vector<16xf32> to vector<16x1xf32>
    %cst_145 = arith.constant 6.400000e+01 : f32
    %206 = vector.broadcast %cst_145 : f32 to vector<16x1xf32>
    %207 = arith.divf %205, %206 : vector<16x1xf32>
    %208 = arith.addf %203, %207 : vector<16x1xf32>
    %cst_146 = arith.constant dense<0.000000e+00> : vector<16xf32>
    %209 = vector.multi_reduction <add>, %191, %cst_146 [1] : vector<16x16xf32> to vector<16xf32>
    %210 = vector.shape_cast %209 : vector<16xf32> to vector<16x1xf32>
    %cst_147 = arith.constant 1.600000e+01 : f32
    %211 = vector.broadcast %cst_147 : f32 to vector<16x1xf32>
    %212 = arith.divf %210, %211 : vector<16x1xf32>
    %213 = arith.addf %208, %212 : vector<16x1xf32>
    %cst_148 = arith.constant dense<0.000000e+00> : vector<16xf32>
    %214 = vector.multi_reduction <add>, %199, %cst_148 [1] : vector<16x4xf32> to vector<16xf32>
    %215 = vector.shape_cast %214 : vector<16xf32> to vector<16x1xf32>
    %cst_149 = arith.constant 4.000000e+00 : f32
    %216 = vector.broadcast %cst_149 : f32 to vector<16x1xf32>
    %217 = arith.divf %215, %216 : vector<16x1xf32>
    %218 = arith.addf %213, %217 : vector<16x1xf32>
    %c0_150 = arith.constant 0 : index
    %c0_151 = arith.constant 0 : index
    %219 = vector.load %arg18[%c0_150, %c0_151] : memref<16x8xf32, #tpu.memory_space<vmem>>, vector<16x8xf32>
    %220 = vector.broadcast %218 : vector<16x1xf32> to vector<16x8xf32>
    %221 = arith.mulf %219, %220 : vector<16x8xf32>
    %cst_152 = arith.constant dense<0.000000e+00> : vector<8xf32>
    %222 = vector.multi_reduction <add>, %221, %cst_152 [0] : vector<16x8xf32> to vector<8xf32>
    %223 = vector.shape_cast %222 : vector<8xf32> to vector<1x8xf32>
    %c0_153 = arith.constant 0 : index
    %c0_154 = arith.constant 0 : index
    %224 = vector.load %arg19[%c0_153, %c0_154] : memref<1x8xf32, #tpu.memory_space<vmem>>, vector<1x8xf32>
    %225 = arith.addf %223, %224 : vector<1x8xf32>
    %cst_155 = arith.constant 0.000000e+00 : f32
    %226 = vector.broadcast %cst_155 : f32 to vector<1x8xf32>
    %227 = arith.maximumf %225, %226 : vector<1x8xf32>
    %c0_156 = arith.constant 0 : index
    %c0_157 = arith.constant 0 : index
    %228 = vector.load %arg20[%c0_156, %c0_157] : memref<64x8xf32, #tpu.memory_space<vmem>>, vector<64x8xf32>
    %229 = vector.broadcast %227 : vector<1x8xf32> to vector<64x8xf32>
    %230 = arith.mulf %228, %229 : vector<64x8xf32>
    %cst_158 = arith.constant dense<0.000000e+00> : vector<64xf32>
    %231 = vector.multi_reduction <add>, %230, %cst_158 [1] : vector<64x8xf32> to vector<64xf32>
    %232 = vector.shape_cast %231 : vector<64xf32> to vector<64x1xf32>
    %c0_159 = arith.constant 0 : index
    %c0_160 = arith.constant 0 : index
    %233 = vector.load %arg21[%c0_159, %c0_160] : memref<64x1xf32, #tpu.memory_space<vmem>>, vector<64x1xf32>
    %234 = arith.addf %232, %233 : vector<64x1xf32>
    %235 = vector.extract_strided_slice %234 {offsets = [0, 0], sizes = [16, 1], strides = [1, 1]} : vector<64x1xf32> to vector<16x1xf32>
    %236 = vector.extract_strided_slice %234 {offsets = [16, 0], sizes = [16, 1], strides = [1, 1]} : vector<64x1xf32> to vector<16x1xf32>
    %237 = arith.maximumf %235, %236 : vector<16x1xf32>
    %238 = vector.extract_strided_slice %234 {offsets = [32, 0], sizes = [16, 1], strides = [1, 1]} : vector<64x1xf32> to vector<16x1xf32>
    %239 = arith.maximumf %237, %238 : vector<16x1xf32>
    %240 = vector.extract_strided_slice %234 {offsets = [48, 0], sizes = [16, 1], strides = [1, 1]} : vector<64x1xf32> to vector<16x1xf32>
    %241 = arith.maximumf %239, %240 : vector<16x1xf32>
    %242 = vector.extract_strided_slice %234 {offsets = [0, 0], sizes = [16, 1], strides = [1, 1]} : vector<64x1xf32> to vector<16x1xf32>
    %243 = arith.subf %242, %241 : vector<16x1xf32>
    %244 = math.exp %243 : vector<16x1xf32>
    %245 = vector.extract_strided_slice %234 {offsets = [16, 0], sizes = [16, 1], strides = [1, 1]} : vector<64x1xf32> to vector<16x1xf32>
    %246 = arith.subf %245, %241 : vector<16x1xf32>
    %247 = math.exp %246 : vector<16x1xf32>
    %248 = vector.extract_strided_slice %234 {offsets = [32, 0], sizes = [16, 1], strides = [1, 1]} : vector<64x1xf32> to vector<16x1xf32>
    %249 = arith.subf %248, %241 : vector<16x1xf32>
    %250 = math.exp %249 : vector<16x1xf32>
    %251 = vector.extract_strided_slice %234 {offsets = [48, 0], sizes = [16, 1], strides = [1, 1]} : vector<64x1xf32> to vector<16x1xf32>
    %252 = arith.subf %251, %241 : vector<16x1xf32>
    %253 = math.exp %252 : vector<16x1xf32>
    %254 = arith.addf %244, %247 : vector<16x1xf32>
    %255 = arith.addf %254, %250 : vector<16x1xf32>
    %256 = arith.addf %255, %253 : vector<16x1xf32>
    %c0_161 = arith.constant 0 : index
    %c0_162 = arith.constant 0 : index
    %257 = vector.load %arg22[%c0_161, %c0_162] : memref<4x16xbf16, #tpu.memory_space<vmem>>, vector<4x16xbf16>
    %258 = arith.divf %244, %256 : vector<16x1xf32>
    %259 = vector.broadcast %258 : vector<16x1xf32> to vector<16x256xf32>
    %260 = arith.mulf %259, %175 : vector<16x256xf32>
    %261 = arith.truncf %260 : vector<16x256xf32> to vector<16x256xbf16>
    %cst_163 = arith.constant dense<0.000000e+00> : vector<4x256xf32>
    %262 = tpu.matmul %257, %261, %cst_163 {dimension_numbers = #tpu.dot_dimension_numbers<[1], [0], [0], [1], [0, 0, 1, 1], [], []>} : vector<4x16xbf16>, vector<16x256xbf16>, vector<4x256xf32> -> vector<4x256xf32>
    %263 = arith.divf %247, %256 : vector<16x1xf32>
    %264 = vector.broadcast %263 : vector<16x1xf32> to vector<16x64xf32>
    %265 = arith.mulf %264, %183 : vector<16x64xf32>
    %266 = arith.truncf %265 : vector<16x64xf32> to vector<16x64xbf16>
    %cst_164 = arith.constant dense<0.000000e+00> : vector<4x64xf32>
    %267 = tpu.matmul %257, %266, %cst_164 {dimension_numbers = #tpu.dot_dimension_numbers<[1], [0], [0], [1], [0, 0, 1, 1], [], []>} : vector<4x16xbf16>, vector<16x64xbf16>, vector<4x64xf32> -> vector<4x64xf32>
    %268 = arith.truncf %267 : vector<4x64xf32> to vector<4x64xbf16>
    %c0_165 = arith.constant 0 : index
    %c0_166 = arith.constant 0 : index
    %269 = vector.load %arg24[%c0_165, %c0_166] : memref<64x256xbf16, #tpu.memory_space<vmem>>, vector<64x256xbf16>
    %cst_167 = arith.constant dense<0.000000e+00> : vector<4x256xf32>
    %270 = tpu.matmul %268, %269, %cst_167 {dimension_numbers = #tpu.dot_dimension_numbers<[1], [0], [0], [1], [0, 0, 1, 1], [], []>} : vector<4x64xbf16>, vector<64x256xbf16>, vector<4x256xf32> -> vector<4x256xf32>
    %271 = arith.addf %262, %270 : vector<4x256xf32>
    %272 = arith.divf %250, %256 : vector<16x1xf32>
    %273 = vector.broadcast %272 : vector<16x1xf32> to vector<16x16xf32>
    %274 = arith.mulf %273, %191 : vector<16x16xf32>
    %275 = arith.truncf %274 : vector<16x16xf32> to vector<16x16xbf16>
    %cst_168 = arith.constant dense<0.000000e+00> : vector<4x16xf32>
    %276 = tpu.matmul %257, %275, %cst_168 {dimension_numbers = #tpu.dot_dimension_numbers<[1], [0], [0], [1], [0, 0, 1, 1], [], []>} : vector<4x16xbf16>, vector<16x16xbf16>, vector<4x16xf32> -> vector<4x16xf32>
    %277 = arith.truncf %276 : vector<4x16xf32> to vector<4x16xbf16>
    %c0_169 = arith.constant 0 : index
    %c0_170 = arith.constant 0 : index
    %278 = vector.load %arg25[%c0_169, %c0_170] : memref<16x256xbf16, #tpu.memory_space<vmem>>, vector<16x256xbf16>
    %cst_171 = arith.constant dense<0.000000e+00> : vector<4x256xf32>
    %279 = tpu.matmul %277, %278, %cst_171 {dimension_numbers = #tpu.dot_dimension_numbers<[1], [0], [0], [1], [0, 0, 1, 1], [], []>} : vector<4x16xbf16>, vector<16x256xbf16>, vector<4x256xf32> -> vector<4x256xf32>
    %280 = arith.addf %271, %279 : vector<4x256xf32>
    %281 = arith.divf %253, %256 : vector<16x1xf32>
    %282 = vector.broadcast %281 : vector<16x1xf32> to vector<16x4xf32>
    %283 = arith.mulf %282, %199 : vector<16x4xf32>
    %284 = arith.truncf %283 : vector<16x4xf32> to vector<16x4xbf16>
    %cst_172 = arith.constant dense<0.000000e+00> : vector<4x4xf32>
    %285 = tpu.matmul %257, %284, %cst_172 {dimension_numbers = #tpu.dot_dimension_numbers<[1], [0], [0], [1], [0, 0, 1, 1], [], []>} : vector<4x16xbf16>, vector<16x4xbf16>, vector<4x4xf32> -> vector<4x4xf32>
    %286 = arith.truncf %285 : vector<4x4xf32> to vector<4x4xbf16>
    %c0_173 = arith.constant 0 : index
    %c0_174 = arith.constant 0 : index
    %287 = vector.load %arg26[%c0_173, %c0_174] : memref<4x256xbf16, #tpu.memory_space<vmem>>, vector<4x256xbf16>
    %cst_175 = arith.constant dense<0.000000e+00> : vector<4x256xf32>
    %288 = tpu.matmul %286, %287, %cst_175 {dimension_numbers = #tpu.dot_dimension_numbers<[1], [0], [0], [1], [0, 0, 1, 1], [], []>} : vector<4x4xbf16>, vector<4x256xbf16>, vector<4x256xf32> -> vector<4x256xf32>
    %289 = arith.addf %280, %288 : vector<4x256xf32>
    %c0_176 = arith.constant 0 : index
    %c0_177 = arith.constant 0 : index
    %290 = vector.load %arg23[%c0_176, %c0_177] : memref<4x1xf32, #tpu.memory_space<vmem>>, vector<4x1xf32>
    %291 = vector.broadcast %290 : vector<4x1xf32> to vector<4x256xf32>
    %292 = arith.addf %289, %291 : vector<4x256xf32>
    %c0_178 = arith.constant 0 : index
    %c0_179 = arith.constant 0 : index
    %c0_180 = arith.constant 0 : index
    %293 = vector.load %arg27[%c0_178, %c0_179, %c0_180] : memref<1x4x256xf32, #tpu.memory_space<vmem>>, vector<1x4x256xf32>
    %294 = vector.shape_cast %293 : vector<1x4x256xf32> to vector<4x256xf32>
    %295 = vector.shape_cast %292 : vector<4x256xf32> to vector<1x4x256xf32>
    tpu.vector_store %arg27[%c0_178, %c0_179, %c0_180], %295 {strides = array<i32>} : memref<1x4x256xf32, #tpu.memory_space<vmem>>, vector<1x4x256xf32>,
    return
  }
  func.func @transform_0(%arg0: i32) -> (i32, i32) {
    %c0_i32 = arith.constant 0 : i32
    %c0_i32_0 = arith.constant 0 : i32
    return %c0_i32, %arg0 : i32, i32
  }
  func.func @transform_1(%arg0: i32) -> (i32, i32) {
    %c0_i32 = arith.constant 0 : i32
    %c0_i32_0 = arith.constant 0 : i32
    %c0_i32_1 = arith.constant 0 : i32
    return %c0_i32, %c0_i32_0 : i32, i32
  }
  func.func @transform_2(%arg0: i32) -> (i32, i32) {
    %c0_i32 = arith.constant 0 : i32
    %c0_i32_0 = arith.constant 0 : i32
    %c0_i32_1 = arith.constant 0 : i32
    return %c0_i32, %c0_i32_0 : i32, i32
  }
  func.func @transform_3(%arg0: i32) -> (i32, i32) {
    %c0_i32 = arith.constant 0 : i32
    %c0_i32_0 = arith.constant 0 : i32
    %c0_i32_1 = arith.constant 0 : i32
    return %c0_i32, %c0_i32_0 : i32, i32
  }
  func.func @transform_4(%arg0: i32) -> (i32, i32) {
    %c0_i32 = arith.constant 0 : i32
    %c0_i32_0 = arith.constant 0 : i32
    %c0_i32_1 = arith.constant 0 : i32
    return %c0_i32, %c0_i32_0 : i32, i32
  }
  func.func @transform_5(%arg0: i32) -> (i32, i32, i32) {
    %c0_i32 = arith.constant 0 : i32
    %c0_i32_0 = arith.constant 0 : i32
    %c0_i32_1 = arith.constant 0 : i32
    %c0_i32_2 = arith.constant 0 : i32
    return %c0_i32, %c0_i32_0, %c0_i32_1 : i32, i32, i32
  }
  func.func @transform_6(%arg0: i32) -> (i32, i32) {
    %c0_i32 = arith.constant 0 : i32
    %c0_i32_0 = arith.constant 0 : i32
    %c0_i32_1 = arith.constant 0 : i32
    return %c0_i32, %c0_i32_0 : i32, i32
  }
  func.func @transform_7(%arg0: i32) -> (i32, i32) {
    %c0_i32 = arith.constant 0 : i32
    %c0_i32_0 = arith.constant 0 : i32
    %c0_i32_1 = arith.constant 0 : i32
    return %c0_i32, %c0_i32_0 : i32, i32
  }
  func.func @transform_8(%arg0: i32) -> (i32, i32, i32) {
    %c0_i32 = arith.constant 0 : i32
    %c0_i32_0 = arith.constant 0 : i32
    %c0_i32_1 = arith.constant 0 : i32
    %c0_i32_2 = arith.constant 0 : i32
    return %c0_i32, %c0_i32_0, %c0_i32_1 : i32, i32, i32
  }
  func.func @transform_9(%arg0: i32) -> (i32, i32) {
    %c0_i32 = arith.constant 0 : i32
    %c0_i32_0 = arith.constant 0 : i32
    %c0_i32_1 = arith.constant 0 : i32
    return %c0_i32, %c0_i32_0 : i32, i32
  }
  func.func @transform_10(%arg0: i32) -> (i32, i32) {
    %c0_i32 = arith.constant 0 : i32
    %c0_i32_0 = arith.constant 0 : i32
    %c0_i32_1 = arith.constant 0 : i32
    return %c0_i32, %c0_i32_0 : i32, i32
  }
  func.func @transform_11(%arg0: i32) -> (i32, i32, i32) {
    %c0_i32 = arith.constant 0 : i32
    %c0_i32_0 = arith.constant 0 : i32
    %c0_i32_1 = arith.constant 0 : i32
    %c0_i32_2 = arith.constant 0 : i32
    return %c0_i32, %c0_i32_0, %c0_i32_1 : i32, i32, i32
  }
  func.func @transform_12(%arg0: i32) -> (i32, i32) {
    %c0_i32 = arith.constant 0 : i32
    %c0_i32_0 = arith.constant 0 : i32
    %c0_i32_1 = arith.constant 0 : i32
    return %c0_i32, %c0_i32_0 : i32, i32
  }
  func.func @transform_13(%arg0: i32) -> (i32, i32) {
    %c0_i32 = arith.constant 0 : i32
    %c0_i32_0 = arith.constant 0 : i32
    %c0_i32_1 = arith.constant 0 : i32
    return %c0_i32, %c0_i32_0 : i32, i32
  }
  func.func @transform_14(%arg0: i32) -> (i32, i32) {
    %c0_i32 = arith.constant 0 : i32
    %c0_i32_0 = arith.constant 0 : i32
    %c0_i32_1 = arith.constant 0 : i32
    return %c0_i32, %c0_i32_0 : i32, i32
  }
  func.func @transform_15(%arg0: i32) -> (i32, i32) {
    %c0_i32 = arith.constant 0 : i32
    %c0_i32_0 = arith.constant 0 : i32
    %c0_i32_1 = arith.constant 0 : i32
    return %c0_i32, %c0_i32_0 : i32, i32
  }
  func.func @transform_16(%arg0: i32) -> (i32, i32) {
    %c0_i32 = arith.constant 0 : i32
    %c0_i32_0 = arith.constant 0 : i32
    %c0_i32_1 = arith.constant 0 : i32
    return %c0_i32, %c0_i32_0 : i32, i32
  }
  func.func @transform_17(%arg0: i32) -> (i32, i32) {
    %c0_i32 = arith.constant 0 : i32
    %c0_i32_0 = arith.constant 0 : i32
    %c0_i32_1 = arith.constant 0 : i32
    return %c0_i32, %c0_i32_0 : i32, i32
  }
  func.func @transform_18(%arg0: i32) -> (i32, i32) {
    %c0_i32 = arith.constant 0 : i32
    %c0_i32_0 = arith.constant 0 : i32
    %c0_i32_1 = arith.constant 0 : i32
    return %c0_i32, %c0_i32_0 : i32, i32
  }
  func.func @transform_19(%arg0: i32) -> (i32, i32) {
    %c0_i32 = arith.constant 0 : i32
    %c0_i32_0 = arith.constant 0 : i32
    %c0_i32_1 = arith.constant 0 : i32
    return %c0_i32, %c0_i32_0 : i32, i32
  }
  func.func @transform_20(%arg0: i32) -> (i32, i32) {
    %c0_i32 = arith.constant 0 : i32
    %c0_i32_0 = arith.constant 0 : i32
    %c0_i32_1 = arith.constant 0 : i32
    return %c0_i32, %c0_i32_0 : i32, i32
  }
  func.func @transform_21(%arg0: i32) -> (i32, i32) {
    %c0_i32 = arith.constant 0 : i32
    %c0_i32_0 = arith.constant 0 : i32
    %c0_i32_1 = arith.constant 0 : i32
    return %c0_i32, %c0_i32_0 : i32, i32
  }
  func.func @transform_22(%arg0: i32) -> (i32, i32) {
    %c0_i32 = arith.constant 0 : i32
    %c0_i32_0 = arith.constant 0 : i32
    %c0_i32_1 = arith.constant 0 : i32
    return %c0_i32, %c0_i32_0 : i32, i32
  }
  func.func @transform_23(%arg0: i32) -> (i32, i32) {
    %c0_i32 = arith.constant 0 : i32
    %c0_i32_0 = arith.constant 0 : i32
    %c0_i32_1 = arith.constant 0 : i32
    return %c0_i32, %c0_i32_0 : i32, i32
  }
  func.func @transform_24(%arg0: i32) -> (i32, i32) {
    %c0_i32 = arith.constant 0 : i32
    %c0_i32_0 = arith.constant 0 : i32
    %c0_i32_1 = arith.constant 0 : i32
    return %c0_i32, %c0_i32_0 : i32, i32
  }
  func.func @transform_25(%arg0: i32) -> (i32, i32) {
    %c0_i32 = arith.constant 0 : i32
    %c0_i32_0 = arith.constant 0 : i32
    %c0_i32_1 = arith.constant 0 : i32
    return %c0_i32, %c0_i32_0 : i32, i32
  }
  func.func @transform_26(%arg0: i32) -> (i32, i32, i32) {
    %c0_i32 = arith.constant 0 : i32
    %c0_i32_0 = arith.constant 0 : i32
    %c0_i32_1 = arith.constant 0 : i32
    return %arg0, %c0_i32, %c0_i32_0 : i32, i32, i32
  }
}

</mosaic_0001>

<llo_original>
// kernel: msknet_forward.1
$region0: #{msknet_forward.1}
  #allocation0 [shape = 'u32[]', space=smem, size = 0x4, offset = 0x4, fixed_abs, tag = 'smem constant byte address 0x4 - core index']
  #allocation1 [shape = 'u32[72,128]{1,0:T(1,128)}', space=vmem, size = 0x9000, scoped, tag = 'internal scratch']
  %s0 = inlined_call_operand.vmem [shape: bf16[27,512], index: 0, kind: input, shape index: {}]
  %s1 = inlined_call_operand.vmem [shape: bf16[8,27], index: 1, kind: input, shape index: {}]
  %s2 = inlined_call_operand.vmem [shape: f32[8,1], index: 2, kind: input, shape index: {}]
  %s3 = inlined_call_operand.vmem [shape: bf16[144,8], index: 3, kind: input, shape index: {}]
  %s4 = inlined_call_operand.vmem [shape: f32[16,1], index: 4, kind: input, shape index: {}]
  %s5 = inlined_call_operand.vmem [shape: bf16[9,256,64], index: 5, kind: input, shape index: {}]
  %s6 = inlined_call_operand.vmem [shape: bf16[288,16], index: 6, kind: input, shape index: {}]
  %s7 = inlined_call_operand.vmem [shape: f32[32,1], index: 7, kind: input, shape index: {}]
  %s8 = inlined_call_operand.vmem [shape: bf16[9,64,16], index: 8, kind: input, shape index: {}]
  %s9 = inlined_call_operand.vmem [shape: bf16[576,32], index: 9, kind: input, shape index: {}]
  %s10 = inlined_call_operand.vmem [shape: f32[64,1], index: 10, kind: input, shape index: {}]
  %s11 = inlined_call_operand.vmem [shape: bf16[9,16,4], index: 11, kind: input, shape index: {}]
  %s12 = inlined_call_operand.vmem [shape: bf16[16,8], index: 12, kind: input, shape index: {}]
  %s13 = inlined_call_operand.vmem [shape: bf16[16,16], index: 13, kind: input, shape index: {}]
  %s14 = inlined_call_operand.vmem [shape: bf16[16,32], index: 14, kind: input, shape index: {}]
  %s15 = inlined_call_operand.vmem [shape: bf16[16,64], index: 15, kind: input, shape index: {}]
  %s16 = inlined_call_operand.vmem [shape: f32[64,1], index: 16, kind: input, shape index: {}]
  %s17 = inlined_call_operand.vmem [shape: f32[16,8], index: 17, kind: input, shape index: {}]
  %s18 = inlined_call_operand.vmem [shape: f32[1,8], index: 18, kind: input, shape index: {}]
  %s19 = inlined_call_operand.vmem [shape: f32[64,8], index: 19, kind: input, shape index: {}]
  %s20 = inlined_call_operand.vmem [shape: f32[64,1], index: 20, kind: input, shape index: {}]
  %s21 = inlined_call_operand.vmem [shape: bf16[4,16], index: 21, kind: input, shape index: {}]
  %s22 = inlined_call_operand.vmem [shape: f32[4,1], index: 22, kind: input, shape index: {}]
  %s23 = inlined_call_operand.vmem [shape: bf16[64,256], index: 23, kind: input, shape index: {}]
  %s24 = inlined_call_operand.vmem [shape: bf16[16,256], index: 24, kind: input, shape index: {}]
  %s25 = inlined_call_operand.vmem [shape: bf16[4,256], index: 25, kind: input, shape index: {}]
  %s26 = inlined_call_operand.vmem [shape: f32[2,4,256], index: 26, kind: output, shape index: {}]
  %s27 = sld [smem:[#allocation0]]
  $region175: #{msknet_forward.1} parent=0
    _
  %s29 = ssub.s32 1, %s27
  %s30 = scalar_select 0, %s29, %s27
  $region1: #{msknet_forward.1} parent=0
    #allocation2 [shape = 'u8[32768]{0}', space=vmem, size = 0x8000, scoped, tag = 'input window, operand 0']
    loop: start=0, step=1, limit=4
    $region2: #{msknet_forward.1} parent=1 // loop_pre_header
      _
    $region3: #{msknet_forward.1} parent=1 // loop_header
      %s32 = sphi 0, %s36
      %p33 = scmp.ge.s32.totalorder %s32, 4
      %s42 = sphi 0, %s44
      %s45 = sphi 0, %s42
      %s46 = sphi 0, %s45
      %s62 = sphi 0, %s46
      %s66 = sphi 0, %s66
      %s68 = sphi 0, %s66
      %s69 = sphi 0, %s68
      %s83 = sphi 0, %s69
      %s87 = sphi 0, %s87
      %s89 = sphi 0, %s87
      %s90 = sphi 0, %s89
      %s104 = sphi 0, %s90
      %s108 = sphi 0, %s108
      %s110 = sphi 0, %s108
      %s111 = sphi 0, %s110
      %s125 = sphi 0, %s111
      %s129 = sphi 0, %s129
      %s131 = sphi 0, %s129
      %s132 = sphi 0, %s131
      %s146 = sphi 0, %s132
      %s150 = sphi 0, %s150
      %s152 = sphi 0, %s150
      %s153 = sphi 0, %s152
      %s167 = sphi 0, %s153
      %s171 = sphi 0, %s171
      %s173 = sphi 0, %s171
      %s174 = sphi 0, %s173
      %s188 = sphi 0, %s174
      %s192 = sphi 0, %s192
      %s194 = sphi 0, %s192
      %s195 = sphi 0, %s194
      %s209 = sphi 0, %s195
      %s213 = sphi 0, %s213
      %s215 = sphi 0, %s213
      %s216 = sphi 0, %s215
      %s230 = sphi 0, %s216
      %s234 = sphi 0, %s234
      %s236 = sphi 0, %s234
      %s237 = sphi 0, %s236
      %s251 = sphi 0, %s237
      %s255 = sphi 0, %s255
      %s257 = sphi 0, %s255
      %s258 = sphi 0, %s257
      %s272 = sphi 0, %s258
      %s276 = sphi 0, %s276
      %s278 = sphi 0, %s276
      %s279 = sphi 0, %s278
      %s293 = sphi 0, %s279
      %s297 = sphi 0, %s297
      %s299 = sphi 0, %s297
      %s300 = sphi 0, %s299
      %s314 = sphi 0, %s300
      %s318 = sphi 0, %s318
      %s320 = sphi 0, %s318
      %s321 = sphi 0, %s320
      %s335 = sphi 0, %s321
      %s339 = sphi 0, %s339
      %s341 = sphi 0, %s339
      %s342 = sphi 0, %s341
      %s356 = sphi 0, %s342
      %s360 = sphi 0, %s360
      %s362 = sphi 0, %s360
      %s363 = sphi 0, %s362
      %s377 = sphi 0, %s363
      %s381 = sphi 0, %s381
      %s383 = sphi 0, %s381
      %s384 = sphi 0, %s383
      %s398 = sphi 0, %s384
      %s402 = sphi 0, %s402
      %s404 = sphi 0, %s402
      %s405 = sphi 0, %s404
      %s419 = sphi 0, %s405
      %s423 = sphi 0, %s423
      %s425 = sphi 0, %s423
      %s426 = sphi 0, %s425
      %s440 = sphi 0, %s426
      %s444 = sphi 0, %s444
      %s446 = sphi 0, %s444
      %s447 = sphi 0, %s446
      %s461 = sphi 0, %s447
      %s465 = sphi 0, %s465
      %s467 = sphi 0, %s465
      %s468 = sphi 0, %s467
      %s482 = sphi 0, %s468
      %s486 = sphi 0, %s486
      %s488 = sphi 0, %s486
      %s489 = sphi 0, %s488
      %s503 = sphi 0, %s489
      %s507 = sphi 0, %s507
      %s509 = sphi 0, %s507
      %s510 = sphi 0, %s509
      %s524 = sphi 0, %s510
      %s528 = sphi 0, %s528
      %s530 = sphi 0, %s528
      %s531 = sphi 0, %s530
      %s545 = sphi 0, %s531
      %s549 = sphi 0, %s549
      %s551 = sphi 0, %s549
      %s552 = sphi 0, %s551
      %s566 = sphi 0, %s552
      %s570 = sphi 0, %s570
      %s572 = sphi 0, %s570
      %s573 = sphi 0, %s572
      %s587 = sphi 0, %s573
      %s593 = sphi 0, %s595
      %s596 = sphi 0, %s593
      %s597 = sphi 0, %s596
      %s613 = sphi 0, %s597
    $region4: #{msknet_forward.1} parent=1 // loop_header_branch
      %35 = sbr.rel (%p33) target = $region8
    $region5: #{msknet_forward.1} parent=1 // loop_body
      %s37 = ssub.s32 %s32, 1
      %s38 = ssub.s32 %s32, 2
      %s39 = sadd.s32 %s32, 1
      %s40 = ssub.s32 %s32, %s39
      %p41 = scmp.eq.s32.totalorder %s40, 0
      %s43 = sadd.s32 %s42, 1
      %s44 = scalar_select %p41, %s42, %s43
      %p47 = pneg %p41
      %p48 = scmp.eq.s32.totalorder %s32, 1
      %p49 = por %p47, %p48
      %p50 = scmp.ne.s32.totalorder %s42, %s45
      %p51 = scmp.eq.s32.totalorder %s32, 0
      %p52 = por %p50, %p51
      %p53 = scmp.ne.s32.totalorder %s42, %s45
      %p54 = scmp.eq.s32.totalorder %s37, 1
      %p55 = por %p53, %p54
      %p56 = scmp.ne.s32.totalorder %s45, %s46
      %p57 = scmp.eq.s32.totalorder %s37, 0
      %p58 = por %p56, %p57
      %p59 = scmp.ne.s32.totalorder %s45, %s46
      %p60 = scmp.eq.s32.totalorder %s38, 1
      %p61 = por %p59, %p60
      %p63 = scmp.ne.s32.totalorder %s46, %s62
      %p64 = scmp.eq.s32.totalorder %s38, 0
      %p65 = por %p63, %p64
      %s67 = sadd.s32 %s66, 1
      %p70 = scmp.eq.s32.totalorder %s32, 1
      %p71 = scmp.ne.s32.totalorder %s66, %s68
      %p72 = scmp.eq.s32.totalorder %s32, 0
      %p73 = por %p71, %p72
      %p74 = scmp.ne.s32.totalorder %s66, %s68
      %p75 = scmp.eq.s32.totalorder %s37, 1
      %p76 = por %p74, %p75
      %p77 = scmp.ne.s32.totalorder %s68, %s69
      %p78 = scmp.eq.s32.totalorder %s37, 0
      %p79 = por %p77, %p78
      %p80 = scmp.ne.s32.totalorder %s68, %s69
      %p81 = scmp.eq.s32.totalorder %s38, 1
      %p82 = por %p80, %p81
      %p84 = scmp.ne.s32.totalorder %s69, %s83
      %p85 = scmp.eq.s32.totalorder %s38, 0
      %p86 = por %p84, %p85
      %s88 = sadd.s32 %s87, 1
      %p91 = scmp.eq.s32.totalorder %s32, 1
      %p92 = scmp.ne.s32.totalorder %s87, %s89
      %p93 = scmp.eq.s32.totalorder %s32, 0
      %p94 = por %p92, %p93
      %p95 = scmp.ne.s32.totalorder %s87, %s89
      %p96 = scmp.eq.s32.totalorder %s37, 1
      %p97 = por %p95, %p96
      %p98 = scmp.ne.s32.totalorder %s89, %s90
      %p99 = scmp.eq.s32.totalorder %s37, 0
      %p100 = por %p98, %p99
      %p101 = scmp.ne.s32.totalorder %s89, %s90
      %p102 = scmp.eq.s32.totalorder %s38, 1
      %p103 = por %p101, %p102
      %p105 = scmp.ne.s32.totalorder %s90, %s104
      %p106 = scmp.eq.s32.totalorder %s38, 0
      %p107 = por %p105, %p106
      %s109 = sadd.s32 %s108, 1
      %p112 = scmp.eq.s32.totalorder %s32, 1
      %p113 = scmp.ne.s32.totalorder %s108, %s110
      %p114 = scmp.eq.s32.totalorder %s32, 0
      %p115 = por %p113, %p114
      %p116 = scmp.ne.s32.totalorder %s108, %s110
      %p117 = scmp.eq.s32.totalorder %s37, 1
      %p118 = por %p116, %p117
      %p119 = scmp.ne.s32.totalorder %s110, %s111
      %p120 = scmp.eq.s32.totalorder %s37, 0
      %p121 = por %p119, %p120
      %p122 = scmp.ne.s32.totalorder %s110, %s111
      %p123 = scmp.eq.s32.totalorder %s38, 1
      %p124 = por %p122, %p123
      %p126 = scmp.ne.s32.totalorder %s111, %s125
      %p127 = scmp.eq.s32.totalorder %s38, 0
      %p128 = por %p126, %p127
      %s130 = sadd.s32 %s129, 1
      %p133 = scmp.eq.s32.totalorder %s32, 1
      %p134 = scmp.ne.s32.totalorder %s129, %s131
      %p135 = scmp.eq.s32.totalorder %s32, 0
      %p136 = por %p134, %p135
      %p137 = scmp.ne.s32.totalorder %s129, %s131
      %p138 = scmp.eq.s32.totalorder %s37, 1
      %p139 = por %p137, %p138
      %p140 = scmp.ne.s32.totalorder %s131, %s132
      %p141 = scmp.eq.s32.totalorder %s37, 0
      %p142 = por %p140, %p141
      %p143 = scmp.ne.s32.totalorder %s131, %s132
      %p144 = scmp.eq.s32.totalorder %s38, 1
      %p145 = por %p143, %p144
      %p147 = scmp.ne.s32.totalorder %s132, %s146
      %p148 = scmp.eq.s32.totalorder %s38, 0
      %p149 = por %p147, %p148
      %s151 = sadd.s32 %s150, 1
      %p154 = scmp.eq.s32.totalorder %s32, 1
      %p155 = scmp.ne.s32.totalorder %s150, %s152
      %p156 = scmp.eq.s32.totalorder %s32, 0
      %p157 = por %p155, %p156
      %p158 = scmp.ne.s32.totalorder %s150, %s152
      %p159 = scmp.eq.s32.totalorder %s37, 1
      %p160 = por %p158, %p159
      %p161 = scmp.ne.s32.totalorder %s152, %s153
      %p162 = scmp.eq.s32.totalorder %s37, 0
      %p163 = por %p161, %p162
      %p164 = scmp.ne.s32.totalorder %s152, %s153
      %p165 = scmp.eq.s32.totalorder %s38, 1
      %p166 = por %p164, %p165
      %p168 = scmp.ne.s32.totalorder %s153, %s167
      %p169 = scmp.eq.s32.totalorder %s38, 0
      %p170 = por %p168, %p169
      %s172 = sadd.s32 %s171, 1
      %p175 = scmp.eq.s32.totalorder %s32, 1
      %p176 = scmp.ne.s32.totalorder %s171, %s173
      %p177 = scmp.eq.s32.totalorder %s32, 0
      %p178 = por %p176, %p177
      %p179 = scmp.ne.s32.totalorder %s171, %s173
      %p180 = scmp.eq.s32.totalorder %s37, 1
      %p181 = por %p179, %p180
      %p182 = scmp.ne.s32.totalorder %s173, %s174
      %p183 = scmp.eq.s32.totalorder %s37, 0
      %p184 = por %p182, %p183
      %p185 = scmp.ne.s32.totalorder %s173, %s174
      %p186 = scmp.eq.s32.totalorder %s38, 1
      %p187 = por %p185, %p186
      %p189 = scmp.ne.s32.totalorder %s174, %s188
      %p190 = scmp.eq.s32.totalorder %s38, 0
      %p191 = por %p189, %p190
      %s193 = sadd.s32 %s192, 1
      %p196 = scmp.eq.s32.totalorder %s32, 1
      %p197 = scmp.ne.s32.totalorder %s192, %s194
      %p198 = scmp.eq.s32.totalorder %s32, 0
      %p199 = por %p197, %p198
      %p200 = scmp.ne.s32.totalorder %s192, %s194
      %p201 = scmp.eq.s32.totalorder %s37, 1
      %p202 = por %p200, %p201
      %p203 = scmp.ne.s32.totalorder %s194, %s195
      %p204 = scmp.eq.s32.totalorder %s37, 0
      %p205 = por %p203, %p204
      %p206 = scmp.ne.s32.totalorder %s194, %s195
      %p207 = scmp.eq.s32.totalorder %s38, 1
      %p208 = por %p206, %p207
      %p210 = scmp.ne.s32.totalorder %s195, %s209
      %p211 = scmp.eq.s32.totalorder %s38, 0
      %p212 = por %p210, %p211
      %s214 = sadd.s32 %s213, 1
      %p217 = scmp.eq.s32.totalorder %s32, 1
      %p218 = scmp.ne.s32.totalorder %s213, %s215
      %p219 = scmp.eq.s32.totalorder %s32, 0
      %p220 = por %p218, %p219
      %p221 = scmp.ne.s32.totalorder %s213, %s215
      %p222 = scmp.eq.s32.totalorder %s37, 1
      %p223 = por %p221, %p222
      %p224 = scmp.ne.s32.totalorder %s215, %s216
      %p225 = scmp.eq.s32.totalorder %s37, 0
      %p226 = por %p224, %p225
      %p227 = scmp.ne.s32.totalorder %s215, %s216
      %p228 = scmp.eq.s32.totalorder %s38, 1
      %p229 = por %p227, %p228
      %p231 = scmp.ne.s32.totalorder %s216, %s230
      %p232 = scmp.eq.s32.totalorder %s38, 0
      %p233 = por %p231, %p232
      %s235 = sadd.s32 %s234, 1
      %p238 = scmp.eq.s32.totalorder %s32, 1
      %p239 = scmp.ne.s32.totalorder %s234, %s236
      %p240 = scmp.eq.s32.totalorder %s32, 0
      %p241 = por %p239, %p240
      %p242 = scmp.ne.s32.totalorder %s234, %s236
      %p243 = scmp.eq.s32.totalorder %s37, 1
      %p244 = por %p242, %p243
      %p245 = scmp.ne.s32.totalorder %s236, %s237
      %p246 = scmp.eq.s32.totalorder %s37, 0
      %p247 = por %p245, %p246
      %p248 = scmp.ne.s32.totalorder %s236, %s237
      %p249 = scmp.eq.s32.totalorder %s38, 1
      %p250 = por %p248, %p249
      %p252 = scmp.ne.s32.totalorder %s237, %s251
      %p253 = scmp.eq.s32.totalorder %s38, 0
      %p254 = por %p252, %p253
      %s256 = sadd.s32 %s255, 1
      %p259 = scmp.eq.s32.totalorder %s32, 1
      %p260 = scmp.ne.s32.totalorder %s255, %s257
      %p261 = scmp.eq.s32.totalorder %s32, 0
      %p262 = por %p260, %p261
      %p263 = scmp.ne.s32.totalorder %s255, %s257
      %p264 = scmp.eq.s32.totalorder %s37, 1
      %p265 = por %p263, %p264
      %p266 = scmp.ne.s32.totalorder %s257, %s258
      %p267 = scmp.eq.s32.totalorder %s37, 0
      %p268 = por %p266, %p267
      %p269 = scmp.ne.s32.totalorder %s257, %s258
      %p270 = scmp.eq.s32.totalorder %s38, 1
      %p271 = por %p269, %p270
      %p273 = scmp.ne.s32.totalorder %s258, %s272
      %p274 = scmp.eq.s32.totalorder %s38, 0
      %p275 = por %p273, %p274
      %s277 = sadd.s32 %s276, 1
      %p280 = scmp.eq.s32.totalorder %s32, 1
      %p281 = scmp.ne.s32.totalorder %s276, %s278
      %p282 = scmp.eq.s32.totalorder %s32, 0
      %p283 = por %p281, %p282
      %p284 = scmp.ne.s32.totalorder %s276, %s278
      %p285 = scmp.eq.s32.totalorder %s37, 1
      %p286 = por %p284, %p285
      %p287 = scmp.ne.s32.totalorder %s278, %s279
      %p288 = scmp.eq.s32.totalorder %s37, 0
      %p289 = por %p287, %p288
      %p290 = scmp.ne.s32.totalorder %s278, %s279
      %p291 = scmp.eq.s32.totalorder %s38, 1
      %p292 = por %p290, %p291
      %p294 = scmp.ne.s32.totalorder %s279, %s293
      %p295 = scmp.eq.s32.totalorder %s38, 0
      %p296 = por %p294, %p295
      %s298 = sadd.s32 %s297, 1
      %p301 = scmp.eq.s32.totalorder %s32, 1
      %p302 = scmp.ne.s32.totalorder %s297, %s299
      %p303 = scmp.eq.s32.totalorder %s32, 0
      %p304 = por %p302, %p303
      %p305 = scmp.ne.s32.totalorder %s297, %s299
      %p306 = scmp.eq.s32.totalorder %s37, 1
      %p307 = por %p305, %p306
      %p308 = scmp.ne.s32.totalorder %s299, %s300
      %p309 = scmp.eq.s32.totalorder %s37, 0
      %p310 = por %p308, %p309
      %p311 = scmp.ne.s32.totalorder %s299, %s300
      %p312 = scmp.eq.s32.totalorder %s38, 1
      %p313 = por %p311, %p312
      %p315 = scmp.ne.s32.totalorder %s300, %s314
      %p316 = scmp.eq.s32.totalorder %s38, 0
      %p317 = por %p315, %p316
      %s319 = sadd.s32 %s318, 1
      %p322 = scmp.eq.s32.totalorder %s32, 1
      %p323 = scmp.ne.s32.totalorder %s318, %s320
      %p324 = scmp.eq.s32.totalorder %s32, 0
      %p325 = por %p323, %p324
      %p326 = scmp.ne.s32.totalorder %s318, %s320
      %p327 = scmp.eq.s32.totalorder %s37, 1
      %p328 = por %p326, %p327
      %p329 = scmp.ne.s32.totalorder %s320, %s321
      %p330 = scmp.eq.s32.totalorder %s37, 0
      %p331 = por %p329, %p330
      %p332 = scmp.ne.s32.totalorder %s320, %s321
      %p333 = scmp.eq.s32.totalorder %s38, 1
      %p334 = por %p332, %p333
      %p336 = scmp.ne.s32.totalorder %s321, %s335
      %p337 = scmp.eq.s32.totalorder %s38, 0
      %p338 = por %p336, %p337
      %s340 = sadd.s32 %s339, 1
      %p343 = scmp.eq.s32.totalorder %s32, 1
      %p344 = scmp.ne.s32.totalorder %s339, %s341
      %p345 = scmp.eq.s32.totalorder %s32, 0
      %p346 = por %p344, %p345
      %p347 = scmp.ne.s32.totalorder %s339, %s341
      %p348 = scmp.eq.s32.totalorder %s37, 1
      %p349 = por %p347, %p348
      %p350 = scmp.ne.s32.totalorder %s341, %s342
      %p351 = scmp.eq.s32.totalorder %s37, 0
      %p352 = por %p350, %p351
      %p353 = scmp.ne.s32.totalorder %s341, %s342
      %p354 = scmp.eq.s32.totalorder %s38, 1
      %p355 = por %p353, %p354
      %p357 = scmp.ne.s32.totalorder %s342, %s356
      %p358 = scmp.eq.s32.totalorder %s38, 0
      %p359 = por %p357, %p358
      %s361 = sadd.s32 %s360, 1
      %p364 = scmp.eq.s32.totalorder %s32, 1
      %p365 = scmp.ne.s32.totalorder %s360, %s362
      %p366 = scmp.eq.s32.totalorder %s32, 0
      %p367 = por %p365, %p366
      %p368 = scmp.ne.s32.totalorder %s360, %s362
      %p369 = scmp.eq.s32.totalorder %s37, 1
      %p370 = por %p368, %p369
      %p371 = scmp.ne.s32.totalorder %s362, %s363
      %p372 = scmp.eq.s32.totalorder %s37, 0
      %p373 = por %p371, %p372
      %p374 = scmp.ne.s32.totalorder %s362, %s363
      %p375 = scmp.eq.s32.totalorder %s38, 1
      %p376 = por %p374, %p375
      %p378 = scmp.ne.s32.totalorder %s363, %s377
      %p379 = scmp.eq.s32.totalorder %s38, 0
      %p380 = por %p378, %p379
      %s382 = sadd.s32 %s381, 1
      %p385 = scmp.eq.s32.totalorder %s32, 1
      %p386 = scmp.ne.s32.totalorder %s381, %s383
      %p387 = scmp.eq.s32.totalorder %s32, 0
      %p388 = por %p386, %p387
      %p389 = scmp.ne.s32.totalorder %s381, %s383
      %p390 = scmp.eq.s32.totalorder %s37, 1
      %p391 = por %p389, %p390
      %p392 = scmp.ne.s32.totalorder %s383, %s384
      %p393 = scmp.eq.s32.totalorder %s37, 0
      %p394 = por %p392, %p393
      %p395 = scmp.ne.s32.totalorder %s383, %s384
      %p396 = scmp.eq.s32.totalorder %s38, 1
      %p397 = por %p395, %p396
      %p399 = scmp.ne.s32.totalorder %s384, %s398
      %p400 = scmp.eq.s32.totalorder %s38, 0
      %p401 = por %p399, %p400
      %s403 = sadd.s32 %s402, 1
      %p406 = scmp.eq.s32.totalorder %s32, 1
      %p407 = scmp.ne.s32.totalorder %s402, %s404
      %p408 = scmp.eq.s32.totalorder %s32, 0
      %p409 = por %p407, %p408
      %p410 = scmp.ne.s32.totalorder %s402, %s404
      %p411 = scmp.eq.s32.totalorder %s37, 1
      %p412 = por %p410, %p411
      %p413 = scmp.ne.s32.totalorder %s404, %s405
      %p414 = scmp.eq.s32.totalorder %s37, 0
      %p415 = por %p413, %p414
      %p416 = scmp.ne.s32.totalorder %s404, %s405
      %p417 = scmp.eq.s32.totalorder %s38, 1
      %p418 = por %p416, %p417
      %p420 = scmp.ne.s32.totalorder %s405, %s419
      %p421 = scmp.eq.s32.totalorder %s38, 0
      %p422 = por %p420, %p421
      %s424 = sadd.s32 %s423, 1
      %p427 = scmp.eq.s32.totalorder %s32, 1
      %p428 = scmp.ne.s32.totalorder %s423, %s425
      %p429 = scmp.eq.s32.totalorder %s32, 0
      %p430 = por %p428, %p429
      %p431 = scmp.ne.s32.totalorder %s423, %s425
      %p432 = scmp.eq.s32.totalorder %s37, 1
      %p433 = por %p431, %p432
      %p434 = scmp.ne.s32.totalorder %s425, %s426
      %p435 = scmp.eq.s32.totalorder %s37, 0
      %p436 = por %p434, %p435
      %p437 = scmp.ne.s32.totalorder %s425, %s426
      %p438 = scmp.eq.s32.totalorder %s38, 1
      %p439 = por %p437, %p438
      %p441 = scmp.ne.s32.totalorder %s426, %s440
      %p442 = scmp.eq.s32.totalorder %s38, 0
      %p443 = por %p441, %p442
      %s445 = sadd.s32 %s444, 1
      %p448 = scmp.eq.s32.totalorder %s32, 1
      %p449 = scmp.ne.s32.totalorder %s444, %s446
      %p450 = scmp.eq.s32.totalorder %s32, 0
      %p451 = por %p449, %p450
      %p452 = scmp.ne.s32.totalorder %s444, %s446
      %p453 = scmp.eq.s32.totalorder %s37, 1
      %p454 = por %p452, %p453
      %p455 = scmp.ne.s32.totalorder %s446, %s447
      %p456 = scmp.eq.s32.totalorder %s37, 0
      %p457 = por %p455, %p456
      %p458 = scmp.ne.s32.totalorder %s446, %s447
      %p459 = scmp.eq.s32.totalorder %s38, 1
      %p460 = por %p458, %p459
      %p462 = scmp.ne.s32.totalorder %s447, %s461
      %p463 = scmp.eq.s32.totalorder %s38, 0
      %p464 = por %p462, %p463
      %s466 = sadd.s32 %s465, 1
      %p469 = scmp.eq.s32.totalorder %s32, 1
      %p470 = scmp.ne.s32.totalorder %s465, %s467
      %p471 = scmp.eq.s32.totalorder %s32, 0
      %p472 = por %p470, %p471
      %p473 = scmp.ne.s32.totalorder %s465, %s467
      %p474 = scmp.eq.s32.totalorder %s37, 1
      %p475 = por %p473, %p474
      %p476 = scmp.ne.s32.totalorder %s467, %s468
      %p477 = scmp.eq.s32.totalorder %s37, 0
      %p478 = por %p476, %p477
      %p479 = scmp.ne.s32.totalorder %s467, %s468
      %p480 = scmp.eq.s32.totalorder %s38, 1
      %p481 = por %p479, %p480
      %p483 = scmp.ne.s32.totalorder %s468, %s482
      %p484 = scmp.eq.s32.totalorder %s38, 0
      %p485 = por %p483, %p484
      %s487 = sadd.s32 %s486, 1
      %p490 = scmp.eq.s32.totalorder %s32, 1
      %p491 = scmp.ne.s32.totalorder %s486, %s488
      %p492 = scmp.eq.s32.totalorder %s32, 0
      %p493 = por %p491, %p492
      %p494 = scmp.ne.s32.totalorder %s486, %s488
      %p495 = scmp.eq.s32.totalorder %s37, 1
      %p496 = por %p494, %p495
      %p497 = scmp.ne.s32.totalorder %s488, %s489
      %p498 = scmp.eq.s32.totalorder %s37, 0
      %p499 = por %p497, %p498
      %p500 = scmp.ne.s32.totalorder %s488, %s489
      %p501 = scmp.eq.s32.totalorder %s38, 1
      %p502 = por %p500, %p501
      %p504 = scmp.ne.s32.totalorder %s489, %s503
      %p505 = scmp.eq.s32.totalorder %s38, 0
      %p506 = por %p504, %p505
      %s508 = sadd.s32 %s507, 1
      %p511 = scmp.eq.s32.totalorder %s32, 1
      %p512 = scmp.ne.s32.totalorder %s507, %s509
      %p513 = scmp.eq.s32.totalorder %s32, 0
      %p514 = por %p512, %p513
      %p515 = scmp.ne.s32.totalorder %s507, %s509
      %p516 = scmp.eq.s32.totalorder %s37, 1
      %p517 = por %p515, %p516
      %p518 = scmp.ne.s32.totalorder %s509, %s510
      %p519 = scmp.eq.s32.totalorder %s37, 0
      %p520 = por %p518, %p519
      %p521 = scmp.ne.s32.totalorder %s509, %s510
      %p522 = scmp.eq.s32.totalorder %s38, 1
      %p523 = por %p521, %p522
      %p525 = scmp.ne.s32.totalorder %s510, %s524
      %p526 = scmp.eq.s32.totalorder %s38, 0
      %p527 = por %p525, %p526
      %s529 = sadd.s32 %s528, 1
      %p532 = scmp.eq.s32.totalorder %s32, 1
      %p533 = scmp.ne.s32.totalorder %s528, %s530
      %p534 = scmp.eq.s32.totalorder %s32, 0
      %p535 = por %p533, %p534
      %p536 = scmp.ne.s32.totalorder %s528, %s530
      %p537 = scmp.eq.s32.totalorder %s37, 1
      %p538 = por %p536, %p537
      %p539 = scmp.ne.s32.totalorder %s530, %s531
      %p540 = scmp.eq.s32.totalorder %s37, 0
      %p541 = por %p539, %p540
      %p542 = scmp.ne.s32.totalorder %s530, %s531
      %p543 = scmp.eq.s32.totalorder %s38, 1
      %p544 = por %p542, %p543
      %p546 = scmp.ne.s32.totalorder %s531, %s545
      %p547 = scmp.eq.s32.totalorder %s38, 0
      %p548 = por %p546, %p547
      %s550 = sadd.s32 %s549, 1
      %p553 = scmp.eq.s32.totalorder %s32, 1
      %p554 = scmp.ne.s32.totalorder %s549, %s551
      %p555 = scmp.eq.s32.totalorder %s32, 0
      %p556 = por %p554, %p555
      %p557 = scmp.ne.s32.totalorder %s549, %s551
      %p558 = scmp.eq.s32.totalorder %s37, 1
      %p559 = por %p557, %p558
      %p560 = scmp.ne.s32.totalorder %s551, %s552
      %p561 = scmp.eq.s32.totalorder %s37, 0
      %p562 = por %p560, %p561
      %p563 = scmp.ne.s32.totalorder %s551, %s552
      %p564 = scmp.eq.s32.totalorder %s38, 1
      %p565 = por %p563, %p564
      %p567 = scmp.ne.s32.totalorder %s552, %s566
      %p568 = scmp.eq.s32.totalorder %s38, 0
      %p569 = por %p567, %p568
      %s571 = sadd.s32 %s570, 1
      %p574 = scmp.eq.s32.totalorder %s32, 1
      %p575 = scmp.ne.s32.totalorder %s570, %s572
      %p576 = scmp.eq.s32.totalorder %s32, 0
      %p577 = por %p575, %p576
      %p578 = scmp.ne.s32.totalorder %s570, %s572
      %p579 = scmp.eq.s32.totalorder %s37, 1
      %p580 = por %p578, %p579
      %p581 = scmp.ne.s32.totalorder %s572, %s573
      %p582 = scmp.eq.s32.totalorder %s37, 0
      %p583 = por %p581, %p582
      %p584 = scmp.ne.s32.totalorder %s572, %s573
      %p585 = scmp.eq.s32.totalorder %s38, 1
      %p586 = por %p584, %p585
      %p588 = scmp.ne.s32.totalorder %s573, %s587
      %p589 = scmp.eq.s32.totalorder %s38, 0
      %p590 = por %p588, %p589
      %s591 = ssub.s32 %s32, %s39
      %p592 = scmp.eq.s32.totalorder %s591, 0
      %s594 = sadd.s32 %s593, 1
      %s595 = scalar_select %p592, %s593, %s594
      %p598 = pneg %p592
      %p599 = scmp.eq.s32.totalorder %s32, 1
      %p600 = por %p598, %p599
      %p601 = scmp.ne.s32.totalorder %s593, %s596
      %p602 = scmp.eq.s32.totalorder %s32, 0
      %p603 = por %p601, %p602
      %p604 = scmp.ne.s32.totalorder %s593, %s596
      %p605 = scmp.eq.s32.totalorder %s37, 1
      %p606 = por %p604, %p605
      %p607 = scmp.ne.s32.totalorder %s596, %s597
      %p608 = scmp.eq.s32.totalorder %s37, 0
      %p609 = por %p607, %p608
      %p610 = scmp.ne.s32.totalorder %s596, %s597
      %p611 = scmp.eq.s32.totalorder %s38, 1
      %p612 = por %p610, %p611
      %p614 = scmp.ne.s32.totalorder %s597, %s613
      %p615 = scmp.eq.s32.totalorder %s38, 0
      %p616 = por %p614, %p615
      %p617 = scmp.le.s32.totalorder 1, %s32
      %p618 = scmp.lt.s32.totalorder %s32, 3
      %p619 = pnand %p617, %p618
      %p620 = pneg %p619
      // Predicated region
      $region9: #{msknet_forward.1} parent=5 // pred_check
        _
      $region10: #{msknet_forward.1} parent=5 // pred_check_branch
        %622 = sbr.rel (%p619) target = $region12
      $region11: #{msknet_forward.1} parent=5 // pred_region
        %s623 = ssub.s32 %s32, 1
        // Predicated region
        $region13: #{msknet_forward.1} parent=11 // pred_check
          %p624 = pneg %p79
        $region14: #{msknet_forward.1} parent=11 // pred_check_branch
          %626 = sbr.rel (%p624) target = $region16
        $region15: #{msknet_forward.1} parent=11 // pred_region
          _
        $region16: #{msknet_forward.1} parent=11 // pred_fallthru
          _
        // Predicated region
        $region17: #{msknet_forward.1} parent=11 // pred_check
          %p627 = pneg %p100
        $region18: #{msknet_forward.1} parent=11 // pred_check_branch
          %629 = sbr.rel (%p627) target = $region20
        $region19: #{msknet_forward.1} parent=11 // pred_region
          _
        $region20: #{msknet_forward.1} parent=11 // pred_fallthru
          _
        // Predicated region
        $region21: #{msknet_forward.1} parent=11 // pred_check
          %p630 = pneg %p121
        $region22: #{msknet_forward.1} parent=11 // pred_check_branch
          %632 = sbr.rel (%p630) target = $region24
        $region23: #{msknet_forward.1} parent=11 // pred_region
          _
        $region24: #{msknet_forward.1} parent=11 // pred_fallthru
          _
        // Predicated region
        $region25: #{msknet_forward.1} parent=11 // pred_check
          %p633 = pneg %p142
        $region26: #{msknet_forward.1} parent=11 // pred_check_branch
          %635 = sbr.rel (%p633) target = $region28
        $region27: #{msknet_forward.1} parent=11 // pred_region
          _
        $region28: #{msknet_forward.1} parent=11 // pred_fallthru
          _
        // Predicated region
        $region29: #{msknet_forward.1} parent=11 // pred_check
          %p636 = pneg %p163
        $region30: #{msknet_forward.1} parent=11 // pred_check_branch
          %638 = sbr.rel (%p636) target = $region32
        $region31: #{msknet_forward.1} parent=11 // pred_region
          _
        $region32: #{msknet_forward.1} parent=11 // pred_fallthru
          _
        // Predicated region
        $region33: #{msknet_forward.1} parent=11 // pred_check
          %p639 = pneg %p184
        $region34: #{msknet_forward.1} parent=11 // pred_check_branch
          %641 = sbr.rel (%p639) target = $region36
        $region35: #{msknet_forward.1} parent=11 // pred_region
          _
        $region36: #{msknet_forward.1} parent=11 // pred_fallthru
          _
        // Predicated region
        $region37: #{msknet_forward.1} parent=11 // pred_check
          %p642 = pneg %p205
        $region38: #{msknet_forward.1} parent=11 // pred_check_branch
          %644 = sbr.rel (%p642) target = $region40
        $region39: #{msknet_forward.1} parent=11 // pred_region
          _
        $region40: #{msknet_forward.1} parent=11 // pred_fallthru
          _
        // Predicated region
        $region41: #{msknet_forward.1} parent=11 // pred_check
          %p645 = pneg %p226
        $region42: #{msknet_forward.1} parent=11 // pred_check_branch
          %647 = sbr.rel (%p645) target = $region44
        $region43: #{msknet_forward.1} parent=11 // pred_region
          _
        $region44: #{msknet_forward.1} parent=11 // pred_fallthru
          _
        // Predicated region
        $region45: #{msknet_forward.1} parent=11 // pred_check
          %p648 = pneg %p247
        $region46: #{msknet_forward.1} parent=11 // pred_check_branch
          %650 = sbr.rel (%p648) target = $region48
        $region47: #{msknet_forward.1} parent=11 // pred_region
          _
        $region48: #{msknet_forward.1} parent=11 // pred_fallthru
          _
        // Predicated region
        $region49: #{msknet_forward.1} parent=11 // pred_check
          %p651 = pneg %p268
        $region50: #{msknet_forward.1} parent=11 // pred_check_branch
          %653 = sbr.rel (%p651) target = $region52
        $region51: #{msknet_forward.1} parent=11 // pred_region
          _
        $region52: #{msknet_forward.1} parent=11 // pred_fallthru
          _
        // Predicated region
        $region53: #{msknet_forward.1} parent=11 // pred_check
          %p654 = pneg %p289
        $region54: #{msknet_forward.1} parent=11 // pred_check_branch
          %656 = sbr.rel (%p654) target = $region56
        $region55: #{msknet_forward.1} parent=11 // pred_region
          _
        $region56: #{msknet_forward.1} parent=11 // pred_fallthru
          _
        // Predicated region
        $region57: #{msknet_forward.1} parent=11 // pred_check
          %p657 = pneg %p310
        $region58: #{msknet_forward.1} parent=11 // pred_check_branch
          %659 = sbr.rel (%p657) target = $region60
        $region59: #{msknet_forward.1} parent=11 // pred_region
          _
        $region60: #{msknet_forward.1} parent=11 // pred_fallthru
          _
        // Predicated region
        $region61: #{msknet_forward.1} parent=11 // pred_check
          %p660 = pneg %p331
        $region62: #{msknet_forward.1} parent=11 // pred_check_branch
          %662 = sbr.rel (%p660) target = $region64
        $region63: #{msknet_forward.1} parent=11 // pred_region
          _
        $region64: #{msknet_forward.1} parent=11 // pred_fallthru
          _
        // Predicated region
        $region65: #{msknet_forward.1} parent=11 // pred_check
          %p663 = pneg %p352
        $region66: #{msknet_forward.1} parent=11 // pred_check_branch
          %665 = sbr.rel (%p663) target = $region68
        $region67: #{msknet_forward.1} parent=11 // pred_region
          _
        $region68: #{msknet_forward.1} parent=11 // pred_fallthru
          _
        // Predicated region
        $region69: #{msknet_forward.1} parent=11 // pred_check
          %p666 = pneg %p373
        $region70: #{msknet_forward.1} parent=11 // pred_check_branch
          %668 = sbr.rel (%p666) target = $region72
        $region71: #{msknet_forward.1} parent=11 // pred_region
          _
        $region72: #{msknet_forward.1} parent=11 // pred_fallthru
          _
        // Predicated region
        $region73: #{msknet_forward.1} parent=11 // pred_check
          %p669 = pneg %p394
        $region74: #{msknet_forward.1} parent=11 // pred_check_branch
          %671 = sbr.rel (%p669) target = $region76
        $region75: #{msknet_forward.1} parent=11 // pred_region
          _
        $region76: #{msknet_forward.1} parent=11 // pred_fallthru
          _
        // Predicated region
        $region77: #{msknet_forward.1} parent=11 // pred_check
          %p672 = pneg %p415
        $region78: #{msknet_forward.1} parent=11 // pred_check_branch
          %674 = sbr.rel (%p672) target = $region80
        $region79: #{msknet_forward.1} parent=11 // pred_region
          _
        $region80: #{msknet_forward.1} parent=11 // pred_fallthru
          _
        // Predicated region
        $region81: #{msknet_forward.1} parent=11 // pred_check
          %p675 = pneg %p436
        $region82: #{msknet_forward.1} parent=11 // pred_check_branch
          %677 = sbr.rel (%p675) target = $region84
        $region83: #{msknet_forward.1} parent=11 // pred_region
          _
        $region84: #{msknet_forward.1} parent=11 // pred_fallthru
          _
        // Predicated region
        $region85: #{msknet_forward.1} parent=11 // pred_check
          %p678 = pneg %p457
        $region86: #{msknet_forward.1} parent=11 // pred_check_branch
          %680 = sbr.rel (%p678) target = $region88
        $region87: #{msknet_forward.1} parent=11 // pred_region
          _
        $region88: #{msknet_forward.1} parent=11 // pred_fallthru
          _
        // Predicated region
        $region89: #{msknet_forward.1} parent=11 // pred_check
          %p681 = pneg %p478
        $region90: #{msknet_forward.1} parent=11 // pred_check_branch
          %683 = sbr.rel (%p681) target = $region92
        $region91: #{msknet_forward.1} parent=11 // pred_region
          _
        $region92: #{msknet_forward.1} parent=11 // pred_fallthru
          _
        // Predicated region
        $region93: #{msknet_forward.1} parent=11 // pred_check
          %p684 = pneg %p499
        $region94: #{msknet_forward.1} parent=11 // pred_check_branch
          %686 = sbr.rel (%p684) target = $region96
        $region95: #{msknet_forward.1} parent=11 // pred_region
          _
        $region96: #{msknet_forward.1} parent=11 // pred_fallthru
          _
        // Predicated region
        $region97: #{msknet_forward.1} parent=11 // pred_check
          %p687 = pneg %p520
        $region98: #{msknet_forward.1} parent=11 // pred_check_branch
          %689 = sbr.rel (%p687) target = $region100
        $region99: #{msknet_forward.1} parent=11 // pred_region
          _
        $region100: #{msknet_forward.1} parent=11 // pred_fallthru
          _
        // Predicated region
        $region101: #{msknet_forward.1} parent=11 // pred_check
          %p690 = pneg %p541
        $region102: #{msknet_forward.1} parent=11 // pred_check_branch
          %692 = sbr.rel (%p690) target = $region104
        $region103: #{msknet_forward.1} parent=11 // pred_region
          _
        $region104: #{msknet_forward.1} parent=11 // pred_fallthru
          _
        // Predicated region
        $region105: #{msknet_forward.1} parent=11 // pred_check
          %p693 = pneg %p562
        $region106: #{msknet_forward.1} parent=11 // pred_check_branch
          %695 = sbr.rel (%p693) target = $region108
        $region107: #{msknet_forward.1} parent=11 // pred_region
          _
        $region108: #{msknet_forward.1} parent=11 // pred_fallthru
          _
        // Predicated region
        $region109: #{msknet_forward.1} parent=11 // pred_check
          %p696 = pneg %p583
        $region110: #{msknet_forward.1} parent=11 // pred_check_branch
          %698 = sbr.rel (%p696) target = $region112
        $region111: #{msknet_forward.1} parent=11 // pred_region
          _
        $region112: #{msknet_forward.1} parent=11 // pred_fallthru
          _
      $region12: #{msknet_forward.1} parent=5 // pred_fallthru
        _
      %p699 = scmp.lt.s32.totalorder %s32, 2
      // Predicated region
      $region113: #{msknet_forward.1} parent=5 // pred_check
        %p700 = pneg %p699
      $region114: #{msknet_forward.1} parent=5 // pred_check_branch
        %702 = sbr.rel (%p700) target = $region116
      $region115: #{msknet_forward.1} parent=5 // pred_region
        // Predicated region
        $region117: #{msknet_forward.1} parent=115 // pred_check
          %p703 = pneg %p52
        $region118: #{msknet_forward.1} parent=115 // pred_check_branch
          %705 = sbr.rel (%p703) target = $region120
        $region119: #{msknet_forward.1} parent=115 // pred_region
          %s706 = sand.u32 %s42, 1
          %s707 = sand.u32 %s42, 1
          %s708 = smul.addr %s707, 32
          %s709 = scalar_lea.vmem [#allocation2], %s708
          %s710 = smul.u32 2, %s32
          %s711 = smul.addr %s710, 4
          %s712 = scalar_lea.vmem %s0, %s711
          // Predicated region
          $region121: #{msknet_forward.1} parent=119 // pred_check
            _
          $region122: #{msknet_forward.1} parent=119 // pred_check_branch
            %714 = sbr.rel (0) target = $region124
          $region123: #{msknet_forward.1} parent=119 // pred_region
            // Predicated region
            $region125: #{msknet_forward.1} parent=123 // pred_check
              _
            $region126: #{msknet_forward.1} parent=123 // pred_check_branch
              %716 = sbr.rel (0) target = $region128
            $region127: #{msknet_forward.1} parent=123 // pred_region
              // Predicated region
              $region140: #{msknet_forward.1} parent=127 // pred_check
                _
              $region141: #{msknet_forward.1} parent=127 // pred_check_branch
                %738 = sbr.rel (0) target = $region143
              $region142: #{msknet_forward.1} parent=127 // pred_region
                loop: start=0, step=1, limit=1
                $region144: #{msknet_forward.1} parent=142 // loop_pre_header
                  _
                $region145: #{msknet_forward.1} parent=142 // loop_header
                  %s740 = sphi 0, %s744
                  %p741 = scmp.ge.s32.totalorder %s740, 1
                  %s745 = sphi %s712, %s712
                  %s746 = sphi %s709, %s709
                $region146: #{msknet_forward.1} parent=142 // loop_header_branch
                  %743 = sbr.rel (%p741) target = $region150
                $region147: #{msknet_forward.1} parent=142 // loop_body
                  %v747 = vld [vmem:[%s745] sm:$0xff]
                  %748 = vst [vmem:[%s746] sm:$0xff] %v747
                  %v749 = vld [vmem:[%s745 + $0x10] sm:$0xff]
                  %750 = vst [vmem:[%s746 + $0x8] sm:$0xff] %v749
                  %v751 = vld [vmem:[%s745 + $0x20] sm:$0xff]
                  %752 = vst [vmem:[%s746 + $0x10] sm:$0xff] %v751
                  %v753 = vld [vmem:[%s745 + $0x30] sm:$0xff]
                  %754 = vst [vmem:[%s746 + $0x18] sm:$0xff] %v753
                $region148: #{msknet_forward.1} parent=142 // loop_footer
                  %s744 = sadd.s32 1, %s740
                $region149: #{msknet_forward.1} parent=142 // loop_footer_branch
                  %739 = sbr.rel target = $region145
                $region150: #{msknet_forward.1} parent=142 // loop_exit
                  _
              $region143: #{msknet_forward.1} parent=127 // pred_fallthru
                _
              // Predicated region
              $region151: #{msknet_forward.1} parent=127 // pred_check
                _
              $region152: #{msknet_forward.1} parent=127 // pred_check_branch
                %756 = sbr.rel target = $region154
              $region153: #{msknet_forward.1} parent=127 // pred_region
                _
              $region154: #{msknet_forward.1} parent=127 // pred_fallthru
                _
            $region128: #{msknet_forward.1} parent=123 // pred_fallthru
              _
            // Predicated region
            $region129: #{msknet_forward.1} parent=123 // pred_check
              _
            $region130: #{msknet_forward.1} parent=123 // pred_check_branch
              %718 = sbr.rel target = $region132
            $region131: #{msknet_forward.1} parent=123 // pred_region
              %s720 = ssub.s32 256, 1
              loop: start=0, step=1, limit=1
              $region133: #{msknet_forward.1} parent=131 // loop_pre_header
                _
              $region134: #{msknet_forward.1} parent=131 // loop_header
                %s722 = sphi 0, %s726
                %p723 = scmp.ge.s32.totalorder %s722, 1
                %s727 = sphi %s712, %s712
                %s728 = sphi %s709, %s709
              $region135: #{msknet_forward.1} parent=131 // loop_header_branch
                %725 = sbr.rel (%p723) target = $region139
              $region136: #{msknet_forward.1} parent=131 // loop_body
                %v729 = vld [vmem:[%s727] sm:%s720]
                %730 = vst [vmem:[%s728] sm:%s720] %v729
                %v731 = vld [vmem:[%s727 + $0x10] sm:%s720]
                %732 = vst [vmem:[%s728 + $0x8] sm:%s720] %v731
                %v733 = vld [vmem:[%s727 + $0x20] sm:%s720]
                %734 = vst [vmem:[%s728 + $0x10] sm:%s720] %v733
                %v735 = vld [vmem:[%s727 + $0x30] sm:%s720]
                %736 = vst [vmem:[%s728 + $0x18] sm:%s720] %v735
              $region137: #{msknet_forward.1} parent=131 // loop_footer
                %s726 = sadd.s32 1, %s722
              $region138: #{msknet_forward.1} parent=131 // loop_footer_branch
                %721 = sbr.rel target = $region134
              $region139: #{msknet_forward.1} parent=131 // loop_exit
                _
            $region132: #{msknet_forward.1} parent=123 // pred_fallthru
              _
          $region124: #{msknet_forward.1} parent=119 // pred_fallthru
            _
          %757 = vnop
        $region120: #{msknet_forward.1} parent=115 // pred_fallthru
          _
      $region116: #{msknet_forward.1} parent=5 // pred_fallthru
        _
      %p758 = scmp.le.s32.totalorder 1, %s32
      %p759 = scmp.lt.s32.totalorder %s32, 3
      %p760 = pnand %p758, %p759
      %p761 = pneg %p760
      // Predicated region
      $region155: #{msknet_forward.1} parent=5 // pred_check
        _
      $region156: #{msknet_forward.1} parent=5 // pred_check_branch
        %763 = sbr.rel (%p760) target = $region158
      $region157: #{msknet_forward.1} parent=5 // pred_region
        %s764 = ssub.s32 %s32, 1
        %s765 = sand.u32 %s45, 1
        %s766 = sand.u32 %s45, 1
        %s767 = smul.addr %s766, 32
        %s768 = scalar_lea.vmem [#allocation2], %s767
        // Predicated region
        $region159: #{msknet_forward.1} parent=157 // pred_check
          %p769 = pneg %p58
        $region160: #{msknet_forward.1} parent=157 // pred_check_branch
          %771 = sbr.rel (%p769) target = $region162
        $region161: #{msknet_forward.1} parent=157 // pred_region
          _
        $region162: #{msknet_forward.1} parent=157 // pred_fallthru
          _
        %s772 = sand.u32 %s45, 1
        %s773 = sand.u32 %s45, 1
        %s774 = smul.addr %s773, 32
        %s775 = scalar_lea.vmem [#allocation2], %s774
        %p776 = pneg %p58
        %p777 = pneg %p55
        %p778 = pneg %p79
        %p779 = pneg %p76
        %p780 = pneg %p100
        %p781 = pneg %p97
        %p782 = pneg %p121
        %p783 = pneg %p118
        %p784 = pneg %p142
        %p785 = pneg %p139
        %p786 = pneg %p163
        %p787 = pneg %p160
        %p788 = pneg %p184
        %p789 = pneg %p181
        %p790 = pneg %p205
        %p791 = pneg %p202
        %p792 = pneg %p226
        %p793 = pneg %p223
        %p794 = pneg %p247
        %p795 = pneg %p244
        %p796 = pneg %p268
        %p797 = pneg %p265
        %p798 = pneg %p289
        %p799 = pneg %p286
        %p800 = pneg %p310
        %p801 = pneg %p307
        %p802 = pneg %p331
        %p803 = pneg %p328
        %p804 = pneg %p352
        %p805 = pneg %p349
        %p806 = pneg %p373
        %p807 = pneg %p370
        %p808 = pneg %p394
        %p809 = pneg %p391
        %p810 = pneg %p415
        %p811 = pneg %p412
        %p812 = pneg %p436
        %p813 = pneg %p433
        %p814 = pneg %p457
        %p815 = pneg %p454
        %p816 = pneg %p478
        %p817 = pneg %p475
        %p818 = pneg %p499
        %p819 = pneg %p496
        %p820 = pneg %p520
        %p821 = pneg %p517
        %p822 = pneg %p541
        %p823 = pneg %p538
        %p824 = pneg %p562
        %p825 = pneg %p559
        %p826 = pneg %p583
        %p827 = pneg %p580
        %p828 = pneg %p609
        %p829 = pneg %p606
        %p830 = scmp.lt.s32.totalorder %s37, 1
        %s831 = scalar_select %p830, %s37, 1
        %s832 = smul.addr %s831, 2
        %s833 = smul.addr %s832, 4
        %s834 = scalar_lea.vmem %s26, %s833
        %s835 = smul.u32 2, %s37
        %p836 = scmp.lt.s32.totalorder %s37, 1
        %s837 = scalar_select %p836, %s37, 1
        %s838 = smul.addr %s837, 2
        %s839 = smul.addr %s838, 4
        %s840 = scalar_lea.vmem %s26, %s839
        %v842 = vld [vmem:[%s1] sm:$0xf]
        %v843 = vld [vmem:[%s768] sm:$0xff]
        %v844 = vld [vmem:[%s768 + $0x8] sm:$0xff]
        %v845 = vld [vmem:[%s768 + $0x10] sm:$0xff]
        %v846 = vld [vmem:[%s768 + $0x18] sm:$0x33]
        %v847 = vld [vmem:[%s2] sm:$0xff]
        %849 = vset.pattern.permute.xlu0 0
        %850 = vperm.xlu0 %849, %v847
        %v851 = vpop.permute.xlu0 %850
        %v857 = vunpack.c.l.b16 %v843
        %v858 = vunpack.c.h.b16 %v843
        %v859 = vunpack.c.l.b16 %v844
        %v860 = vunpack.c.h.b16 %v844
        %v861 = vunpack.c.l.b16 %v845
        %v862 = vunpack.c.h.b16 %v845
        %v863 = vunpack.c.l.b16 %v846
        %v864 = vunpack.c.h.b16 %v846
        %v865 = vpack.c.b16 %v859, %v857
        %v866 = vpack.c.b16 %v860, %v858
        %v867 = vpack.c.b16 %v863, %v861
        %v868 = vpack.c.b16 %v864, %v862
        %vm871 = vcmask 220160
        %v873 = vsel %vm871, %v842, 0
        %vm875 = vcmask 1044480
        %vm876 = vcmask 1045504
        %v877 = vsel %vm875, 4294967295, 65535
        %v878 = vsel %vm876, %v877, 0
        %v880 = vand.u32 %v867, %v878
        %v883 = vand.u32 %v868, %v878
        %885 = vmatpush.bf16.msra.mxu0 0
        %886 = vmatpush.bf16.msra.mxu0 0
        %887 = vmatpush.bf16.msra.mxu0 0
        %888 = vmatpush.bf16.msra.mxu0 0
        %889 = vmatpush.bf16.msra.mxu0 0
        %890 = vmatpush.bf16.msra.mxu0 0
        %891 = vmatpush.bf16.msra.mxu0 %v880
        %892 = vmatpush.bf16.msra.mxu0 %v865
        %893 = vmatmul.bf16.gmra.mxu0 %v873
        %v894 = vpop.f32.mrf.mxu0
        %v895 = vadd.f32 %v851, %v894
        %v896 = vpop.f32.mrf.mxu0
        %897 = vdwg.mxu0
        %898 = vmatpush.bf16.msra.mxu0 0
        %899 = vmatpush.bf16.msra.mxu0 0
        %900 = vmatpush.bf16.msra.mxu0 0
        %901 = vmatpush.bf16.msra.mxu0 0
        %902 = vmatpush.bf16.msra.mxu0 0
        %903 = vmatpush.bf16.msra.mxu0 0
        %904 = vmatpush.bf16.msra.mxu0 %v883
        %905 = vmatpush.bf16.msra.mxu0 %v866
        %906 = vmatmul.bf16.gmra.mxu0 %v873
        %v907 = vpop.f32.mrf.mxu0
        %v908 = vadd.f32 %v851, %v907
        %v909 = vpop.f32.mrf.mxu0
        %910 = vdwg.mxu0
        %v911 = vmax.f32 %v895, 0.0
        %v912 = vmax.f32 %v908, 0.0
        %v913 = vld [vmem:[%s3] sm:$0xf]
        %v914 = vld [vmem:[%s3 + $0x4] sm:$0xf]
        %v915 = vld [vmem:[%s3 + $0x8] sm:$0xf]
        %v916 = vld [vmem:[%s3 + $0xc] sm:$0xf]
        %v917 = vld [vmem:[%s3 + $0x10] sm:$0xf]
        %v918 = vld [vmem:[%s3 + $0x14] sm:$0xf]
        %v919 = vld [vmem:[%s3 + $0x18] sm:$0xf]
        %v920 = vld [vmem:[%s3 + $0x1c] sm:$0xf]
        %v921 = vld [vmem:[%s3 + $0x20] sm:$0xf]
        %v922 = vld [vmem:[%s3 + $0x24] sm:$0xf]
        %v923 = vld [vmem:[%s3 + $0x28] sm:$0xf]
        %v924 = vld [vmem:[%s3 + $0x2c] sm:$0xf]
        %v925 = vld [vmem:[%s3 + $0x30] sm:$0xf]
        %v926 = vld [vmem:[%s3 + $0x34] sm:$0xf]
        %v927 = vld [vmem:[%s3 + $0x38] sm:$0xf]
        %v928 = vld [vmem:[%s3 + $0x3c] sm:$0xf]
        %v929 = vld [vmem:[%s3 + $0x40] sm:$0xf]
        %v930 = vld [vmem:[%s3 + $0x44] sm:$0xf]
        %v931 = vpack.c.bf16 %v911, %v911
        %v932 = vpack.c.bf16 %v912, %v912
        %v951 = vunpack.c.l.b16 %v913
        %v952 = vunpack.c.l.b16 %v914
        %v953 = vunpack.c.l.b16 %v915
        %v954 = vunpack.c.l.b16 %v916
        %v955 = vunpack.c.l.b16 %v917
        %v956 = vunpack.c.l.b16 %v918
        %v957 = vunpack.c.l.b16 %v919
        %v958 = vunpack.c.l.b16 %v920
        %v959 = vunpack.c.l.b16 %v921
        %v960 = vunpack.c.l.b16 %v922
        %v961 = vunpack.c.l.b16 %v923
        %v962 = vunpack.c.l.b16 %v924
        %v963 = vunpack.c.l.b16 %v925
        %v964 = vunpack.c.l.b16 %v926
        %v965 = vunpack.c.l.b16 %v927
        %v966 = vunpack.c.l.b16 %v928
        %v967 = vunpack.c.l.b16 %v929
        %v968 = vunpack.c.l.b16 %v930
        %v969 = vpack.c.b16 %v952, %v951
        %v970 = vpack.c.b16 %v954, %v953
        %v971 = vpack.c.b16 %v956, %v955
        %v972 = vpack.c.b16 %v958, %v957
        %v973 = vpack.c.b16 %v960, %v959
        %v974 = vpack.c.b16 %v962, %v961
        %v975 = vpack.c.b16 %v964, %v963
        %v976 = vpack.c.b16 %v966, %v965
        %v977 = vpack.c.b16 %v968, %v967
        %vm978 = vcmask 64512
        %v980 = vsel %vm978, %v969, 0
        %v983 = vsel %vm978, %v970, 0
        %v986 = vsel %vm978, %v971, 0
        %v989 = vsel %vm978, %v972, 0
        %v992 = vsel %vm978, %v973, 0
        %v995 = vsel %vm978, %v974, 0
        %v998 = vsel %vm978, %v975, 0
        %v1001 = vsel %vm978, %v976, 0
        %v1004 = vsel %vm978, %v977, 0
        %vm1006 = vcmask 1043456
        %v1008 = vsel %vm1006, %v931, 0
        %v1011 = vsel %vm1006, %v932, 0
        %1013 = vmatpush.bf16.msra.mxu0 0
        %1014 = vmatpush.bf16.msra.mxu0 0
        %1015 = vmatpush.bf16.msra.mxu0 0
        %1016 = vmatpush.bf16.msra.mxu0 0
        %1017 = vmatpush.bf16.msra.mxu0 0
        %1018 = vmatpush.bf16.msra.mxu0 0
        %1019 = vmatpush.bf16.msra.mxu0 0
        %1020 = vmatpush.bf16.msra.mxu0 %v1008
        %1021 = vmatmul.bf16.gmra.mxu0 %v980
        %v1022 = vpop.f32.mrf.mxu0
        %v1023 = vadd.f32 0.0, %v1022
        %v1024 = vpop.f32.mrf.mxu0
        %v1025 = vadd.f32 0.0, %v1024
        %1026 = vmatmul.bf16.gmra.mxu0 %v983
        %v1027 = vpop.f32.mrf.mxu0
        %v1028 = vadd.f32 0.0, %v1027
        %v1029 = vpop.f32.mrf.mxu0
        %v1030 = vadd.f32 0.0, %v1029
        %1031 = vmatmul.bf16.gmra.mxu0 %v986
        %v1032 = vpop.f32.mrf.mxu0
        %v1033 = vadd.f32 0.0, %v1032
        %v1034 = vpop.f32.mrf.mxu0
        %v1035 = vadd.f32 0.0, %v1034
        %1036 = vmatmul.bf16.gmra.mxu0 %v989
        %v1037 = vpop.f32.mrf.mxu0
        %v1038 = vadd.f32 0.0, %v1037
        %v1039 = vpop.f32.mrf.mxu0
        %v1040 = vadd.f32 0.0, %v1039
        %1041 = vmatmul.bf16.gmra.mxu0 %v992
        %v1042 = vpop.f32.mrf.mxu0
        %v1043 = vadd.f32 0.0, %v1042
        %v1044 = vpop.f32.mrf.mxu0
        %v1045 = vadd.f32 0.0, %v1044
        %1046 = vmatmul.bf16.gmra.mxu0 %v995
        %v1047 = vpop.f32.mrf.mxu0
        %v1048 = vadd.f32 0.0, %v1047
        %v1049 = vpop.f32.mrf.mxu0
        %v1050 = vadd.f32 0.0, %v1049
        %1051 = vmatmul.bf16.gmra.mxu0 %v998
        %v1052 = vpop.f32.mrf.mxu0
        %v1053 = vadd.f32 0.0, %v1052
        %v1054 = vpop.f32.mrf.mxu0
        %v1055 = vadd.f32 0.0, %v1054
        %1056 = vmatmul.bf16.gmra.mxu0 %v1001
        %v1057 = vpop.f32.mrf.mxu0
        %v1058 = vadd.f32 0.0, %v1057
        %v1059 = vpop.f32.mrf.mxu0
        %v1060 = vadd.f32 0.0, %v1059
        %1061 = vmatmul.bf16.gmra.mxu0 %v1004
        %v1062 = vpop.f32.mrf.mxu0
        %v1063 = vadd.f32 0.0, %v1062
        %v1064 = vpop.f32.mrf.mxu0
        %v1065 = vadd.f32 0.0, %v1064
        %1066 = vdwg.mxu0
        %1067 = vmatpush.bf16.msra.mxu0 0
        %1068 = vmatpush.bf16.msra.mxu0 0
        %1069 = vmatpush.bf16.msra.mxu0 0
        %1070 = vmatpush.bf16.msra.mxu0 0
        %1071 = vmatpush.bf16.msra.mxu0 0
        %1072 = vmatpush.bf16.msra.mxu0 0
        %1073 = vmatpush.bf16.msra.mxu0 0
        %1074 = vmatpush.bf16.msra.mxu0 %v1011
        %1075 = vmatmul.bf16.gmra.mxu0 %v980
        %v1076 = vpop.f32.mrf.mxu0
        %v1077 = vadd.f32 0.0, %v1076
        %v1078 = vpop.f32.mrf.mxu0
        %v1079 = vadd.f32 0.0, %v1078
        %1080 = vmatmul.bf16.gmra.mxu0 %v983
        %v1081 = vpop.f32.mrf.mxu0
        %v1082 = vadd.f32 0.0, %v1081
        %v1083 = vpop.f32.mrf.mxu0
        %v1084 = vadd.f32 0.0, %v1083
        %1085 = vmatmul.bf16.gmra.mxu0 %v986
        %v1086 = vpop.f32.mrf.mxu0
        %v1087 = vadd.f32 0.0, %v1086
        %v1088 = vpop.f32.mrf.mxu0
        %v1089 = vadd.f32 0.0, %v1088
        %1090 = vmatmul.bf16.gmra.mxu0 %v989
        %v1091 = vpop.f32.mrf.mxu0
        %v1092 = vadd.f32 0.0, %v1091
        %v1093 = vpop.f32.mrf.mxu0
        %v1094 = vadd.f32 0.0, %v1093
        %1095 = vmatmul.bf16.gmra.mxu0 %v992
        %v1096 = vpop.f32.mrf.mxu0
        %v1097 = vadd.f32 0.0, %v1096
        %v1098 = vpop.f32.mrf.mxu0
        %v1099 = vadd.f32 0.0, %v1098
        %1100 = vmatmul.bf16.gmra.mxu0 %v995
        %v1101 = vpop.f32.mrf.mxu0
        %v1102 = vadd.f32 0.0, %v1101
        %v1103 = vpop.f32.mrf.mxu0
        %v1104 = vadd.f32 0.0, %v1103
        %1105 = vmatmul.bf16.gmra.mxu0 %v998
        %v1106 = vpop.f32.mrf.mxu0
        %v1107 = vadd.f32 0.0, %v1106
        %v1108 = vpop.f32.mrf.mxu0
        %v1109 = vadd.f32 0.0, %v1108
        %1110 = vmatmul.bf16.gmra.mxu0 %v1001
        %v1111 = vpop.f32.mrf.mxu0
        %v1112 = vadd.f32 0.0, %v1111
        %v1113 = vpop.f32.mrf.mxu0
        %v1114 = vadd.f32 0.0, %v1113
        %1115 = vmatmul.bf16.gmra.mxu0 %v1004
        %v1116 = vpop.f32.mrf.mxu0
        %v1117 = vadd.f32 0.0, %v1116
        %v1118 = vpop.f32.mrf.mxu0
        %v1119 = vadd.f32 0.0, %v1118
        %1120 = vdwg.mxu0
        %v1121 = vpack.c.bf16 %v1077, %v1023
        %v1122 = vpack.c.bf16 %v1079, %v1025
        %v1123 = vpack.c.bf16 %v1082, %v1028
        %v1124 = vpack.c.bf16 %v1084, %v1030
        %v1125 = vpack.c.bf16 %v1087, %v1033
        %v1126 = vpack.c.bf16 %v1089, %v1035
        %v1127 = vpack.c.bf16 %v1092, %v1038
        %v1128 = vpack.c.bf16 %v1094, %v1040
        %v1129 = vpack.c.bf16 %v1097, %v1043
        %v1130 = vpack.c.bf16 %v1099, %v1045
        %v1131 = vpack.c.bf16 %v1102, %v1048
        %v1132 = vpack.c.bf16 %v1104, %v1050
        %v1133 = vpack.c.bf16 %v1107, %v1053
        %v1134 = vpack.c.bf16 %v1109, %v1055
        %v1135 = vpack.c.bf16 %v1112, %v1058
        %v1136 = vpack.c.bf16 %v1114, %v1060
        %v1137 = vpack.c.bf16 %v1117, %v1063
        %v1138 = vpack.c.bf16 %v1119, %v1065
        %v1139 = vld [vmem:[%s5] sm:$0xf]
        %v1140 = vld [vmem:[%s5 + $0x4] sm:$0xf]
        %v1141 = vld [vmem:[%s5 + $0x8] sm:$0xf]
        %v1142 = vld [vmem:[%s5 + $0xc] sm:$0xf]
        %v1143 = vld [vmem:[%s5 + $0x10] sm:$0xf]
        %v1144 = vld [vmem:[%s5 + $0x14] sm:$0xf]
        %v1145 = vld [vmem:[%s5 + $0x18] sm:$0xf]
        %v1146 = vld [vmem:[%s5 + $0x1c] sm:$0xf]
        %v1147 = vld [vmem:[%s5 + $0x20] sm:$0xf]
        %v1148 = vld [vmem:[%s5 + $0x24] sm:$0xf]
        %v1149 = vld [vmem:[%s5 + $0x28] sm:$0xf]
        %v1150 = vld [vmem:[%s5 + $0x2c] sm:$0xf]
        %v1151 = vld [vmem:[%s5 + $0x30] sm:$0xf]
        %v1152 = vld [vmem:[%s5 + $0x34] sm:$0xf]
        %v1153 = vld [vmem:[%s5 + $0x38] sm:$0xf]
        %v1154 = vld [vmem:[%s5 + $0x3c] sm:$0xf]
        %v1155 = vld [vmem:[%s5 + $0x40] sm:$0xf]
        %v1156 = vld [vmem:[%s5 + $0x44] sm:$0xf]
        %v1157 = vld [vmem:[%s5 + $0x48] sm:$0xf]
        %v1158 = vld [vmem:[%s5 + $0x4c] sm:$0xf]
        %v1159 = vld [vmem:[%s5 + $0x50] sm:$0xf]
        %v1160 = vld [vmem:[%s5 + $0x54] sm:$0xf]
        %v1161 = vld [vmem:[%s5 + $0x58] sm:$0xf]
        %v1162 = vld [vmem:[%s5 + $0x5c] sm:$0xf]
        %v1163 = vld [vmem:[%s5 + $0x60] sm:$0xf]
        %v1164 = vld [vmem:[%s5 + $0x64] sm:$0xf]
        %v1165 = vld [vmem:[%s5 + $0x68] sm:$0xf]
        %v1166 = vld [vmem:[%s5 + $0x6c] sm:$0xf]
        %v1167 = vld [vmem:[%s5 + $0x70] sm:$0xf]
        %v1168 = vld [vmem:[%s5 + $0x74] sm:$0xf]
        %v1169 = vld [vmem:[%s5 + $0x78] sm:$0xf]
        %v1170 = vld [vmem:[%s5 + $0x7c] sm:$0xf]
        %s1171 = scalar_lea.vmem %s5, 128
        %v1172 = vld [vmem:[%s1171] sm:$0xf]
        %v1173 = vld [vmem:[%s1171 + $0x4] sm:$0xf]
        %v1174 = vld [vmem:[%s1171 + $0x8] sm:$0xf]
        %v1175 = vld [vmem:[%s1171 + $0xc] sm:$0xf]
        %v1176 = vld [vmem:[%s1171 + $0x10] sm:$0xf]
        %v1177 = vld [vmem:[%s1171 + $0x14] sm:$0xf]
        %v1178 = vld [vmem:[%s1171 + $0x18] sm:$0xf]
        %v1179 = vld [vmem:[%s1171 + $0x1c] sm:$0xf]
        %v1180 = vld [vmem:[%s1171 + $0x20] sm:$0xf]
        %v1181 = vld [vmem:[%s1171 + $0x24] sm:$0xf]
        %v1182 = vld [vmem:[%s1171 + $0x28] sm:$0xf]
        %v1183 = vld [vmem:[%s1171 + $0x2c] sm:$0xf]
        %v1184 = vld [vmem:[%s1171 + $0x30] sm:$0xf]
        %v1185 = vld [vmem:[%s1171 + $0x34] sm:$0xf]
        %v1186 = vld [vmem:[%s1171 + $0x38] sm:$0xf]
        %v1187 = vld [vmem:[%s1171 + $0x3c] sm:$0xf]
        %v1188 = vld [vmem:[%s1171 + $0x40] sm:$0xf]
        %v1189 = vld [vmem:[%s1171 + $0x44] sm:$0xf]
        %v1190 = vld [vmem:[%s1171 + $0x48] sm:$0xf]
        %v1191 = vld [vmem:[%s1171 + $0x4c] sm:$0xf]
        %v1192 = vld [vmem:[%s1171 + $0x50] sm:$0xf]
        %v1193 = vld [vmem:[%s1171 + $0x54] sm:$0xf]
        %v1194 = vld [vmem:[%s1171 + $0x58] sm:$0xf]
        %v1195 = vld [vmem:[%s1171 + $0x5c] sm:$0xf]
        %v1196 = vld [vmem:[%s1171 + $0x60] sm:$0xf]
        %v1197 = vld [vmem:[%s1171 + $0x64] sm:$0xf]
        %v1198 = vld [vmem:[%s1171 + $0x68] sm:$0xf]
        %v1199 = vld [vmem:[%s1171 + $0x6c] sm:$0xf]
        %v1200 = vld [vmem:[%s1171 + $0x70] sm:$0xf]
        %v1201 = vld [vmem:[%s1171 + $0x74] sm:$0xf]
        %v1202 = vld [vmem:[%s1171 + $0x78] sm:$0xf]
        %v1203 = vld [vmem:[%s1171 + $0x7c] sm:$0xf]
        %v1206 = vunpack.c.l.b16 %v1123
        %v1207 = vunpack.c.h.b16 %v1123
        %v1208 = vunpack.c.l.b16 %v1124
        %v1209 = vunpack.c.h.b16 %v1124
        %v1210 = vpack.c.b16 %v1208, %v1206
        %v1211 = vpack.c.b16 %v1209, %v1207
        %v1246 = vunpack.c.l.b16 %v1172
        %v1247 = vunpack.c.l.b16 %v1173
        %v1248 = vunpack.c.l.b16 %v1174
        %v1249 = vunpack.c.l.b16 %v1175
        %v1250 = vunpack.c.l.b16 %v1176
        %v1251 = vunpack.c.l.b16 %v1177
        %v1252 = vunpack.c.l.b16 %v1178
        %v1253 = vunpack.c.l.b16 %v1179
        %v1254 = vunpack.c.l.b16 %v1180
        %v1255 = vunpack.c.l.b16 %v1181
        %v1256 = vunpack.c.l.b16 %v1182
        %v1257 = vunpack.c.l.b16 %v1183
        %v1258 = vunpack.c.l.b16 %v1184
        %v1259 = vunpack.c.l.b16 %v1185
        %v1260 = vunpack.c.l.b16 %v1186
        %v1261 = vunpack.c.l.b16 %v1187
        %v1262 = vunpack.c.l.b16 %v1188
        %v1263 = vunpack.c.l.b16 %v1189
        %v1264 = vunpack.c.l.b16 %v1190
        %v1265 = vunpack.c.l.b16 %v1191
        %v1266 = vunpack.c.l.b16 %v1192
        %v1267 = vunpack.c.l.b16 %v1193
        %v1268 = vunpack.c.l.b16 %v1194
        %v1269 = vunpack.c.l.b16 %v1195
        %v1270 = vunpack.c.l.b16 %v1196
        %v1271 = vunpack.c.l.b16 %v1197
        %v1272 = vunpack.c.l.b16 %v1198
        %v1273 = vunpack.c.l.b16 %v1199
        %v1274 = vunpack.c.l.b16 %v1200
        %v1275 = vunpack.c.l.b16 %v1201
        %v1276 = vunpack.c.l.b16 %v1202
        %v1277 = vunpack.c.l.b16 %v1203
        %v1278 = vpack.c.b16 %v1247, %v1246
        %v1279 = vpack.c.b16 %v1249, %v1248
        %v1280 = vpack.c.b16 %v1251, %v1250
        %v1281 = vpack.c.b16 %v1253, %v1252
        %v1282 = vpack.c.b16 %v1255, %v1254
        %v1283 = vpack.c.b16 %v1257, %v1256
        %v1284 = vpack.c.b16 %v1259, %v1258
        %v1285 = vpack.c.b16 %v1261, %v1260
        %v1286 = vpack.c.b16 %v1263, %v1262
        %v1287 = vpack.c.b16 %v1265, %v1264
        %v1288 = vpack.c.b16 %v1267, %v1266
        %v1289 = vpack.c.b16 %v1269, %v1268
        %v1290 = vpack.c.b16 %v1271, %v1270
        %v1291 = vpack.c.b16 %v1273, %v1272
        %v1292 = vpack.c.b16 %v1275, %v1274
        %v1293 = vpack.c.b16 %v1277, %v1276
        %1310 = vmatpush.bf16.msra.mxu0 %v1285
        %1311 = vmatpush.bf16.msra.mxu0 %v1284
        %1312 = vmatpush.bf16.msra.mxu0 %v1283
        %1313 = vmatpush.bf16.msra.mxu0 %v1282
        %1314 = vmatpush.bf16.msra.mxu0 %v1281
        %1315 = vmatpush.bf16.msra.mxu0 %v1280
        %1316 = vmatpush.bf16.msra.mxu0 %v1279
        %1317 = vmatpush.bf16.msra.mxu0 %v1278
        %1318 = vmatmul.bf16.gmra.mxu0 %v1210
        %v1319 = vpop.f32.mrf.mxu0
        %v1320 = vadd.f32 0.0, %v1319
        %v1321 = vpop.f32.mrf.mxu0
        %v1322 = vadd.f32 0.0, %v1321
        %1323 = vdwg.mxu0
        %1324 = vmatpush.bf16.msra.mxu0 %v1293
        %1325 = vmatpush.bf16.msra.mxu0 %v1292
        %1326 = vmatpush.bf16.msra.mxu0 %v1291
        %1327 = vmatpush.bf16.msra.mxu0 %v1290
        %1328 = vmatpush.bf16.msra.mxu0 %v1289
        %1329 = vmatpush.bf16.msra.mxu0 %v1288
        %1330 = vmatpush.bf16.msra.mxu0 %v1287
        %1331 = vmatpush.bf16.msra.mxu0 %v1286
        %1332 = vmatmul.bf16.gmra.mxu0 %v1211
        %v1333 = vpop.f32.mrf.mxu0
        %v1334 = vadd.f32 %v1320, %v1333
        %v1335 = vpop.f32.mrf.mxu0
        %v1336 = vadd.f32 %v1322, %v1335
        %1337 = vdwg.mxu0
        %v1340 = vunpack.c.l.b16 %v1121
        %v1341 = vunpack.c.h.b16 %v1121
        %v1342 = vunpack.c.l.b16 %v1122
        %v1343 = vunpack.c.h.b16 %v1122
        %v1344 = vpack.c.b16 %v1342, %v1340
        %v1345 = vpack.c.b16 %v1343, %v1341
        %v1380 = vunpack.c.l.b16 %v1139
        %v1381 = vunpack.c.l.b16 %v1140
        %v1382 = vunpack.c.l.b16 %v1141
        %v1383 = vunpack.c.l.b16 %v1142
        %v1384 = vunpack.c.l.b16 %v1143
        %v1385 = vunpack.c.l.b16 %v1144
        %v1386 = vunpack.c.l.b16 %v1145
        %v1387 = vunpack.c.l.b16 %v1146
        %v1388 = vunpack.c.l.b16 %v1147
        %v1389 = vunpack.c.l.b16 %v1148
        %v1390 = vunpack.c.l.b16 %v1149
        %v1391 = vunpack.c.l.b16 %v1150
        %v1392 = vunpack.c.l.b16 %v1151
        %v1393 = vunpack.c.l.b16 %v1152
        %v1394 = vunpack.c.l.b16 %v1153
        %v1395 = vunpack.c.l.b16 %v1154
        %v1396 = vunpack.c.l.b16 %v1155
        %v1397 = vunpack.c.l.b16 %v1156
        %v1398 = vunpack.c.l.b16 %v1157
        %v1399 = vunpack.c.l.b16 %v1158
        %v1400 = vunpack.c.l.b16 %v1159
        %v1401 = vunpack.c.l.b16 %v1160
        %v1402 = vunpack.c.l.b16 %v1161
        %v1403 = vunpack.c.l.b16 %v1162
        %v1404 = vunpack.c.l.b16 %v1163
        %v1405 = vunpack.c.l.b16 %v1164
        %v1406 = vunpack.c.l.b16 %v1165
        %v1407 = vunpack.c.l.b16 %v1166
        %v1408 = vunpack.c.l.b16 %v1167
        %v1409 = vunpack.c.l.b16 %v1168
        %v1410 = vunpack.c.l.b16 %v1169
        %v1411 = vunpack.c.l.b16 %v1170
        %v1412 = vpack.c.b16 %v1381, %v1380
        %v1413 = vpack.c.b16 %v1383, %v1382
        %v1414 = vpack.c.b16 %v1385, %v1384
        %v1415 = vpack.c.b16 %v1387, %v1386
        %v1416 = vpack.c.b16 %v1389, %v1388
        %v1417 = vpack.c.b16 %v1391, %v1390
        %v1418 = vpack.c.b16 %v1393, %v1392
        %v1419 = vpack.c.b16 %v1395, %v1394
        %v1420 = vpack.c.b16 %v1397, %v1396
        %v1421 = vpack.c.b16 %v1399, %v1398
        %v1422 = vpack.c.b16 %v1401, %v1400
        %v1423 = vpack.c.b16 %v1403, %v1402
        %v1424 = vpack.c.b16 %v1405, %v1404
        %v1425 = vpack.c.b16 %v1407, %v1406
        %v1426 = vpack.c.b16 %v1409, %v1408
        %v1427 = vpack.c.b16 %v1411, %v1410
        %1444 = vmatpush.bf16.msra.mxu0 %v1419
        %1445 = vmatpush.bf16.msra.mxu0 %v1418
        %1446 = vmatpush.bf16.msra.mxu0 %v1417
        %1447 = vmatpush.bf16.msra.mxu0 %v1416
        %1448 = vmatpush.bf16.msra.mxu0 %v1415
        %1449 = vmatpush.bf16.msra.mxu0 %v1414
        %1450 = vmatpush.bf16.msra.mxu0 %v1413
        %1451 = vmatpush.bf16.msra.mxu0 %v1412
        %1452 = vmatmul.bf16.gmra.mxu0 %v1344
        %v1453 = vpop.f32.mrf.mxu0
        %v1454 = vadd.f32 %v1334, %v1453
        %v1455 = vpop.f32.mrf.mxu0
        %v1456 = vadd.f32 %v1336, %v1455
        %1457 = vdwg.mxu0
        %1458 = vmatpush.bf16.msra.mxu0 %v1427
        %1459 = vmatpush.bf16.msra.mxu0 %v1426
        %1460 = vmatpush.bf16.msra.mxu0 %v1425
        %1461 = vmatpush.bf16.msra.mxu0 %v1424
        %1462 = vmatpush.bf16.msra.mxu0 %v1423
        %1463 = vmatpush.bf16.msra.mxu0 %v1422
        %1464 = vmatpush.bf16.msra.mxu0 %v1421
        %1465 = vmatpush.bf16.msra.mxu0 %v1420
        %1466 = vmatmul.bf16.gmra.mxu0 %v1345
        %v1467 = vpop.f32.mrf.mxu0
        %v1468 = vadd.f32 %v1454, %v1467
        %v1469 = vpop.f32.mrf.mxu0
        %v1470 = vadd.f32 %v1456, %v1469
        %1471 = vdwg.mxu0
        %s1472 = scalar_lea.vmem %s5, 256
        %v1473 = vld [vmem:[%s1472] sm:$0xf]
        %v1474 = vld [vmem:[%s1472 + $0x4] sm:$0xf]
        %v1475 = vld [vmem:[%s1472 + $0x8] sm:$0xf]
        %v1476 = vld [vmem:[%s1472 + $0xc] sm:$0xf]
        %v1477 = vld [vmem:[%s1472 + $0x10] sm:$0xf]
        %v1478 = vld [vmem:[%s1472 + $0x14] sm:$0xf]
        %v1479 = vld [vmem:[%s1472 + $0x18] sm:$0xf]
        %v1480 = vld [vmem:[%s1472 + $0x1c] sm:$0xf]
        %v1481 = vld [vmem:[%s1472 + $0x20] sm:$0xf]
        %v1482 = vld [vmem:[%s1472 + $0x24] sm:$0xf]
        %v1483 = vld [vmem:[%s1472 + $0x28] sm:$0xf]
        %v1484 = vld [vmem:[%s1472 + $0x2c] sm:$0xf]
        %v1485 = vld [vmem:[%s1472 + $0x30] sm:$0xf]
        %v1486 = vld [vmem:[%s1472 + $0x34] sm:$0xf]
        %v1487 = vld [vmem:[%s1472 + $0x38] sm:$0xf]
        %v1488 = vld [vmem:[%s1472 + $0x3c] sm:$0xf]
        %v1489 = vld [vmem:[%s1472 + $0x40] sm:$0xf]
        %v1490 = vld [vmem:[%s1472 + $0x44] sm:$0xf]
        %v1491 = vld [vmem:[%s1472 + $0x48] sm:$0xf]
        %v1492 = vld [vmem:[%s1472 + $0x4c] sm:$0xf]
        %v1493 = vld [vmem:[%s1472 + $0x50] sm:$0xf]
        %v1494 = vld [vmem:[%s1472 + $0x54] sm:$0xf]
        %v1495 = vld [vmem:[%s1472 + $0x58] sm:$0xf]
        %v1496 = vld [vmem:[%s1472 + $0x5c] sm:$0xf]
        %v1497 = vld [vmem:[%s1472 + $0x60] sm:$0xf]
        %v1498 = vld [vmem:[%s1472 + $0x64] sm:$0xf]
        %v1499 = vld [vmem:[%s1472 + $0x68] sm:$0xf]
        %v1500 = vld [vmem:[%s1472 + $0x6c] sm:$0xf]
        %v1501 = vld [vmem:[%s1472 + $0x70] sm:$0xf]
        %v1502 = vld [vmem:[%s1472 + $0x74] sm:$0xf]
        %v1503 = vld [vmem:[%s1472 + $0x78] sm:$0xf]
        %v1504 = vld [vmem:[%s1472 + $0x7c] sm:$0xf]
        %v1507 = vunpack.c.l.b16 %v1125
        %v1508 = vunpack.c.h.b16 %v1125
        %v1509 = vunpack.c.l.b16 %v1126
        %v1510 = vunpack.c.h.b16 %v1126
        %v1511 = vpack.c.b16 %v1509, %v1507
        %v1512 = vpack.c.b16 %v1510, %v1508
        %v1547 = vunpack.c.l.b16 %v1473
        %v1548 = vunpack.c.l.b16 %v1474
        %v1549 = vunpack.c.l.b16 %v1475
        %v1550 = vunpack.c.l.b16 %v1476
        %v1551 = vunpack.c.l.b16 %v1477
        %v1552 = vunpack.c.l.b16 %v1478
        %v1553 = vunpack.c.l.b16 %v1479
        %v1554 = vunpack.c.l.b16 %v1480
        %v1555 = vunpack.c.l.b16 %v1481
        %v1556 = vunpack.c.l.b16 %v1482
        %v1557 = vunpack.c.l.b16 %v1483
        %v1558 = vunpack.c.l.b16 %v1484
        %v1559 = vunpack.c.l.b16 %v1485
        %v1560 = vunpack.c.l.b16 %v1486
        %v1561 = vunpack.c.l.b16 %v1487
        %v1562 = vunpack.c.l.b16 %v1488
        %v1563 = vunpack.c.l.b16 %v1489
        %v1564 = vunpack.c.l.b16 %v1490
        %v1565 = vunpack.c.l.b16 %v1491
        %v1566 = vunpack.c.l.b16 %v1492
        %v1567 = vunpack.c.l.b16 %v1493
        %v1568 = vunpack.c.l.b16 %v1494
        %v1569 = vunpack.c.l.b16 %v1495
        %v1570 = vunpack.c.l.b16 %v1496
        %v1571 = vunpack.c.l.b16 %v1497
        %v1572 = vunpack.c.l.b16 %v1498
        %v1573 = vunpack.c.l.b16 %v1499
        %v1574 = vunpack.c.l.b16 %v1500
        %v1575 = vunpack.c.l.b16 %v1501
        %v1576 = vunpack.c.l.b16 %v1502
        %v1577 = vunpack.c.l.b16 %v1503
        %v1578 = vunpack.c.l.b16 %v1504
        %v1579 = vpack.c.b16 %v1548, %v1547
        %v1580 = vpack.c.b16 %v1550, %v1549
        %v1581 = vpack.c.b16 %v1552, %v1551
        %v1582 = vpack.c.b16 %v1554, %v1553
        %v1583 = vpack.c.b16 %v1556, %v1555
        %v1584 = vpack.c.b16 %v1558, %v1557
        %v1585 = vpack.c.b16 %v1560, %v1559
        %v1586 = vpack.c.b16 %v1562, %v1561
        %v1587 = vpack.c.b16 %v1564, %v1563
        %v1588 = vpack.c.b16 %v1566, %v1565
        %v1589 = vpack.c.b16 %v1568, %v1567
        %v1590 = vpack.c.b16 %v1570, %v1569
        %v1591 = vpack.c.b16 %v1572, %v1571
        %v1592 = vpack.c.b16 %v1574, %v1573
        %v1593 = vpack.c.b16 %v1576, %v1575
        %v1594 = vpack.c.b16 %v1578, %v1577
        %1611 = vmatpush.bf16.msra.mxu0 %v1586
        %1612 = vmatpush.bf16.msra.mxu0 %v1585
        %1613 = vmatpush.bf16.msra.mxu0 %v1584
        %1614 = vmatpush.bf16.msra.mxu0 %v1583
        %1615 = vmatpush.bf16.msra.mxu0 %v1582
        %1616 = vmatpush.bf16.msra.mxu0 %v1581
        %1617 = vmatpush.bf16.msra.mxu0 %v1580
        %1618 = vmatpush.bf16.msra.mxu0 %v1579
        %1619 = vmatmul.bf16.gmra.mxu0 %v1511
        %v1620 = vpop.f32.mrf.mxu0
        %v1621 = vadd.f32 0.0, %v1620
        %v1622 = vpop.f32.mrf.mxu0
        %v1623 = vadd.f32 0.0, %v1622
        %1624 = vdwg.mxu0
        %1625 = vmatpush.bf16.msra.mxu0 %v1594
        %1626 = vmatpush.bf16.msra.mxu0 %v1593
        %1627 = vmatpush.bf16.msra.mxu0 %v1592
        %1628 = vmatpush.bf16.msra.mxu0 %v1591
        %1629 = vmatpush.bf16.msra.mxu0 %v1590
        %1630 = vmatpush.bf16.msra.mxu0 %v1589
        %1631 = vmatpush.bf16.msra.mxu0 %v1588
        %1632 = vmatpush.bf16.msra.mxu0 %v1587
        %1633 = vmatmul.bf16.gmra.mxu0 %v1512
        %v1634 = vpop.f32.mrf.mxu0
        %v1635 = vadd.f32 %v1621, %v1634
        %v1636 = vpop.f32.mrf.mxu0
        %v1637 = vadd.f32 %v1623, %v1636
        %1638 = vdwg.mxu0
        %v1639 = vadd.f32 %v1468, %v1635
        %v1640 = vadd.f32 %v1470, %v1637
        %s1641 = scalar_lea.vmem %s5, 384
        %v1642 = vld [vmem:[%s1641] sm:$0xf]
        %v1643 = vld [vmem:[%s1641 + $0x4] sm:$0xf]
        %v1644 = vld [vmem:[%s1641 + $0x8] sm:$0xf]
        %v1645 = vld [vmem:[%s1641 + $0xc] sm:$0xf]
        %v1646 = vld [vmem:[%s1641 + $0x10] sm:$0xf]
        %v1647 = vld [vmem:[%s1641 + $0x14] sm:$0xf]
        %v1648 = vld [vmem:[%s1641 + $0x18] sm:$0xf]
        %v1649 = vld [vmem:[%s1641 + $0x1c] sm:$0xf]
        %v1650 = vld [vmem:[%s1641 + $0x20] sm:$0xf]
        %v1651 = vld [vmem:[%s1641 + $0x24] sm:$0xf]
        %v1652 = vld [vmem:[%s1641 + $0x28] sm:$0xf]
        %v1653 = vld [vmem:[%s1641 + $0x2c] sm:$0xf]
        %v1654 = vld [vmem:[%s1641 + $0x30] sm:$0xf]
        %v1655 = vld [vmem:[%s1641 + $0x34] sm:$0xf]
        %v1656 = vld [vmem:[%s1641 + $0x38] sm:$0xf]
        %v1657 = vld [vmem:[%s1641 + $0x3c] sm:$0xf]
        %v1658 = vld [vmem:[%s1641 + $0x40] sm:$0xf]
        %v1659 = vld [vmem:[%s1641 + $0x44] sm:$0xf]
        %v1660 = vld [vmem:[%s1641 + $0x48] sm:$0xf]
        %v1661 = vld [vmem:[%s1641 + $0x4c] sm:$0xf]
        %v1662 = vld [vmem:[%s1641 + $0x50] sm:$0xf]
        %v1663 = vld [vmem:[%s1641 + $0x54] sm:$0xf]
        %v1664 = vld [vmem:[%s1641 + $0x58] sm:$0xf]
        %v1665 = vld [vmem:[%s1641 + $0x5c] sm:$0xf]
        %v1666 = vld [vmem:[%s1641 + $0x60] sm:$0xf]
        %v1667 = vld [vmem:[%s1641 + $0x64] sm:$0xf]
        %v1668 = vld [vmem:[%s1641 + $0x68] sm:$0xf]
        %v1669 = vld [vmem:[%s1641 + $0x6c] sm:$0xf]
        %v1670 = vld [vmem:[%s1641 + $0x70] sm:$0xf]
        %v1671 = vld [vmem:[%s1641 + $0x74] sm:$0xf]
        %v1672 = vld [vmem:[%s1641 + $0x78] sm:$0xf]
        %v1673 = vld [vmem:[%s1641 + $0x7c] sm:$0xf]
        %v1676 = vunpack.c.l.b16 %v1127
        %v1677 = vunpack.c.h.b16 %v1127
        %v1678 = vunpack.c.l.b16 %v1128
        %v1679 = vunpack.c.h.b16 %v1128
        %v1680 = vpack.c.b16 %v1678, %v1676
        %v1681 = vpack.c.b16 %v1679, %v1677
        %v1716 = vunpack.c.l.b16 %v1642
        %v1717 = vunpack.c.l.b16 %v1643
        %v1718 = vunpack.c.l.b16 %v1644
        %v1719 = vunpack.c.l.b16 %v1645
        %v1720 = vunpack.c.l.b16 %v1646
        %v1721 = vunpack.c.l.b16 %v1647
        %v1722 = vunpack.c.l.b16 %v1648
        %v1723 = vunpack.c.l.b16 %v1649
        %v1724 = vunpack.c.l.b16 %v1650
        %v1725 = vunpack.c.l.b16 %v1651
        %v1726 = vunpack.c.l.b16 %v1652
        %v1727 = vunpack.c.l.b16 %v1653
        %v1728 = vunpack.c.l.b16 %v1654
        %v1729 = vunpack.c.l.b16 %v1655
        %v1730 = vunpack.c.l.b16 %v1656
        %v1731 = vunpack.c.l.b16 %v1657
        %v1732 = vunpack.c.l.b16 %v1658
        %v1733 = vunpack.c.l.b16 %v1659
        %v1734 = vunpack.c.l.b16 %v1660
        %v1735 = vunpack.c.l.b16 %v1661
        %v1736 = vunpack.c.l.b16 %v1662
        %v1737 = vunpack.c.l.b16 %v1663
        %v1738 = vunpack.c.l.b16 %v1664
        %v1739 = vunpack.c.l.b16 %v1665
        %v1740 = vunpack.c.l.b16 %v1666
        %v1741 = vunpack.c.l.b16 %v1667
        %v1742 = vunpack.c.l.b16 %v1668
        %v1743 = vunpack.c.l.b16 %v1669
        %v1744 = vunpack.c.l.b16 %v1670
        %v1745 = vunpack.c.l.b16 %v1671
        %v1746 = vunpack.c.l.b16 %v1672
        %v1747 = vunpack.c.l.b16 %v1673
        %v1748 = vpack.c.b16 %v1717, %v1716
        %v1749 = vpack.c.b16 %v1719, %v1718
        %v1750 = vpack.c.b16 %v1721, %v1720
        %v1751 = vpack.c.b16 %v1723, %v1722
        %v1752 = vpack.c.b16 %v1725, %v1724
        %v1753 = vpack.c.b16 %v1727, %v1726
        %v1754 = vpack.c.b16 %v1729, %v1728
        %v1755 = vpack.c.b16 %v1731, %v1730
        %v1756 = vpack.c.b16 %v1733, %v1732
        %v1757 = vpack.c.b16 %v1735, %v1734
        %v1758 = vpack.c.b16 %v1737, %v1736
        %v1759 = vpack.c.b16 %v1739, %v1738
        %v1760 = vpack.c.b16 %v1741, %v1740
        %v1761 = vpack.c.b16 %v1743, %v1742
        %v1762 = vpack.c.b16 %v1745, %v1744
        %v1763 = vpack.c.b16 %v1747, %v1746
        %1780 = vmatpush.bf16.msra.mxu0 %v1755
        %1781 = vmatpush.bf16.msra.mxu0 %v1754
        %1782 = vmatpush.bf16.msra.mxu0 %v1753
        %1783 = vmatpush.bf16.msra.mxu0 %v1752
        %1784 = vmatpush.bf16.msra.mxu0 %v1751
        %1785 = vmatpush.bf16.msra.mxu0 %v1750
        %1786 = vmatpush.bf16.msra.mxu0 %v1749
        %1787 = vmatpush.bf16.msra.mxu0 %v1748
        %1788 = vmatmul.bf16.gmra.mxu0 %v1680
        %v1789 = vpop.f32.mrf.mxu0
        %v1790 = vadd.f32 0.0, %v1789
        %v1791 = vpop.f32.mrf.mxu0
        %v1792 = vadd.f32 0.0, %v1791
        %1793 = vdwg.mxu0
        %1794 = vmatpush.bf16.msra.mxu0 %v1763
        %1795 = vmatpush.bf16.msra.mxu0 %v1762
        %1796 = vmatpush.bf16.msra.mxu0 %v1761
        %1797 = vmatpush.bf16.msra.mxu0 %v1760
        %1798 = vmatpush.bf16.msra.mxu0 %v1759
        %1799 = vmatpush.bf16.msra.mxu0 %v1758
        %1800 = vmatpush.bf16.msra.mxu0 %v1757
        %1801 = vmatpush.bf16.msra.mxu0 %v1756
        %1802 = vmatmul.bf16.gmra.mxu0 %v1681
        %v1803 = vpop.f32.mrf.mxu0
        %v1804 = vadd.f32 %v1790, %v1803
        %v1805 = vpop.f32.mrf.mxu0
        %v1806 = vadd.f32 %v1792, %v1805
        %1807 = vdwg.mxu0
        %v1808 = vadd.f32 %v1639, %v1804
        %v1809 = vadd.f32 %v1640, %v1806
        %s1810 = scalar_lea.vmem %s5, 512
        %v1811 = vld [vmem:[%s1810] sm:$0xf]
        %v1812 = vld [vmem:[%s1810 + $0x4] sm:$0xf]
        %v1813 = vld [vmem:[%s1810 + $0x8] sm:$0xf]
        %v1814 = vld [vmem:[%s1810 + $0xc] sm:$0xf]
        %v1815 = vld [vmem:[%s1810 + $0x10] sm:$0xf]
        %v1816 = vld [vmem:[%s1810 + $0x14] sm:$0xf]
        %v1817 = vld [vmem:[%s1810 + $0x18] sm:$0xf]
        %v1818 = vld [vmem:[%s1810 + $0x1c] sm:$0xf]
        %v1819 = vld [vmem:[%s1810 + $0x20] sm:$0xf]
        %v1820 = vld [vmem:[%s1810 + $0x24] sm:$0xf]
        %v1821 = vld [vmem:[%s1810 + $0x28] sm:$0xf]
        %v1822 = vld [vmem:[%s1810 + $0x2c] sm:$0xf]
        %v1823 = vld [vmem:[%s1810 + $0x30] sm:$0xf]
        %v1824 = vld [vmem:[%s1810 + $0x34] sm:$0xf]
        %v1825 = vld [vmem:[%s1810 + $0x38] sm:$0xf]
        %v1826 = vld [vmem:[%s1810 + $0x3c] sm:$0xf]
        %v1827 = vld [vmem:[%s1810 + $0x40] sm:$0xf]
        %v1828 = vld [vmem:[%s1810 + $0x44] sm:$0xf]
        %v1829 = vld [vmem:[%s1810 + $0x48] sm:$0xf]
        %v1830 = vld [vmem:[%s1810 + $0x4c] sm:$0xf]
        %v1831 = vld [vmem:[%s1810 + $0x50] sm:$0xf]
        %v1832 = vld [vmem:[%s1810 + $0x54] sm:$0xf]
        %v1833 = vld [vmem:[%s1810 + $0x58] sm:$0xf]
        %v1834 = vld [vmem:[%s1810 + $0x5c] sm:$0xf]
        %v1835 = vld [vmem:[%s1810 + $0x60] sm:$0xf]
        %v1836 = vld [vmem:[%s1810 + $0x64] sm:$0xf]
        %v1837 = vld [vmem:[%s1810 + $0x68] sm:$0xf]
        %v1838 = vld [vmem:[%s1810 + $0x6c] sm:$0xf]
        %v1839 = vld [vmem:[%s1810 + $0x70] sm:$0xf]
        %v1840 = vld [vmem:[%s1810 + $0x74] sm:$0xf]
        %v1841 = vld [vmem:[%s1810 + $0x78] sm:$0xf]
        %v1842 = vld [vmem:[%s1810 + $0x7c] sm:$0xf]
        %v1845 = vunpack.c.l.b16 %v1129
        %v1846 = vunpack.c.h.b16 %v1129
        %v1847 = vunpack.c.l.b16 %v1130
        %v1848 = vunpack.c.h.b16 %v1130
        %v1849 = vpack.c.b16 %v1847, %v1845
        %v1850 = vpack.c.b16 %v1848, %v1846
        %v1885 = vunpack.c.l.b16 %v1811
        %v1886 = vunpack.c.l.b16 %v1812
        %v1887 = vunpack.c.l.b16 %v1813
        %v1888 = vunpack.c.l.b16 %v1814
        %v1889 = vunpack.c.l.b16 %v1815
        %v1890 = vunpack.c.l.b16 %v1816
        %v1891 = vunpack.c.l.b16 %v1817
        %v1892 = vunpack.c.l.b16 %v1818
        %v1893 = vunpack.c.l.b16 %v1819
        %v1894 = vunpack.c.l.b16 %v1820
        %v1895 = vunpack.c.l.b16 %v1821
        %v1896 = vunpack.c.l.b16 %v1822
        %v1897 = vunpack.c.l.b16 %v1823
        %v1898 = vunpack.c.l.b16 %v1824
        %v1899 = vunpack.c.l.b16 %v1825
        %v1900 = vunpack.c.l.b16 %v1826
        %v1901 = vunpack.c.l.b16 %v1827
        %v1902 = vunpack.c.l.b16 %v1828
        %v1903 = vunpack.c.l.b16 %v1829
        %v1904 = vunpack.c.l.b16 %v1830
        %v1905 = vunpack.c.l.b16 %v1831
        %v1906 = vunpack.c.l.b16 %v1832
        %v1907 = vunpack.c.l.b16 %v1833
        %v1908 = vunpack.c.l.b16 %v1834
        %v1909 = vunpack.c.l.b16 %v1835
        %v1910 = vunpack.c.l.b16 %v1836
        %v1911 = vunpack.c.l.b16 %v1837
        %v1912 = vunpack.c.l.b16 %v1838
        %v1913 = vunpack.c.l.b16 %v1839
        %v1914 = vunpack.c.l.b16 %v1840
        %v1915 = vunpack.c.l.b16 %v1841
        %v1916 = vunpack.c.l.b16 %v1842
        %v1917 = vpack.c.b16 %v1886, %v1885
        %v1918 = vpack.c.b16 %v1888, %v1887
        %v1919 = vpack.c.b16 %v1890, %v1889
        %v1920 = vpack.c.b16 %v1892, %v1891
        %v1921 = vpack.c.b16 %v1894, %v1893
        %v1922 = vpack.c.b16 %v1896, %v1895
        %v1923 = vpack.c.b16 %v1898, %v1897
        %v1924 = vpack.c.b16 %v1900, %v1899
        %v1925 = vpack.c.b16 %v1902, %v1901
        %v1926 = vpack.c.b16 %v1904, %v1903
        %v1927 = vpack.c.b16 %v1906, %v1905
        %v1928 = vpack.c.b16 %v1908, %v1907
        %v1929 = vpack.c.b16 %v1910, %v1909
        %v1930 = vpack.c.b16 %v1912, %v1911
        %v1931 = vpack.c.b16 %v1914, %v1913
        %v1932 = vpack.c.b16 %v1916, %v1915
        %1949 = vmatpush.bf16.msra.mxu0 %v1924
        %1950 = vmatpush.bf16.msra.mxu0 %v1923
        %1951 = vmatpush.bf16.msra.mxu0 %v1922
        %1952 = vmatpush.bf16.msra.mxu0 %v1921
        %1953 = vmatpush.bf16.msra.mxu0 %v1920
        %1954 = vmatpush.bf16.msra.mxu0 %v1919
        %1955 = vmatpush.bf16.msra.mxu0 %v1918
        %1956 = vmatpush.bf16.msra.mxu0 %v1917
        %1957 = vmatmul.bf16.gmra.mxu0 %v1849
        %v1958 = vpop.f32.mrf.mxu0
        %v1959 = vadd.f32 0.0, %v1958
        %v1960 = vpop.f32.mrf.mxu0
        %v1961 = vadd.f32 0.0, %v1960
        %1962 = vdwg.mxu0
        %1963 = vmatpush.bf16.msra.mxu0 %v1932
        %1964 = vmatpush.bf16.msra.mxu0 %v1931
        %1965 = vmatpush.bf16.msra.mxu0 %v1930
        %1966 = vmatpush.bf16.msra.mxu0 %v1929
        %1967 = vmatpush.bf16.msra.mxu0 %v1928
        %1968 = vmatpush.bf16.msra.mxu0 %v1927
        %1969 = vmatpush.bf16.msra.mxu0 %v1926
        %1970 = vmatpush.bf16.msra.mxu0 %v1925
        %1971 = vmatmul.bf16.gmra.mxu0 %v1850
        %v1972 = vpop.f32.mrf.mxu0
        %v1973 = vadd.f32 %v1959, %v1972
        %v1974 = vpop.f32.mrf.mxu0
        %v1975 = vadd.f32 %v1961, %v1974
        %1976 = vdwg.mxu0
        %v1977 = vadd.f32 %v1808, %v1973
        %v1978 = vadd.f32 %v1809, %v1975
        %s1979 = scalar_lea.vmem %s5, 640
        %v1980 = vld [vmem:[%s1979] sm:$0xf]
        %v1981 = vld [vmem:[%s1979 + $0x4] sm:$0xf]
        %v1982 = vld [vmem:[%s1979 + $0x8] sm:$0xf]
        %v1983 = vld [vmem:[%s1979 + $0xc] sm:$0xf]
        %v1984 = vld [vmem:[%s1979 + $0x10] sm:$0xf]
        %v1985 = vld [vmem:[%s1979 + $0x14] sm:$0xf]
        %v1986 = vld [vmem:[%s1979 + $0x18] sm:$0xf]
        %v1987 = vld [vmem:[%s1979 + $0x1c] sm:$0xf]
        %v1988 = vld [vmem:[%s1979 + $0x20] sm:$0xf]
        %v1989 = vld [vmem:[%s1979 + $0x24] sm:$0xf]
        %v1990 = vld [vmem:[%s1979 + $0x28] sm:$0xf]
        %v1991 = vld [vmem:[%s1979 + $0x2c] sm:$0xf]
        %v1992 = vld [vmem:[%s1979 + $0x30] sm:$0xf]
        %v1993 = vld [vmem:[%s1979 + $0x34] sm:$0xf]
        %v1994 = vld [vmem:[%s1979 + $0x38] sm:$0xf]
        %v1995 = vld [vmem:[%s1979 + $0x3c] sm:$0xf]
        %v1996 = vld [vmem:[%s1979 + $0x40] sm:$0xf]
        %v1997 = vld [vmem:[%s1979 + $0x44] sm:$0xf]
        %v1998 = vld [vmem:[%s1979 + $0x48] sm:$0xf]
        %v1999 = vld [vmem:[%s1979 + $0x4c] sm:$0xf]
        %v2000 = vld [vmem:[%s1979 + $0x50] sm:$0xf]
        %v2001 = vld [vmem:[%s1979 + $0x54] sm:$0xf]
        %v2002 = vld [vmem:[%s1979 + $0x58] sm:$0xf]
        %v2003 = vld [vmem:[%s1979 + $0x5c] sm:$0xf]
        %v2004 = vld [vmem:[%s1979 + $0x60] sm:$0xf]
        %v2005 = vld [vmem:[%s1979 + $0x64] sm:$0xf]
        %v2006 = vld [vmem:[%s1979 + $0x68] sm:$0xf]
        %v2007 = vld [vmem:[%s1979 + $0x6c] sm:$0xf]
        %v2008 = vld [vmem:[%s1979 + $0x70] sm:$0xf]
        %v2009 = vld [vmem:[%s1979 + $0x74] sm:$0xf]
        %v2010 = vld [vmem:[%s1979 + $0x78] sm:$0xf]
        %v2011 = vld [vmem:[%s1979 + $0x7c] sm:$0xf]
        %v2014 = vunpack.c.l.b16 %v1131
        %v2015 = vunpack.c.h.b16 %v1131
        %v2016 = vunpack.c.l.b16 %v1132
        %v2017 = vunpack.c.h.b16 %v1132
        %v2018 = vpack.c.b16 %v2016, %v2014
        %v2019 = vpack.c.b16 %v2017, %v2015
        %v2054 = vunpack.c.l.b16 %v1980
        %v2055 = vunpack.c.l.b16 %v1981
        %v2056 = vunpack.c.l.b16 %v1982
        %v2057 = vunpack.c.l.b16 %v1983
        %v2058 = vunpack.c.l.b16 %v1984
        %v2059 = vunpack.c.l.b16 %v1985
        %v2060 = vunpack.c.l.b16 %v1986
        %v2061 = vunpack.c.l.b16 %v1987
        %v2062 = vunpack.c.l.b16 %v1988
        %v2063 = vunpack.c.l.b16 %v1989
        %v2064 = vunpack.c.l.b16 %v1990
        %v2065 = vunpack.c.l.b16 %v1991
        %v2066 = vunpack.c.l.b16 %v1992
        %v2067 = vunpack.c.l.b16 %v1993
        %v2068 = vunpack.c.l.b16 %v1994
        %v2069 = vunpack.c.l.b16 %v1995
        %v2070 = vunpack.c.l.b16 %v1996
        %v2071 = vunpack.c.l.b16 %v1997
        %v2072 = vunpack.c.l.b16 %v1998
        %v2073 = vunpack.c.l.b16 %v1999
        %v2074 = vunpack.c.l.b16 %v2000
        %v2075 = vunpack.c.l.b16 %v2001
        %v2076 = vunpack.c.l.b16 %v2002
        %v2077 = vunpack.c.l.b16 %v2003
        %v2078 = vunpack.c.l.b16 %v2004
        %v2079 = vunpack.c.l.b16 %v2005
        %v2080 = vunpack.c.l.b16 %v2006
        %v2081 = vunpack.c.l.b16 %v2007
        %v2082 = vunpack.c.l.b16 %v2008
        %v2083 = vunpack.c.l.b16 %v2009
        %v2084 = vunpack.c.l.b16 %v2010
        %v2085 = vunpack.c.l.b16 %v2011
        %v2086 = vpack.c.b16 %v2055, %v2054
        %v2087 = vpack.c.b16 %v2057, %v2056
        %v2088 = vpack.c.b16 %v2059, %v2058
        %v2089 = vpack.c.b16 %v2061, %v2060
        %v2090 = vpack.c.b16 %v2063, %v2062
        %v2091 = vpack.c.b16 %v2065, %v2064
        %v2092 = vpack.c.b16 %v2067, %v2066
        %v2093 = vpack.c.b16 %v2069, %v2068
        %v2094 = vpack.c.b16 %v2071, %v2070
        %v2095 = vpack.c.b16 %v2073, %v2072
        %v2096 = vpack.c.b16 %v2075, %v2074
        %v2097 = vpack.c.b16 %v2077, %v2076
        %v2098 = vpack.c.b16 %v2079, %v2078
        %v2099 = vpack.c.b16 %v2081, %v2080
        %v2100 = vpack.c.b16 %v2083, %v2082
        %v2101 = vpack.c.b16 %v2085, %v2084
        %2118 = vmatpush.bf16.msra.mxu0 %v2093
        %2119 = vmatpush.bf16.msra.mxu0 %v2092
        %2120 = vmatpush.bf16.msra.mxu0 %v2091
        %2121 = vmatpush.bf16.msra.mxu0 %v2090
        %2122 = vmatpush.bf16.msra.mxu0 %v2089
        %2123 = vmatpush.bf16.msra.mxu0 %v2088
        %2124 = vmatpush.bf16.msra.mxu0 %v2087
        %2125 = vmatpush.bf16.msra.mxu0 %v2086
        %2126 = vmatmul.bf16.gmra.mxu0 %v2018
        %v2127 = vpop.f32.mrf.mxu0
        %v2128 = vadd.f32 0.0, %v2127
        %v2129 = vpop.f32.mrf.mxu0
        %v2130 = vadd.f32 0.0, %v2129
        %2131 = vdwg.mxu0
        %2132 = vmatpush.bf16.msra.mxu0 %v2101
        %2133 = vmatpush.bf16.msra.mxu0 %v2100
        %2134 = vmatpush.bf16.msra.mxu0 %v2099
        %2135 = vmatpush.bf16.msra.mxu0 %v2098
        %2136 = vmatpush.bf16.msra.mxu0 %v2097
        %2137 = vmatpush.bf16.msra.mxu0 %v2096
        %2138 = vmatpush.bf16.msra.mxu0 %v2095
        %2139 = vmatpush.bf16.msra.mxu0 %v2094
        %2140 = vmatmul.bf16.gmra.mxu0 %v2019
        %v2141 = vpop.f32.mrf.mxu0
        %v2142 = vadd.f32 %v2128, %v2141
        %v2143 = vpop.f32.mrf.mxu0
        %v2144 = vadd.f32 %v2130, %v2143
        %2145 = vdwg.mxu0
        %v2146 = vadd.f32 %v1977, %v2142
        %v2147 = vadd.f32 %v1978, %v2144
        %s2148 = scalar_lea.vmem %s5, 768
        %v2149 = vld [vmem:[%s2148] sm:$0xf]
        %v2150 = vld [vmem:[%s2148 + $0x4] sm:$0xf]
        %v2151 = vld [vmem:[%s2148 + $0x8] sm:$0xf]
        %v2152 = vld [vmem:[%s2148 + $0xc] sm:$0xf]
        %v2153 = vld [vmem:[%s2148 + $0x10] sm:$0xf]
        %v2154 = vld [vmem:[%s2148 + $0x14] sm:$0xf]
        %v2155 = vld [vmem:[%s2148 + $0x18] sm:$0xf]
        %v2156 = vld [vmem:[%s2148 + $0x1c] sm:$0xf]
        %v2157 = vld [vmem:[%s2148 + $0x20] sm:$0xf]
        %v2158 = vld [vmem:[%s2148 + $0x24] sm:$0xf]
        %v2159 = vld [vmem:[%s2148 + $0x28] sm:$0xf]
        %v2160 = vld [vmem:[%s2148 + $0x2c] sm:$0xf]
        %v2161 = vld [vmem:[%s2148 + $0x30] sm:$0xf]
        %v2162 = vld [vmem:[%s2148 + $0x34] sm:$0xf]
        %v2163 = vld [vmem:[%s2148 + $0x38] sm:$0xf]
        %v2164 = vld [vmem:[%s2148 + $0x3c] sm:$0xf]
        %v2165 = vld [vmem:[%s2148 + $0x40] sm:$0xf]
        %v2166 = vld [vmem:[%s2148 + $0x44] sm:$0xf]
        %v2167 = vld [vmem:[%s2148 + $0x48] sm:$0xf]
        %v2168 = vld [vmem:[%s2148 + $0x4c] sm:$0xf]
        %v2169 = vld [vmem:[%s2148 + $0x50] sm:$0xf]
        %v2170 = vld [vmem:[%s2148 + $0x54] sm:$0xf]
        %v2171 = vld [vmem:[%s2148 + $0x58] sm:$0xf]
        %v2172 = vld [vmem:[%s2148 + $0x5c] sm:$0xf]
        %v2173 = vld [vmem:[%s2148 + $0x60] sm:$0xf]
        %v2174 = vld [vmem:[%s2148 + $0x64] sm:$0xf]
        %v2175 = vld [vmem:[%s2148 + $0x68] sm:$0xf]
        %v2176 = vld [vmem:[%s2148 + $0x6c] sm:$0xf]
        %v2177 = vld [vmem:[%s2148 + $0x70] sm:$0xf]
        %v2178 = vld [vmem:[%s2148 + $0x74] sm:$0xf]
        %v2179 = vld [vmem:[%s2148 + $0x78] sm:$0xf]
        %v2180 = vld [vmem:[%s2148 + $0x7c] sm:$0xf]
        %v2183 = vunpack.c.l.b16 %v1133
        %v2184 = vunpack.c.h.b16 %v1133
        %v2185 = vunpack.c.l.b16 %v1134
        %v2186 = vunpack.c.h.b16 %v1134
        %v2187 = vpack.c.b16 %v2185, %v2183
        %v2188 = vpack.c.b16 %v2186, %v2184
        %v2223 = vunpack.c.l.b16 %v2149
        %v2224 = vunpack.c.l.b16 %v2150
        %v2225 = vunpack.c.l.b16 %v2151
        %v2226 = vunpack.c.l.b16 %v2152
        %v2227 = vunpack.c.l.b16 %v2153
        %v2228 = vunpack.c.l.b16 %v2154
        %v2229 = vunpack.c.l.b16 %v2155
        %v2230 = vunpack.c.l.b16 %v2156
        %v2231 = vunpack.c.l.b16 %v2157
        %v2232 = vunpack.c.l.b16 %v2158
        %v2233 = vunpack.c.l.b16 %v2159
        %v2234 = vunpack.c.l.b16 %v2160
        %v2235 = vunpack.c.l.b16 %v2161
        %v2236 = vunpack.c.l.b16 %v2162
        %v2237 = vunpack.c.l.b16 %v2163
        %v2238 = vunpack.c.l.b16 %v2164
        %v2239 = vunpack.c.l.b16 %v2165
        %v2240 = vunpack.c.l.b16 %v2166
        %v2241 = vunpack.c.l.b16 %v2167
        %v2242 = vunpack.c.l.b16 %v2168
        %v2243 = vunpack.c.l.b16 %v2169
        %v2244 = vunpack.c.l.b16 %v2170
        %v2245 = vunpack.c.l.b16 %v2171
        %v2246 = vunpack.c.l.b16 %v2172
        %v2247 = vunpack.c.l.b16 %v2173
        %v2248 = vunpack.c.l.b16 %v2174
        %v2249 = vunpack.c.l.b16 %v2175
        %v2250 = vunpack.c.l.b16 %v2176
        %v2251 = vunpack.c.l.b16 %v2177
        %v2252 = vunpack.c.l.b16 %v2178
        %v2253 = vunpack.c.l.b16 %v2179
        %v2254 = vunpack.c.l.b16 %v2180
        %v2255 = vpack.c.b16 %v2224, %v2223
        %v2256 = vpack.c.b16 %v2226, %v2225
        %v2257 = vpack.c.b16 %v2228, %v2227
        %v2258 = vpack.c.b16 %v2230, %v2229
        %v2259 = vpack.c.b16 %v2232, %v2231
        %v2260 = vpack.c.b16 %v2234, %v2233
        %v2261 = vpack.c.b16 %v2236, %v2235
        %v2262 = vpack.c.b16 %v2238, %v2237
        %v2263 = vpack.c.b16 %v2240, %v2239
        %v2264 = vpack.c.b16 %v2242, %v2241
        %v2265 = vpack.c.b16 %v2244, %v2243
        %v2266 = vpack.c.b16 %v2246, %v2245
        %v2267 = vpack.c.b16 %v2248, %v2247
        %v2268 = vpack.c.b16 %v2250, %v2249
        %v2269 = vpack.c.b16 %v2252, %v2251
        %v2270 = vpack.c.b16 %v2254, %v2253
        %2287 = vmatpush.bf16.msra.mxu0 %v2262
        %2288 = vmatpush.bf16.msra.mxu0 %v2261
        %2289 = vmatpush.bf16.msra.mxu0 %v2260
        %2290 = vmatpush.bf16.msra.mxu0 %v2259
        %2291 = vmatpush.bf16.msra.mxu0 %v2258
        %2292 = vmatpush.bf16.msra.mxu0 %v2257
        %2293 = vmatpush.bf16.msra.mxu0 %v2256
        %2294 = vmatpush.bf16.msra.mxu0 %v2255
        %2295 = vmatmul.bf16.gmra.mxu0 %v2187
        %v2296 = vpop.f32.mrf.mxu0
        %v2297 = vadd.f32 0.0, %v2296
        %v2298 = vpop.f32.mrf.mxu0
        %v2299 = vadd.f32 0.0, %v2298
        %2300 = vdwg.mxu0
        %2301 = vmatpush.bf16.msra.mxu0 %v2270
        %2302 = vmatpush.bf16.msra.mxu0 %v2269
        %2303 = vmatpush.bf16.msra.mxu0 %v2268
        %2304 = vmatpush.bf16.msra.mxu0 %v2267
        %2305 = vmatpush.bf16.msra.mxu0 %v2266
        %2306 = vmatpush.bf16.msra.mxu0 %v2265
        %2307 = vmatpush.bf16.msra.mxu0 %v2264
        %2308 = vmatpush.bf16.msra.mxu0 %v2263
        %2309 = vmatmul.bf16.gmra.mxu0 %v2188
        %v2310 = vpop.f32.mrf.mxu0
        %v2311 = vadd.f32 %v2297, %v2310
        %v2312 = vpop.f32.mrf.mxu0
        %v2313 = vadd.f32 %v2299, %v2312
        %2314 = vdwg.mxu0
        %v2315 = vadd.f32 %v2146, %v2311
        %v2316 = vadd.f32 %v2147, %v2313
        %s2317 = scalar_lea.vmem %s5, 896
        %v2318 = vld [vmem:[%s2317] sm:$0xf]
        %v2319 = vld [vmem:[%s2317 + $0x4] sm:$0xf]
        %v2320 = vld [vmem:[%s2317 + $0x8] sm:$0xf]
        %v2321 = vld [vmem:[%s2317 + $0xc] sm:$0xf]
        %v2322 = vld [vmem:[%s2317 + $0x10] sm:$0xf]
        %v2323 = vld [vmem:[%s2317 + $0x14] sm:$0xf]
        %v2324 = vld [vmem:[%s2317 + $0x18] sm:$0xf]
        %v2325 = vld [vmem:[%s2317 + $0x1c] sm:$0xf]
        %v2326 = vld [vmem:[%s2317 + $0x20] sm:$0xf]
        %v2327 = vld [vmem:[%s2317 + $0x24] sm:$0xf]
        %v2328 = vld [vmem:[%s2317 + $0x28] sm:$0xf]
        %v2329 = vld [vmem:[%s2317 + $0x2c] sm:$0xf]
        %v2330 = vld [vmem:[%s2317 + $0x30] sm:$0xf]
        %v2331 = vld [vmem:[%s2317 + $0x34] sm:$0xf]
        %v2332 = vld [vmem:[%s2317 + $0x38] sm:$0xf]
        %v2333 = vld [vmem:[%s2317 + $0x3c] sm:$0xf]
        %v2334 = vld [vmem:[%s2317 + $0x40] sm:$0xf]
        %v2335 = vld [vmem:[%s2317 + $0x44] sm:$0xf]
        %v2336 = vld [vmem:[%s2317 + $0x48] sm:$0xf]
        %v2337 = vld [vmem:[%s2317 + $0x4c] sm:$0xf]
        %v2338 = vld [vmem:[%s2317 + $0x50] sm:$0xf]
        %v2339 = vld [vmem:[%s2317 + $0x54] sm:$0xf]
        %v2340 = vld [vmem:[%s2317 + $0x58] sm:$0xf]
        %v2341 = vld [vmem:[%s2317 + $0x5c] sm:$0xf]
        %v2342 = vld [vmem:[%s2317 + $0x60] sm:$0xf]
        %v2343 = vld [vmem:[%s2317 + $0x64] sm:$0xf]
        %v2344 = vld [vmem:[%s2317 + $0x68] sm:$0xf]
        %v2345 = vld [vmem:[%s2317 + $0x6c] sm:$0xf]
        %v2346 = vld [vmem:[%s2317 + $0x70] sm:$0xf]
        %v2347 = vld [vmem:[%s2317 + $0x74] sm:$0xf]
        %v2348 = vld [vmem:[%s2317 + $0x78] sm:$0xf]
        %v2349 = vld [vmem:[%s2317 + $0x7c] sm:$0xf]
        %v2352 = vunpack.c.l.b16 %v1135
        %v2353 = vunpack.c.h.b16 %v1135
        %v2354 = vunpack.c.l.b16 %v1136
        %v2355 = vunpack.c.h.b16 %v1136
        %v2356 = vpack.c.b16 %v2354, %v2352
        %v2357 = vpack.c.b16 %v2355, %v2353
        %v2392 = vunpack.c.l.b16 %v2318
        %v2393 = vunpack.c.l.b16 %v2319
        %v2394 = vunpack.c.l.b16 %v2320
        %v2395 = vunpack.c.l.b16 %v2321
        %v2396 = vunpack.c.l.b16 %v2322
        %v2397 = vunpack.c.l.b16 %v2323
        %v2398 = vunpack.c.l.b16 %v2324
        %v2399 = vunpack.c.l.b16 %v2325
        %v2400 = vunpack.c.l.b16 %v2326
        %v2401 = vunpack.c.l.b16 %v2327
        %v2402 = vunpack.c.l.b16 %v2328
        %v2403 = vunpack.c.l.b16 %v2329
        %v2404 = vunpack.c.l.b16 %v2330
        %v2405 = vunpack.c.l.b16 %v2331
        %v2406 = vunpack.c.l.b16 %v2332
        %v2407 = vunpack.c.l.b16 %v2333
        %v2408 = vunpack.c.l.b16 %v2334
        %v2409 = vunpack.c.l.b16 %v2335
        %v2410 = vunpack.c.l.b16 %v2336
        %v2411 = vunpack.c.l.b16 %v2337
        %v2412 = vunpack.c.l.b16 %v2338
        %v2413 = vunpack.c.l.b16 %v2339
        %v2414 = vunpack.c.l.b16 %v2340
        %v2415 = vunpack.c.l.b16 %v2341
        %v2416 = vunpack.c.l.b16 %v2342
        %v2417 = vunpack.c.l.b16 %v2343
        %v2418 = vunpack.c.l.b16 %v2344
        %v2419 = vunpack.c.l.b16 %v2345
        %v2420 = vunpack.c.l.b16 %v2346
        %v2421 = vunpack.c.l.b16 %v2347
        %v2422 = vunpack.c.l.b16 %v2348
        %v2423 = vunpack.c.l.b16 %v2349
        %v2424 = vpack.c.b16 %v2393, %v2392
        %v2425 = vpack.c.b16 %v2395, %v2394
        %v2426 = vpack.c.b16 %v2397, %v2396
        %v2427 = vpack.c.b16 %v2399, %v2398
        %v2428 = vpack.c.b16 %v2401, %v2400
        %v2429 = vpack.c.b16 %v2403, %v2402
        %v2430 = vpack.c.b16 %v2405, %v2404
        %v2431 = vpack.c.b16 %v2407, %v2406
        %v2432 = vpack.c.b16 %v2409, %v2408
        %v2433 = vpack.c.b16 %v2411, %v2410
        %v2434 = vpack.c.b16 %v2413, %v2412
        %v2435 = vpack.c.b16 %v2415, %v2414
        %v2436 = vpack.c.b16 %v2417, %v2416
        %v2437 = vpack.c.b16 %v2419, %v2418
        %v2438 = vpack.c.b16 %v2421, %v2420
        %v2439 = vpack.c.b16 %v2423, %v2422
        %2456 = vmatpush.bf16.msra.mxu0 %v2431
        %2457 = vmatpush.bf16.msra.mxu0 %v2430
        %2458 = vmatpush.bf16.msra.mxu0 %v2429
        %2459 = vmatpush.bf16.msra.mxu0 %v2428
        %2460 = vmatpush.bf16.msra.mxu0 %v2427
        %2461 = vmatpush.bf16.msra.mxu0 %v2426
        %2462 = vmatpush.bf16.msra.mxu0 %v2425
        %2463 = vmatpush.bf16.msra.mxu0 %v2424
        %2464 = vmatmul.bf16.gmra.mxu0 %v2356
        %v2465 = vpop.f32.mrf.mxu0
        %v2466 = vadd.f32 0.0, %v2465
        %v2467 = vpop.f32.mrf.mxu0
        %v2468 = vadd.f32 0.0, %v2467
        %2469 = vdwg.mxu0
        %2470 = vmatpush.bf16.msra.mxu0 %v2439
        %2471 = vmatpush.bf16.msra.mxu0 %v2438
        %2472 = vmatpush.bf16.msra.mxu0 %v2437
        %2473 = vmatpush.bf16.msra.mxu0 %v2436
        %2474 = vmatpush.bf16.msra.mxu0 %v2435
        %2475 = vmatpush.bf16.msra.mxu0 %v2434
        %2476 = vmatpush.bf16.msra.mxu0 %v2433
        %2477 = vmatpush.bf16.msra.mxu0 %v2432
        %2478 = vmatmul.bf16.gmra.mxu0 %v2357
        %v2479 = vpop.f32.mrf.mxu0
        %v2480 = vadd.f32 %v2466, %v2479
        %v2481 = vpop.f32.mrf.mxu0
        %v2482 = vadd.f32 %v2468, %v2481
        %2483 = vdwg.mxu0
        %v2484 = vadd.f32 %v2315, %v2480
        %v2485 = vadd.f32 %v2316, %v2482
        %s2486 = scalar_lea.vmem %s5, 1024
        %v2487 = vld [vmem:[%s2486] sm:$0xf]
        %v2488 = vld [vmem:[%s2486 + $0x4] sm:$0xf]
        %v2489 = vld [vmem:[%s2486 + $0x8] sm:$0xf]
        %v2490 = vld [vmem:[%s2486 + $0xc] sm:$0xf]
        %v2491 = vld [vmem:[%s2486 + $0x10] sm:$0xf]
        %v2492 = vld [vmem:[%s2486 + $0x14] sm:$0xf]
        %v2493 = vld [vmem:[%s2486 + $0x18] sm:$0xf]
        %v2494 = vld [vmem:[%s2486 + $0x1c] sm:$0xf]
        %v2495 = vld [vmem:[%s2486 + $0x20] sm:$0xf]
        %v2496 = vld [vmem:[%s2486 + $0x24] sm:$0xf]
        %v2497 = vld [vmem:[%s2486 + $0x28] sm:$0xf]
        %v2498 = vld [vmem:[%s2486 + $0x2c] sm:$0xf]
        %v2499 = vld [vmem:[%s2486 + $0x30] sm:$0xf]
        %v2500 = vld [vmem:[%s2486 + $0x34] sm:$0xf]
        %v2501 = vld [vmem:[%s2486 + $0x38] sm:$0xf]
        %v2502 = vld [vmem:[%s2486 + $0x3c] sm:$0xf]
        %v2503 = vld [vmem:[%s2486 + $0x40] sm:$0xf]
        %v2504 = vld [vmem:[%s2486 + $0x44] sm:$0xf]
        %v2505 = vld [vmem:[%s2486 + $0x48] sm:$0xf]
        %v2506 = vld [vmem:[%s2486 + $0x4c] sm:$0xf]
        %v2507 = vld [vmem:[%s2486 + $0x50] sm:$0xf]
        %v2508 = vld [vmem:[%s2486 + $0x54] sm:$0xf]
        %v2509 = vld [vmem:[%s2486 + $0x58] sm:$0xf]
        %v2510 = vld [vmem:[%s2486 + $0x5c] sm:$0xf]
        %v2511 = vld [vmem:[%s2486 + $0x60] sm:$0xf]
        %v2512 = vld [vmem:[%s2486 + $0x64] sm:$0xf]
        %v2513 = vld [vmem:[%s2486 + $0x68] sm:$0xf]
        %v2514 = vld [vmem:[%s2486 + $0x6c] sm:$0xf]
        %v2515 = vld [vmem:[%s2486 + $0x70] sm:$0xf]
        %v2516 = vld [vmem:[%s2486 + $0x74] sm:$0xf]
        %v2517 = vld [vmem:[%s2486 + $0x78] sm:$0xf]
        %v2518 = vld [vmem:[%s2486 + $0x7c] sm:$0xf]
        %v2521 = vunpack.c.l.b16 %v1137
        %v2522 = vunpack.c.h.b16 %v1137
        %v2523 = vunpack.c.l.b16 %v1138
        %v2524 = vunpack.c.h.b16 %v1138
        %v2525 = vpack.c.b16 %v2523, %v2521
        %v2526 = vpack.c.b16 %v2524, %v2522
        %v2561 = vunpack.c.l.b16 %v2487
        %v2562 = vunpack.c.l.b16 %v2488
        %v2563 = vunpack.c.l.b16 %v2489
        %v2564 = vunpack.c.l.b16 %v2490
        %v2565 = vunpack.c.l.b16 %v2491
        %v2566 = vunpack.c.l.b16 %v2492
        %v2567 = vunpack.c.l.b16 %v2493
        %v2568 = vunpack.c.l.b16 %v2494
        %v2569 = vunpack.c.l.b16 %v2495
        %v2570 = vunpack.c.l.b16 %v2496
        %v2571 = vunpack.c.l.b16 %v2497
        %v2572 = vunpack.c.l.b16 %v2498
        %v2573 = vunpack.c.l.b16 %v2499
        %v2574 = vunpack.c.l.b16 %v2500
        %v2575 = vunpack.c.l.b16 %v2501
        %v2576 = vunpack.c.l.b16 %v2502
        %v2577 = vunpack.c.l.b16 %v2503
        %v2578 = vunpack.c.l.b16 %v2504
        %v2579 = vunpack.c.l.b16 %v2505
        %v2580 = vunpack.c.l.b16 %v2506
        %v2581 = vunpack.c.l.b16 %v2507
        %v2582 = vunpack.c.l.b16 %v2508
        %v2583 = vunpack.c.l.b16 %v2509
        %v2584 = vunpack.c.l.b16 %v2510
        %v2585 = vunpack.c.l.b16 %v2511
        %v2586 = vunpack.c.l.b16 %v2512
        %v2587 = vunpack.c.l.b16 %v2513
        %v2588 = vunpack.c.l.b16 %v2514
        %v2589 = vunpack.c.l.b16 %v2515
        %v2590 = vunpack.c.l.b16 %v2516
        %v2591 = vunpack.c.l.b16 %v2517
        %v2592 = vunpack.c.l.b16 %v2518
        %v2593 = vpack.c.b16 %v2562, %v2561
        %v2594 = vpack.c.b16 %v2564, %v2563
        %v2595 = vpack.c.b16 %v2566, %v2565
        %v2596 = vpack.c.b16 %v2568, %v2567
        %v2597 = vpack.c.b16 %v2570, %v2569
        %v2598 = vpack.c.b16 %v2572, %v2571
        %v2599 = vpack.c.b16 %v2574, %v2573
        %v2600 = vpack.c.b16 %v2576, %v2575
        %v2601 = vpack.c.b16 %v2578, %v2577
        %v2602 = vpack.c.b16 %v2580, %v2579
        %v2603 = vpack.c.b16 %v2582, %v2581
        %v2604 = vpack.c.b16 %v2584, %v2583
        %v2605 = vpack.c.b16 %v2586, %v2585
        %v2606 = vpack.c.b16 %v2588, %v2587
        %v2607 = vpack.c.b16 %v2590, %v2589
        %v2608 = vpack.c.b16 %v2592, %v2591
        %2625 = vmatpush.bf16.msra.mxu0 %v2600
        %2626 = vmatpush.bf16.msra.mxu0 %v2599
        %2627 = vmatpush.bf16.msra.mxu0 %v2598
        %2628 = vmatpush.bf16.msra.mxu0 %v2597
        %2629 = vmatpush.bf16.msra.mxu0 %v2596
        %2630 = vmatpush.bf16.msra.mxu0 %v2595
        %2631 = vmatpush.bf16.msra.mxu0 %v2594
        %2632 = vmatpush.bf16.msra.mxu0 %v2593
        %2633 = vmatmul.bf16.gmra.mxu0 %v2525
        %v2634 = vpop.f32.mrf.mxu0
        %v2635 = vadd.f32 0.0, %v2634
        %v2636 = vpop.f32.mrf.mxu0
        %v2637 = vadd.f32 0.0, %v2636
        %2638 = vdwg.mxu0
        %2639 = vmatpush.bf16.msra.mxu0 %v2608
        %2640 = vmatpush.bf16.msra.mxu0 %v2607
        %2641 = vmatpush.bf16.msra.mxu0 %v2606
        %2642 = vmatpush.bf16.msra.mxu0 %v2605
        %2643 = vmatpush.bf16.msra.mxu0 %v2604
        %2644 = vmatpush.bf16.msra.mxu0 %v2603
        %2645 = vmatpush.bf16.msra.mxu0 %v2602
        %2646 = vmatpush.bf16.msra.mxu0 %v2601
        %2647 = vmatmul.bf16.gmra.mxu0 %v2526
        %v2648 = vpop.f32.mrf.mxu0
        %v2649 = vadd.f32 %v2635, %v2648
        %v2650 = vpop.f32.mrf.mxu0
        %v2651 = vadd.f32 %v2637, %v2650
        %2652 = vdwg.mxu0
        %v2653 = vadd.f32 %v2484, %v2649
        %v2654 = vadd.f32 %v2485, %v2651
        %v2655 = vld [vmem:[%s4] sm:$0xff]
        %v2656 = vld [vmem:[%s4 + $0x8] sm:$0xff]
        %2658 = vset.pattern.permute.xlu0 0
        %2659 = vperm.xlu0 %2658, %v2655
        %v2660 = vpop.permute.xlu0 %2659
        %2663 = vset.pattern.permute.xlu0 0
        %2664 = vperm.xlu0 %2663, %v2656
        %v2665 = vpop.permute.xlu0 %2664
        %v2667 = vadd.f32 %v2653, %v2660
        %v2668 = vadd.f32 %v2654, %v2665
        %v2669 = vmax.f32 %v2667, 0.0
        %v2670 = vmax.f32 %v2668, 0.0
        %v2671 = vld [vmem:[%s6] sm:$0xf]
        %v2672 = vld [vmem:[%s6 + $0x4] sm:$0xf]
        %v2673 = vld [vmem:[%s6 + $0x8] sm:$0xf]
        %v2674 = vld [vmem:[%s6 + $0xc] sm:$0xf]
        %v2675 = vld [vmem:[%s6 + $0x10] sm:$0xf]
        %v2676 = vld [vmem:[%s6 + $0x14] sm:$0xf]
        %v2677 = vld [vmem:[%s6 + $0x18] sm:$0xf]
        %v2678 = vld [vmem:[%s6 + $0x1c] sm:$0xf]
        %v2679 = vld [vmem:[%s6 + $0x20] sm:$0xf]
        %v2680 = vld [vmem:[%s6 + $0x24] sm:$0xf]
        %v2681 = vld [vmem:[%s6 + $0x28] sm:$0xf]
        %v2682 = vld [vmem:[%s6 + $0x2c] sm:$0xf]
        %v2683 = vld [vmem:[%s6 + $0x30] sm:$0xf]
        %v2684 = vld [vmem:[%s6 + $0x34] sm:$0xf]
        %v2685 = vld [vmem:[%s6 + $0x38] sm:$0xf]
        %v2686 = vld [vmem:[%s6 + $0x3c] sm:$0xf]
        %v2687 = vld [vmem:[%s6 + $0x40] sm:$0xf]
        %v2688 = vld [vmem:[%s6 + $0x44] sm:$0xf]
        %v2689 = vld [vmem:[%s6 + $0x48] sm:$0xf]
        %v2690 = vld [vmem:[%s6 + $0x4c] sm:$0xf]
        %v2691 = vld [vmem:[%s6 + $0x50] sm:$0xf]
        %v2692 = vld [vmem:[%s6 + $0x54] sm:$0xf]
        %v2693 = vld [vmem:[%s6 + $0x58] sm:$0xf]
        %v2694 = vld [vmem:[%s6 + $0x5c] sm:$0xf]
        %v2695 = vld [vmem:[%s6 + $0x60] sm:$0xf]
        %v2696 = vld [vmem:[%s6 + $0x64] sm:$0xf]
        %v2697 = vld [vmem:[%s6 + $0x68] sm:$0xf]
        %v2698 = vld [vmem:[%s6 + $0x6c] sm:$0xf]
        %v2699 = vld [vmem:[%s6 + $0x70] sm:$0xf]
        %v2700 = vld [vmem:[%s6 + $0x74] sm:$0xf]
        %v2701 = vld [vmem:[%s6 + $0x78] sm:$0xf]
        %v2702 = vld [vmem:[%s6 + $0x7c] sm:$0xf]
        %v2703 = vld [vmem:[%s6 + $0x80] sm:$0xf]
        %v2704 = vld [vmem:[%s6 + $0x84] sm:$0xf]
        %v2705 = vld [vmem:[%s6 + $0x88] sm:$0xf]
        %v2706 = vld [vmem:[%s6 + $0x8c] sm:$0xf]
        %v2707 = vpack.c.bf16 %v2670, %v2669
        %v2744 = vunpack.c.l.b16 %v2671
        %v2745 = vunpack.c.l.b16 %v2672
        %v2746 = vunpack.c.l.b16 %v2673
        %v2747 = vunpack.c.l.b16 %v2674
        %v2748 = vunpack.c.l.b16 %v2675
        %v2749 = vunpack.c.l.b16 %v2676
        %v2750 = vunpack.c.l.b16 %v2677
        %v2751 = vunpack.c.l.b16 %v2678
        %v2752 = vunpack.c.l.b16 %v2679
        %v2753 = vunpack.c.l.b16 %v2680
        %v2754 = vunpack.c.l.b16 %v2681
        %v2755 = vunpack.c.l.b16 %v2682
        %v2756 = vunpack.c.l.b16 %v2683
        %v2757 = vunpack.c.l.b16 %v2684
        %v2758 = vunpack.c.l.b16 %v2685
        %v2759 = vunpack.c.l.b16 %v2686
        %v2760 = vunpack.c.l.b16 %v2687
        %v2761 = vunpack.c.l.b16 %v2688
        %v2762 = vunpack.c.l.b16 %v2689
        %v2763 = vunpack.c.l.b16 %v2690
        %v2764 = vunpack.c.l.b16 %v2691
        %v2765 = vunpack.c.l.b16 %v2692
        %v2766 = vunpack.c.l.b16 %v2693
        %v2767 = vunpack.c.l.b16 %v2694
        %v2768 = vunpack.c.l.b16 %v2695
        %v2769 = vunpack.c.l.b16 %v2696
        %v2770 = vunpack.c.l.b16 %v2697
        %v2771 = vunpack.c.l.b16 %v2698
        %v2772 = vunpack.c.l.b16 %v2699
        %v2773 = vunpack.c.l.b16 %v2700
        %v2774 = vunpack.c.l.b16 %v2701
        %v2775 = vunpack.c.l.b16 %v2702
        %v2776 = vunpack.c.l.b16 %v2703
        %v2777 = vunpack.c.l.b16 %v2704
        %v2778 = vunpack.c.l.b16 %v2705
        %v2779 = vunpack.c.l.b16 %v2706
        %v2780 = vpack.c.b16 %v2745, %v2744
        %v2781 = vpack.c.b16 %v2747, %v2746
        %v2782 = vpack.c.b16 %v2749, %v2748
        %v2783 = vpack.c.b16 %v2751, %v2750
        %v2784 = vpack.c.b16 %v2753, %v2752
        %v2785 = vpack.c.b16 %v2755, %v2754
        %v2786 = vpack.c.b16 %v2757, %v2756
        %v2787 = vpack.c.b16 %v2759, %v2758
        %v2788 = vpack.c.b16 %v2761, %v2760
        %v2789 = vpack.c.b16 %v2763, %v2762
        %v2790 = vpack.c.b16 %v2765, %v2764
        %v2791 = vpack.c.b16 %v2767, %v2766
        %v2792 = vpack.c.b16 %v2769, %v2768
        %v2793 = vpack.c.b16 %v2771, %v2770
        %v2794 = vpack.c.b16 %v2773, %v2772
        %v2795 = vpack.c.b16 %v2775, %v2774
        %v2796 = vpack.c.b16 %v2777, %v2776
        %v2797 = vpack.c.b16 %v2779, %v2778
        %vm2798 = vcmask 130048
        %v2800 = vsel %vm2798, %v2780, 0
        %v2803 = vsel %vm2798, %v2781, 0
        %v2806 = vsel %vm2798, %v2782, 0
        %v2809 = vsel %vm2798, %v2783, 0
        %v2812 = vsel %vm2798, %v2784, 0
        %v2815 = vsel %vm2798, %v2785, 0
        %v2818 = vsel %vm2798, %v2786, 0
        %v2821 = vsel %vm2798, %v2787, 0
        %v2824 = vsel %vm2798, %v2788, 0
        %v2827 = vsel %vm2798, %v2789, 0
        %v2830 = vsel %vm2798, %v2790, 0
        %v2833 = vsel %vm2798, %v2791, 0
        %v2836 = vsel %vm2798, %v2792, 0
        %v2839 = vsel %vm2798, %v2793, 0
        %v2842 = vsel %vm2798, %v2794, 0
        %v2845 = vsel %vm2798, %v2795, 0
        %v2848 = vsel %vm2798, %v2796, 0
        %v2851 = vsel %vm2798, %v2797, 0
        %2853 = vmatpush.bf16.msra.mxu0 0
        %2854 = vmatpush.bf16.msra.mxu0 0
        %2855 = vmatpush.bf16.msra.mxu0 0
        %2856 = vmatpush.bf16.msra.mxu0 0
        %2857 = vmatpush.bf16.msra.mxu0 0
        %2858 = vmatpush.bf16.msra.mxu0 0
        %2859 = vmatpush.bf16.msra.mxu0 0
        %2860 = vmatpush.bf16.msra.mxu0 %v2707
        %2861 = vmatmul.bf16.gmra.mxu0 %v2800
        %v2862 = vpop.f32.mrf.mxu0
        %v2863 = vadd.f32 0.0, %v2862
        %v2864 = vpop.f32.mrf.mxu0
        %v2865 = vadd.f32 0.0, %v2864
        %2866 = vmatmul.bf16.gmra.mxu0 %v2803
        %v2867 = vpop.f32.mrf.mxu0
        %v2868 = vadd.f32 0.0, %v2867
        %v2869 = vpop.f32.mrf.mxu0
        %v2870 = vadd.f32 0.0, %v2869
        %2871 = vmatmul.bf16.gmra.mxu0 %v2806
        %v2872 = vpop.f32.mrf.mxu0
        %v2873 = vadd.f32 0.0, %v2872
        %v2874 = vpop.f32.mrf.mxu0
        %v2875 = vadd.f32 0.0, %v2874
        %2876 = vmatmul.bf16.gmra.mxu0 %v2809
        %v2877 = vpop.f32.mrf.mxu0
        %v2878 = vadd.f32 0.0, %v2877
        %v2879 = vpop.f32.mrf.mxu0
        %v2880 = vadd.f32 0.0, %v2879
        %2881 = vmatmul.bf16.gmra.mxu0 %v2812
        %v2882 = vpop.f32.mrf.mxu0
        %v2883 = vadd.f32 0.0, %v2882
        %v2884 = vpop.f32.mrf.mxu0
        %v2885 = vadd.f32 0.0, %v2884
        %2886 = vmatmul.bf16.gmra.mxu0 %v2815
        %v2887 = vpop.f32.mrf.mxu0
        %v2888 = vadd.f32 0.0, %v2887
        %v2889 = vpop.f32.mrf.mxu0
        %v2890 = vadd.f32 0.0, %v2889
        %2891 = vmatmul.bf16.gmra.mxu0 %v2818
        %v2892 = vpop.f32.mrf.mxu0
        %v2893 = vadd.f32 0.0, %v2892
        %v2894 = vpop.f32.mrf.mxu0
        %v2895 = vadd.f32 0.0, %v2894
        %2896 = vmatmul.bf16.gmra.mxu0 %v2821
        %v2897 = vpop.f32.mrf.mxu0
        %v2898 = vadd.f32 0.0, %v2897
        %v2899 = vpop.f32.mrf.mxu0
        %v2900 = vadd.f32 0.0, %v2899
        %2901 = vmatmul.bf16.gmra.mxu0 %v2824
        %v2902 = vpop.f32.mrf.mxu0
        %v2903 = vadd.f32 0.0, %v2902
        %v2904 = vpop.f32.mrf.mxu0
        %v2905 = vadd.f32 0.0, %v2904
        %2906 = vmatmul.bf16.gmra.mxu0 %v2827
        %v2907 = vpop.f32.mrf.mxu0
        %v2908 = vadd.f32 0.0, %v2907
        %v2909 = vpop.f32.mrf.mxu0
        %v2910 = vadd.f32 0.0, %v2909
        %2911 = vmatmul.bf16.gmra.mxu0 %v2830
        %v2912 = vpop.f32.mrf.mxu0
        %v2913 = vadd.f32 0.0, %v2912
        %v2914 = vpop.f32.mrf.mxu0
        %v2915 = vadd.f32 0.0, %v2914
        %2916 = vmatmul.bf16.gmra.mxu0 %v2833
        %v2917 = vpop.f32.mrf.mxu0
        %v2918 = vadd.f32 0.0, %v2917
        %v2919 = vpop.f32.mrf.mxu0
        %v2920 = vadd.f32 0.0, %v2919
        %2921 = vmatmul.bf16.gmra.mxu0 %v2836
        %v2922 = vpop.f32.mrf.mxu0
        %v2923 = vadd.f32 0.0, %v2922
        %v2924 = vpop.f32.mrf.mxu0
        %v2925 = vadd.f32 0.0, %v2924
        %2926 = vmatmul.bf16.gmra.mxu0 %v2839
        %v2927 = vpop.f32.mrf.mxu0
        %v2928 = vadd.f32 0.0, %v2927
        %v2929 = vpop.f32.mrf.mxu0
        %v2930 = vadd.f32 0.0, %v2929
        %2931 = vmatmul.bf16.gmra.mxu0 %v2842
        %v2932 = vpop.f32.mrf.mxu0
        %v2933 = vadd.f32 0.0, %v2932
        %v2934 = vpop.f32.mrf.mxu0
        %v2935 = vadd.f32 0.0, %v2934
        %2936 = vmatmul.bf16.gmra.mxu0 %v2845
        %v2937 = vpop.f32.mrf.mxu0
        %v2938 = vadd.f32 0.0, %v2937
        %v2939 = vpop.f32.mrf.mxu0
        %v2940 = vadd.f32 0.0, %v2939
        %2941 = vmatmul.bf16.gmra.mxu0 %v2848
        %v2942 = vpop.f32.mrf.mxu0
        %v2943 = vadd.f32 0.0, %v2942
        %v2944 = vpop.f32.mrf.mxu0
        %v2945 = vadd.f32 0.0, %v2944
        %2946 = vmatmul.bf16.gmra.mxu0 %v2851
        %v2947 = vpop.f32.mrf.mxu0
        %v2948 = vadd.f32 0.0, %v2947
        %v2949 = vpop.f32.mrf.mxu0
        %v2950 = vadd.f32 0.0, %v2949
        %2951 = vdwg.mxu0
        %v2952 = vpack.c.bf16 %v2863, %v2863
        %v2953 = vpack.c.bf16 %v2865, %v2865
        %v2954 = vpack.c.bf16 %v2868, %v2868
        %v2955 = vpack.c.bf16 %v2870, %v2870
        %v2956 = vpack.c.bf16 %v2873, %v2873
        %v2957 = vpack.c.bf16 %v2875, %v2875
        %v2958 = vpack.c.bf16 %v2878, %v2878
        %v2959 = vpack.c.bf16 %v2880, %v2880
        %v2960 = vpack.c.bf16 %v2883, %v2883
        %v2961 = vpack.c.bf16 %v2885, %v2885
        %v2962 = vpack.c.bf16 %v2888, %v2888
        %v2963 = vpack.c.bf16 %v2890, %v2890
        %v2964 = vpack.c.bf16 %v2893, %v2893
        %v2965 = vpack.c.bf16 %v2895, %v2895
        %v2966 = vpack.c.bf16 %v2898, %v2898
        %v2967 = vpack.c.bf16 %v2900, %v2900
        %v2968 = vpack.c.bf16 %v2903, %v2903
        %v2969 = vpack.c.bf16 %v2905, %v2905
        %v2970 = vpack.c.bf16 %v2908, %v2908
        %v2971 = vpack.c.bf16 %v2910, %v2910
        %v2972 = vpack.c.bf16 %v2913, %v2913
        %v2973 = vpack.c.bf16 %v2915, %v2915
        %v2974 = vpack.c.bf16 %v2918, %v2918
        %v2975 = vpack.c.bf16 %v2920, %v2920
        %v2976 = vpack.c.bf16 %v2923, %v2923
        %v2977 = vpack.c.bf16 %v2925, %v2925
        %v2978 = vpack.c.bf16 %v2928, %v2928
        %v2979 = vpack.c.bf16 %v2930, %v2930
        %v2980 = vpack.c.bf16 %v2933, %v2933
        %v2981 = vpack.c.bf16 %v2935, %v2935
        %v2982 = vpack.c.bf16 %v2938, %v2938
        %v2983 = vpack.c.bf16 %v2940, %v2940
        %v2984 = vpack.c.bf16 %v2943, %v2943
        %v2985 = vpack.c.bf16 %v2945, %v2945
        %v2986 = vpack.c.bf16 %v2948, %v2948
        %v2987 = vpack.c.bf16 %v2950, %v2950
        %v2988 = vld [vmem:[%s8] sm:$0xf]
        %v2989 = vld [vmem:[%s8 + $0x4] sm:$0xf]
        %v2990 = vld [vmem:[%s8 + $0x8] sm:$0xf]
        %v2991 = vld [vmem:[%s8 + $0xc] sm:$0xf]
        %v2992 = vld [vmem:[%s8 + $0x10] sm:$0xf]
        %v2993 = vld [vmem:[%s8 + $0x14] sm:$0xf]
        %v2994 = vld [vmem:[%s8 + $0x18] sm:$0xf]
        %v2995 = vld [vmem:[%s8 + $0x1c] sm:$0xf]
        %s2996 = scalar_lea.vmem %s8, 32
        %v2997 = vld [vmem:[%s2996] sm:$0xf]
        %v2998 = vld [vmem:[%s2996 + $0x4] sm:$0xf]
        %v2999 = vld [vmem:[%s2996 + $0x8] sm:$0xf]
        %v3000 = vld [vmem:[%s2996 + $0xc] sm:$0xf]
        %v3001 = vld [vmem:[%s2996 + $0x10] sm:$0xf]
        %v3002 = vld [vmem:[%s2996 + $0x14] sm:$0xf]
        %v3003 = vld [vmem:[%s2996 + $0x18] sm:$0xf]
        %v3004 = vld [vmem:[%s2996 + $0x1c] sm:$0xf]
        %v3009 = vunpack.c.l.b16 %v2956
        %v3010 = vunpack.c.l.b16 %v2957
        %v3011 = vunpack.c.l.b16 %v2958
        %v3012 = vunpack.c.l.b16 %v2959
        %v3013 = vpack.c.b16 %v3010, %v3009
        %v3014 = vpack.c.b16 %v3012, %v3011
        %v3023 = vunpack.c.l.b16 %v2997
        %v3024 = vunpack.c.l.b16 %v2998
        %v3025 = vunpack.c.l.b16 %v2999
        %v3026 = vunpack.c.l.b16 %v3000
        %v3027 = vunpack.c.l.b16 %v3001
        %v3028 = vunpack.c.l.b16 %v3002
        %v3029 = vunpack.c.l.b16 %v3003
        %v3030 = vunpack.c.l.b16 %v3004
        %v3031 = vpack.c.b16 %v3024, %v3023
        %v3032 = vpack.c.b16 %v3026, %v3025
        %v3033 = vpack.c.b16 %v3028, %v3027
        %v3034 = vpack.c.b16 %v3030, %v3029
        %vm3039 = vcmask 523264
        %v3041 = vsel %vm3039, %v3013, 0
        %v3044 = vsel %vm3039, %v3014, 0
        %3046 = vmatpush.bf16.msra.mxu0 0
        %3047 = vmatpush.bf16.msra.mxu0 0
        %3048 = vmatpush.bf16.msra.mxu0 0
        %3049 = vmatpush.bf16.msra.mxu0 0
        %3050 = vmatpush.bf16.msra.mxu0 %v3034
        %3051 = vmatpush.bf16.msra.mxu0 %v3033
        %3052 = vmatpush.bf16.msra.mxu0 %v3032
        %3053 = vmatpush.bf16.msra.mxu0 %v3031
        %3054 = vmatmul.bf16.gmra.mxu0 %v3041
        %v3055 = vpop.f32.mrf.mxu0
        %v3056 = vadd.f32 0.0, %v3055
        %v3057 = vpop.f32.mrf.mxu0
        %v3058 = vadd.f32 0.0, %v3057
        %3059 = vmatmul.bf16.gmra.mxu0 %v3044
        %v3060 = vpop.f32.mrf.mxu0
        %v3061 = vadd.f32 0.0, %v3060
        %v3062 = vpop.f32.mrf.mxu0
        %v3063 = vadd.f32 0.0, %v3062
        %3064 = vdwg.mxu0
        %v3069 = vunpack.c.l.b16 %v2952
        %v3070 = vunpack.c.l.b16 %v2953
        %v3071 = vunpack.c.l.b16 %v2954
        %v3072 = vunpack.c.l.b16 %v2955
        %v3073 = vpack.c.b16 %v3070, %v3069
        %v3074 = vpack.c.b16 %v3072, %v3071
        %v3083 = vunpack.c.l.b16 %v2988
        %v3084 = vunpack.c.l.b16 %v2989
        %v3085 = vunpack.c.l.b16 %v2990
        %v3086 = vunpack.c.l.b16 %v2991
        %v3087 = vunpack.c.l.b16 %v2992
        %v3088 = vunpack.c.l.b16 %v2993
        %v3089 = vunpack.c.l.b16 %v2994
        %v3090 = vunpack.c.l.b16 %v2995
        %v3091 = vpack.c.b16 %v3084, %v3083
        %v3092 = vpack.c.b16 %v3086, %v3085
        %v3093 = vpack.c.b16 %v3088, %v3087
        %v3094 = vpack.c.b16 %v3090, %v3089
        %v3100 = vsel %vm3039, %v3073, 0
        %v3103 = vsel %vm3039, %v3074, 0
        %3105 = vmatpush.bf16.msra.mxu0 0
        %3106 = vmatpush.bf16.msra.mxu0 0
        %3107 = vmatpush.bf16.msra.mxu0 0
        %3108 = vmatpush.bf16.msra.mxu0 0
        %3109 = vmatpush.bf16.msra.mxu0 %v3094
        %3110 = vmatpush.bf16.msra.mxu0 %v3093
        %3111 = vmatpush.bf16.msra.mxu0 %v3092
        %3112 = vmatpush.bf16.msra.mxu0 %v3091
        %3113 = vmatmul.bf16.gmra.mxu0 %v3100
        %v3114 = vpop.f32.mrf.mxu0
        %v3115 = vadd.f32 %v3056, %v3114
        %v3116 = vpop.f32.mrf.mxu0
        %v3117 = vadd.f32 %v3058, %v3116
        %3118 = vmatmul.bf16.gmra.mxu0 %v3103
        %v3119 = vpop.f32.mrf.mxu0
        %v3120 = vadd.f32 %v3061, %v3119
        %v3121 = vpop.f32.mrf.mxu0
        %v3122 = vadd.f32 %v3063, %v3121
        %3123 = vdwg.mxu0
        %s3124 = scalar_lea.vmem %s8, 64
        %v3125 = vld [vmem:[%s3124] sm:$0xf]
        %v3126 = vld [vmem:[%s3124 + $0x4] sm:$0xf]
        %v3127 = vld [vmem:[%s3124 + $0x8] sm:$0xf]
        %v3128 = vld [vmem:[%s3124 + $0xc] sm:$0xf]
        %v3129 = vld [vmem:[%s3124 + $0x10] sm:$0xf]
        %v3130 = vld [vmem:[%s3124 + $0x14] sm:$0xf]
        %v3131 = vld [vmem:[%s3124 + $0x18] sm:$0xf]
        %v3132 = vld [vmem:[%s3124 + $0x1c] sm:$0xf]
        %v3137 = vunpack.c.l.b16 %v2960
        %v3138 = vunpack.c.l.b16 %v2961
        %v3139 = vunpack.c.l.b16 %v2962
        %v3140 = vunpack.c.l.b16 %v2963
        %v3141 = vpack.c.b16 %v3138, %v3137
        %v3142 = vpack.c.b16 %v3140, %v3139
        %v3151 = vunpack.c.l.b16 %v3125
        %v3152 = vunpack.c.l.b16 %v3126
        %v3153 = vunpack.c.l.b16 %v3127
        %v3154 = vunpack.c.l.b16 %v3128
        %v3155 = vunpack.c.l.b16 %v3129
        %v3156 = vunpack.c.l.b16 %v3130
        %v3157 = vunpack.c.l.b16 %v3131
        %v3158 = vunpack.c.l.b16 %v3132
        %v3159 = vpack.c.b16 %v3152, %v3151
        %v3160 = vpack.c.b16 %v3154, %v3153
        %v3161 = vpack.c.b16 %v3156, %v3155
        %v3162 = vpack.c.b16 %v3158, %v3157
        %v3168 = vsel %vm3039, %v3141, 0
        %v3171 = vsel %vm3039, %v3142, 0
        %3173 = vmatpush.bf16.msra.mxu0 0
        %3174 = vmatpush.bf16.msra.mxu0 0
        %3175 = vmatpush.bf16.msra.mxu0 0
        %3176 = vmatpush.bf16.msra.mxu0 0
        %3177 = vmatpush.bf16.msra.mxu0 %v3162
        %3178 = vmatpush.bf16.msra.mxu0 %v3161
        %3179 = vmatpush.bf16.msra.mxu0 %v3160
        %3180 = vmatpush.bf16.msra.mxu0 %v3159
        %3181 = vmatmul.bf16.gmra.mxu0 %v3168
        %v3182 = vpop.f32.mrf.mxu0
        %v3183 = vadd.f32 0.0, %v3182
        %v3184 = vpop.f32.mrf.mxu0
        %v3185 = vadd.f32 0.0, %v3184
        %3186 = vmatmul.bf16.gmra.mxu0 %v3171
        %v3187 = vpop.f32.mrf.mxu0
        %v3188 = vadd.f32 0.0, %v3187
        %v3189 = vpop.f32.mrf.mxu0
        %v3190 = vadd.f32 0.0, %v3189
        %3191 = vdwg.mxu0
        %v3192 = vadd.f32 %v3115, %v3183
        %v3193 = vadd.f32 %v3117, %v3185
        %v3194 = vadd.f32 %v3120, %v3188
        %v3195 = vadd.f32 %v3122, %v3190
        %s3196 = scalar_lea.vmem %s8, 96
        %v3197 = vld [vmem:[%s3196] sm:$0xf]
        %v3198 = vld [vmem:[%s3196 + $0x4] sm:$0xf]
        %v3199 = vld [vmem:[%s3196 + $0x8] sm:$0xf]
        %v3200 = vld [vmem:[%s3196 + $0xc] sm:$0xf]
        %v3201 = vld [vmem:[%s3196 + $0x10] sm:$0xf]
        %v3202 = vld [vmem:[%s3196 + $0x14] sm:$0xf]
        %v3203 = vld [vmem:[%s3196 + $0x18] sm:$0xf]
        %v3204 = vld [vmem:[%s3196 + $0x1c] sm:$0xf]
        %v3209 = vunpack.c.l.b16 %v2964
        %v3210 = vunpack.c.l.b16 %v2965
        %v3211 = vunpack.c.l.b16 %v2966
        %v3212 = vunpack.c.l.b16 %v2967
        %v3213 = vpack.c.b16 %v3210, %v3209
        %v3214 = vpack.c.b16 %v3212, %v3211
        %v3223 = vunpack.c.l.b16 %v3197
        %v3224 = vunpack.c.l.b16 %v3198
        %v3225 = vunpack.c.l.b16 %v3199
        %v3226 = vunpack.c.l.b16 %v3200
        %v3227 = vunpack.c.l.b16 %v3201
        %v3228 = vunpack.c.l.b16 %v3202
        %v3229 = vunpack.c.l.b16 %v3203
        %v3230 = vunpack.c.l.b16 %v3204
        %v3231 = vpack.c.b16 %v3224, %v3223
        %v3232 = vpack.c.b16 %v3226, %v3225
        %v3233 = vpack.c.b16 %v3228, %v3227
        %v3234 = vpack.c.b16 %v3230, %v3229
        %v3240 = vsel %vm3039, %v3213, 0
        %v3243 = vsel %vm3039, %v3214, 0
        %3245 = vmatpush.bf16.msra.mxu0 0
        %3246 = vmatpush.bf16.msra.mxu0 0
        %3247 = vmatpush.bf16.msra.mxu0 0
        %3248 = vmatpush.bf16.msra.mxu0 0
        %3249 = vmatpush.bf16.msra.mxu0 %v3234
        %3250 = vmatpush.bf16.msra.mxu0 %v3233
        %3251 = vmatpush.bf16.msra.mxu0 %v3232
        %3252 = vmatpush.bf16.msra.mxu0 %v3231
        %3253 = vmatmul.bf16.gmra.mxu0 %v3240
        %v3254 = vpop.f32.mrf.mxu0
        %v3255 = vadd.f32 0.0, %v3254
        %v3256 = vpop.f32.mrf.mxu0
        %v3257 = vadd.f32 0.0, %v3256
        %3258 = vmatmul.bf16.gmra.mxu0 %v3243
        %v3259 = vpop.f32.mrf.mxu0
        %v3260 = vadd.f32 0.0, %v3259
        %v3261 = vpop.f32.mrf.mxu0
        %v3262 = vadd.f32 0.0, %v3261
        %3263 = vdwg.mxu0
        %v3264 = vadd.f32 %v3192, %v3255
        %v3265 = vadd.f32 %v3193, %v3257
        %v3266 = vadd.f32 %v3194, %v3260
        %v3267 = vadd.f32 %v3195, %v3262
        %s3268 = scalar_lea.vmem %s8, 128
        %v3269 = vld [vmem:[%s3268] sm:$0xf]
        %v3270 = vld [vmem:[%s3268 + $0x4] sm:$0xf]
        %v3271 = vld [vmem:[%s3268 + $0x8] sm:$0xf]
        %v3272 = vld [vmem:[%s3268 + $0xc] sm:$0xf]
        %v3273 = vld [vmem:[%s3268 + $0x10] sm:$0xf]
        %v3274 = vld [vmem:[%s3268 + $0x14] sm:$0xf]
        %v3275 = vld [vmem:[%s3268 + $0x18] sm:$0xf]
        %v3276 = vld [vmem:[%s3268 + $0x1c] sm:$0xf]
        %v3281 = vunpack.c.l.b16 %v2968
        %v3282 = vunpack.c.l.b16 %v2969
        %v3283 = vunpack.c.l.b16 %v2970
        %v3284 = vunpack.c.l.b16 %v2971
        %v3285 = vpack.c.b16 %v3282, %v3281
        %v3286 = vpack.c.b16 %v3284, %v3283
        %v3295 = vunpack.c.l.b16 %v3269
        %v3296 = vunpack.c.l.b16 %v3270
        %v3297 = vunpack.c.l.b16 %v3271
        %v3298 = vunpack.c.l.b16 %v3272
        %v3299 = vunpack.c.l.b16 %v3273
        %v3300 = vunpack.c.l.b16 %v3274
        %v3301 = vunpack.c.l.b16 %v3275
        %v3302 = vunpack.c.l.b16 %v3276
        %v3303 = vpack.c.b16 %v3296, %v3295
        %v3304 = vpack.c.b16 %v3298, %v3297
        %v3305 = vpack.c.b16 %v3300, %v3299
        %v3306 = vpack.c.b16 %v3302, %v3301
        %v3312 = vsel %vm3039, %v3285, 0
        %v3315 = vsel %vm3039, %v3286, 0
        %3317 = vmatpush.bf16.msra.mxu0 0
        %3318 = vmatpush.bf16.msra.mxu0 0
        %3319 = vmatpush.bf16.msra.mxu0 0
        %3320 = vmatpush.bf16.msra.mxu0 0
        %3321 = vmatpush.bf16.msra.mxu0 %v3306
        %3322 = vmatpush.bf16.msra.mxu0 %v3305
        %3323 = vmatpush.bf16.msra.mxu0 %v3304
        %3324 = vmatpush.bf16.msra.mxu0 %v3303
        %3325 = vmatmul.bf16.gmra.mxu0 %v3312
        %v3326 = vpop.f32.mrf.mxu0
        %v3327 = vadd.f32 0.0, %v3326
        %v3328 = vpop.f32.mrf.mxu0
        %v3329 = vadd.f32 0.0, %v3328
        %3330 = vmatmul.bf16.gmra.mxu0 %v3315
        %v3331 = vpop.f32.mrf.mxu0
        %v3332 = vadd.f32 0.0, %v3331
        %v3333 = vpop.f32.mrf.mxu0
        %v3334 = vadd.f32 0.0, %v3333
        %3335 = vdwg.mxu0
        %v3336 = vadd.f32 %v3264, %v3327
        %v3337 = vadd.f32 %v3265, %v3329
        %v3338 = vadd.f32 %v3266, %v3332
        %v3339 = vadd.f32 %v3267, %v3334
        %s3340 = scalar_lea.vmem %s8, 160
        %v3341 = vld [vmem:[%s3340] sm:$0xf]
        %v3342 = vld [vmem:[%s3340 + $0x4] sm:$0xf]
        %v3343 = vld [vmem:[%s3340 + $0x8] sm:$0xf]
        %v3344 = vld [vmem:[%s3340 + $0xc] sm:$0xf]
        %v3345 = vld [vmem:[%s3340 + $0x10] sm:$0xf]
        %v3346 = vld [vmem:[%s3340 + $0x14] sm:$0xf]
        %v3347 = vld [vmem:[%s3340 + $0x18] sm:$0xf]
        %v3348 = vld [vmem:[%s3340 + $0x1c] sm:$0xf]
        %v3353 = vunpack.c.l.b16 %v2972
        %v3354 = vunpack.c.l.b16 %v2973
        %v3355 = vunpack.c.l.b16 %v2974
        %v3356 = vunpack.c.l.b16 %v2975
        %v3357 = vpack.c.b16 %v3354, %v3353
        %v3358 = vpack.c.b16 %v3356, %v3355
        %v3367 = vunpack.c.l.b16 %v3341
        %v3368 = vunpack.c.l.b16 %v3342
        %v3369 = vunpack.c.l.b16 %v3343
        %v3370 = vunpack.c.l.b16 %v3344
        %v3371 = vunpack.c.l.b16 %v3345
        %v3372 = vunpack.c.l.b16 %v3346
        %v3373 = vunpack.c.l.b16 %v3347
        %v3374 = vunpack.c.l.b16 %v3348
        %v3375 = vpack.c.b16 %v3368, %v3367
        %v3376 = vpack.c.b16 %v3370, %v3369
        %v3377 = vpack.c.b16 %v3372, %v3371
        %v3378 = vpack.c.b16 %v3374, %v3373
        %v3384 = vsel %vm3039, %v3357, 0
        %v3387 = vsel %vm3039, %v3358, 0
        %3389 = vmatpush.bf16.msra.mxu0 0
        %3390 = vmatpush.bf16.msra.mxu0 0
        %3391 = vmatpush.bf16.msra.mxu0 0
        %3392 = vmatpush.bf16.msra.mxu0 0
        %3393 = vmatpush.bf16.msra.mxu0 %v3378
        %3394 = vmatpush.bf16.msra.mxu0 %v3377
        %3395 = vmatpush.bf16.msra.mxu0 %v3376
        %3396 = vmatpush.bf16.msra.mxu0 %v3375
        %3397 = vmatmul.bf16.gmra.mxu0 %v3384
        %v3398 = vpop.f32.mrf.mxu0
        %v3399 = vadd.f32 0.0, %v3398
        %v3400 = vpop.f32.mrf.mxu0
        %v3401 = vadd.f32 0.0, %v3400
        %3402 = vmatmul.bf16.gmra.mxu0 %v3387
        %v3403 = vpop.f32.mrf.mxu0
        %v3404 = vadd.f32 0.0, %v3403
        %v3405 = vpop.f32.mrf.mxu0
        %v3406 = vadd.f32 0.0, %v3405
        %3407 = vdwg.mxu0
        %v3408 = vadd.f32 %v3336, %v3399
        %v3409 = vadd.f32 %v3337, %v3401
        %v3410 = vadd.f32 %v3338, %v3404
        %v3411 = vadd.f32 %v3339, %v3406
        %s3412 = scalar_lea.vmem %s8, 192
        %v3413 = vld [vmem:[%s3412] sm:$0xf]
        %v3414 = vld [vmem:[%s3412 + $0x4] sm:$0xf]
        %v3415 = vld [vmem:[%s3412 + $0x8] sm:$0xf]
        %v3416 = vld [vmem:[%s3412 + $0xc] sm:$0xf]
        %v3417 = vld [vmem:[%s3412 + $0x10] sm:$0xf]
        %v3418 = vld [vmem:[%s3412 + $0x14] sm:$0xf]
        %v3419 = vld [vmem:[%s3412 + $0x18] sm:$0xf]
        %v3420 = vld [vmem:[%s3412 + $0x1c] sm:$0xf]
        %v3425 = vunpack.c.l.b16 %v2976
        %v3426 = vunpack.c.l.b16 %v2977
        %v3427 = vunpack.c.l.b16 %v2978
        %v3428 = vunpack.c.l.b16 %v2979
        %v3429 = vpack.c.b16 %v3426, %v3425
        %v3430 = vpack.c.b16 %v3428, %v3427
        %v3439 = vunpack.c.l.b16 %v3413
        %v3440 = vunpack.c.l.b16 %v3414
        %v3441 = vunpack.c.l.b16 %v3415
        %v3442 = vunpack.c.l.b16 %v3416
        %v3443 = vunpack.c.l.b16 %v3417
        %v3444 = vunpack.c.l.b16 %v3418
        %v3445 = vunpack.c.l.b16 %v3419
        %v3446 = vunpack.c.l.b16 %v3420
        %v3447 = vpack.c.b16 %v3440, %v3439
        %v3448 = vpack.c.b16 %v3442, %v3441
        %v3449 = vpack.c.b16 %v3444, %v3443
        %v3450 = vpack.c.b16 %v3446, %v3445
        %v3456 = vsel %vm3039, %v3429, 0
        %v3459 = vsel %vm3039, %v3430, 0
        %3461 = vmatpush.bf16.msra.mxu0 0
        %3462 = vmatpush.bf16.msra.mxu0 0
        %3463 = vmatpush.bf16.msra.mxu0 0
        %3464 = vmatpush.bf16.msra.mxu0 0
        %3465 = vmatpush.bf16.msra.mxu0 %v3450
        %3466 = vmatpush.bf16.msra.mxu0 %v3449
        %3467 = vmatpush.bf16.msra.mxu0 %v3448
        %3468 = vmatpush.bf16.msra.mxu0 %v3447
        %3469 = vmatmul.bf16.gmra.mxu0 %v3456
        %v3470 = vpop.f32.mrf.mxu0
        %v3471 = vadd.f32 0.0, %v3470
        %v3472 = vpop.f32.mrf.mxu0
        %v3473 = vadd.f32 0.0, %v3472
        %3474 = vmatmul.bf16.gmra.mxu0 %v3459
        %v3475 = vpop.f32.mrf.mxu0
        %v3476 = vadd.f32 0.0, %v3475
        %v3477 = vpop.f32.mrf.mxu0
        %v3478 = vadd.f32 0.0, %v3477
        %3479 = vdwg.mxu0
        %v3480 = vadd.f32 %v3408, %v3471
        %v3481 = vadd.f32 %v3409, %v3473
        %v3482 = vadd.f32 %v3410, %v3476
        %v3483 = vadd.f32 %v3411, %v3478
        %s3484 = scalar_lea.vmem %s8, 224
        %v3485 = vld [vmem:[%s3484] sm:$0xf]
        %v3486 = vld [vmem:[%s3484 + $0x4] sm:$0xf]
        %v3487 = vld [vmem:[%s3484 + $0x8] sm:$0xf]
        %v3488 = vld [vmem:[%s3484 + $0xc] sm:$0xf]
        %v3489 = vld [vmem:[%s3484 + $0x10] sm:$0xf]
        %v3490 = vld [vmem:[%s3484 + $0x14] sm:$0xf]
        %v3491 = vld [vmem:[%s3484 + $0x18] sm:$0xf]
        %v3492 = vld [vmem:[%s3484 + $0x1c] sm:$0xf]
        %v3497 = vunpack.c.l.b16 %v2980
        %v3498 = vunpack.c.l.b16 %v2981
        %v3499 = vunpack.c.l.b16 %v2982
        %v3500 = vunpack.c.l.b16 %v2983
        %v3501 = vpack.c.b16 %v3498, %v3497
        %v3502 = vpack.c.b16 %v3500, %v3499
        %v3511 = vunpack.c.l.b16 %v3485
        %v3512 = vunpack.c.l.b16 %v3486
        %v3513 = vunpack.c.l.b16 %v3487
        %v3514 = vunpack.c.l.b16 %v3488
        %v3515 = vunpack.c.l.b16 %v3489
        %v3516 = vunpack.c.l.b16 %v3490
        %v3517 = vunpack.c.l.b16 %v3491
        %v3518 = vunpack.c.l.b16 %v3492
        %v3519 = vpack.c.b16 %v3512, %v3511
        %v3520 = vpack.c.b16 %v3514, %v3513
        %v3521 = vpack.c.b16 %v3516, %v3515
        %v3522 = vpack.c.b16 %v3518, %v3517
        %v3528 = vsel %vm3039, %v3501, 0
        %v3531 = vsel %vm3039, %v3502, 0
        %3533 = vmatpush.bf16.msra.mxu0 0
        %3534 = vmatpush.bf16.msra.mxu0 0
        %3535 = vmatpush.bf16.msra.mxu0 0
        %3536 = vmatpush.bf16.msra.mxu0 0
        %3537 = vmatpush.bf16.msra.mxu0 %v3522
        %3538 = vmatpush.bf16.msra.mxu0 %v3521
        %3539 = vmatpush.bf16.msra.mxu0 %v3520
        %3540 = vmatpush.bf16.msra.mxu0 %v3519
        %3541 = vmatmul.bf16.gmra.mxu0 %v3528
        %v3542 = vpop.f32.mrf.mxu0
        %v3543 = vadd.f32 0.0, %v3542
        %v3544 = vpop.f32.mrf.mxu0
        %v3545 = vadd.f32 0.0, %v3544
        %3546 = vmatmul.bf16.gmra.mxu0 %v3531
        %v3547 = vpop.f32.mrf.mxu0
        %v3548 = vadd.f32 0.0, %v3547
        %v3549 = vpop.f32.mrf.mxu0
        %v3550 = vadd.f32 0.0, %v3549
        %3551 = vdwg.mxu0
        %v3552 = vadd.f32 %v3480, %v3543
        %v3553 = vadd.f32 %v3481, %v3545
        %v3554 = vadd.f32 %v3482, %v3548
        %v3555 = vadd.f32 %v3483, %v3550
        %s3556 = scalar_lea.vmem %s8, 256
        %v3557 = vld [vmem:[%s3556] sm:$0xf]
        %v3558 = vld [vmem:[%s3556 + $0x4] sm:$0xf]
        %v3559 = vld [vmem:[%s3556 + $0x8] sm:$0xf]
        %v3560 = vld [vmem:[%s3556 + $0xc] sm:$0xf]
        %v3561 = vld [vmem:[%s3556 + $0x10] sm:$0xf]
        %v3562 = vld [vmem:[%s3556 + $0x14] sm:$0xf]
        %v3563 = vld [vmem:[%s3556 + $0x18] sm:$0xf]
        %v3564 = vld [vmem:[%s3556 + $0x1c] sm:$0xf]
        %v3569 = vunpack.c.l.b16 %v2984
        %v3570 = vunpack.c.l.b16 %v2985
        %v3571 = vunpack.c.l.b16 %v2986
        %v3572 = vunpack.c.l.b16 %v2987
        %v3573 = vpack.c.b16 %v3570, %v3569
        %v3574 = vpack.c.b16 %v3572, %v3571
        %v3583 = vunpack.c.l.b16 %v3557
        %v3584 = vunpack.c.l.b16 %v3558
        %v3585 = vunpack.c.l.b16 %v3559
        %v3586 = vunpack.c.l.b16 %v3560
        %v3587 = vunpack.c.l.b16 %v3561
        %v3588 = vunpack.c.l.b16 %v3562
        %v3589 = vunpack.c.l.b16 %v3563
        %v3590 = vunpack.c.l.b16 %v3564
        %v3591 = vpack.c.b16 %v3584, %v3583
        %v3592 = vpack.c.b16 %v3586, %v3585
        %v3593 = vpack.c.b16 %v3588, %v3587
        %v3594 = vpack.c.b16 %v3590, %v3589
        %v3600 = vsel %vm3039, %v3573, 0
        %v3603 = vsel %vm3039, %v3574, 0
        %3605 = vmatpush.bf16.msra.mxu0 0
        %3606 = vmatpush.bf16.msra.mxu0 0
        %3607 = vmatpush.bf16.msra.mxu0 0
        %3608 = vmatpush.bf16.msra.mxu0 0
        %3609 = vmatpush.bf16.msra.mxu0 %v3594
        %3610 = vmatpush.bf16.msra.mxu0 %v3593
        %3611 = vmatpush.bf16.msra.mxu0 %v3592
        %3612 = vmatpush.bf16.msra.mxu0 %v3591
        %3613 = vmatmul.bf16.gmra.mxu0 %v3600
        %v3614 = vpop.f32.mrf.mxu0
        %v3615 = vadd.f32 0.0, %v3614
        %v3616 = vpop.f32.mrf.mxu0
        %v3617 = vadd.f32 0.0, %v3616
        %3618 = vmatmul.bf16.gmra.mxu0 %v3603
        %v3619 = vpop.f32.mrf.mxu0
        %v3620 = vadd.f32 0.0, %v3619
        %v3621 = vpop.f32.mrf.mxu0
        %v3622 = vadd.f32 0.0, %v3621
        %3623 = vdwg.mxu0
        %v3624 = vadd.f32 %v3552, %v3615
        %v3625 = vadd.f32 %v3553, %v3617
        %v3626 = vadd.f32 %v3554, %v3620
        %v3627 = vadd.f32 %v3555, %v3622
        %v3628 = vld [vmem:[%s7] sm:$0xff]
        %v3629 = vld [vmem:[%s7 + $0x8] sm:$0xff]
        %v3630 = vld [vmem:[%s7 + $0x10] sm:$0xff]
        %v3631 = vld [vmem:[%s7 + $0x18] sm:$0xff]
        %3633 = vset.pattern.permute.xlu0 0
        %3634 = vperm.xlu0 %3633, %v3628
        %v3635 = vpop.permute.xlu0 %3634
        %3638 = vset.pattern.permute.xlu0 0
        %3639 = vperm.xlu0 %3638, %v3629
        %v3640 = vpop.permute.xlu0 %3639
        %3643 = vset.pattern.permute.xlu0 0
        %3644 = vperm.xlu0 %3643, %v3630
        %v3645 = vpop.permute.xlu0 %3644
        %3648 = vset.pattern.permute.xlu0 0
        %3649 = vperm.xlu0 %3648, %v3631
        %v3650 = vpop.permute.xlu0 %3649
        %v3652 = vadd.f32 %v3624, %v3635
        %v3653 = vadd.f32 %v3625, %v3640
        %v3654 = vadd.f32 %v3626, %v3645
        %v3655 = vadd.f32 %v3627, %v3650
        %v3656 = vmax.f32 %v3652, 0.0
        %v3657 = vmax.f32 %v3653, 0.0
        %v3658 = vmax.f32 %v3654, 0.0
        %v3659 = vmax.f32 %v3655, 0.0
        %v3660 = vld [vmem:[%s9] sm:$0xf]
        %v3661 = vld [vmem:[%s9 + $0x4] sm:$0xf]
        %v3662 = vld [vmem:[%s9 + $0x8] sm:$0xf]
        %v3663 = vld [vmem:[%s9 + $0xc] sm:$0xf]
        %v3664 = vld [vmem:[%s9 + $0x10] sm:$0xf]
        %v3665 = vld [vmem:[%s9 + $0x14] sm:$0xf]
        %v3666 = vld [vmem:[%s9 + $0x18] sm:$0xf]
        %v3667 = vld [vmem:[%s9 + $0x1c] sm:$0xf]
        %v3668 = vld [vmem:[%s9 + $0x20] sm:$0xf]
        %v3669 = vld [vmem:[%s9 + $0x24] sm:$0xf]
        %v3670 = vld [vmem:[%s9 + $0x28] sm:$0xf]
        %v3671 = vld [vmem:[%s9 + $0x2c] sm:$0xf]
        %v3672 = vld [vmem:[%s9 + $0x30] sm:$0xf]
        %v3673 = vld [vmem:[%s9 + $0x34] sm:$0xf]
        %v3674 = vld [vmem:[%s9 + $0x38] sm:$0xf]
        %v3675 = vld [vmem:[%s9 + $0x3c] sm:$0xf]
        %v3676 = vld [vmem:[%s9 + $0x40] sm:$0xf]
        %v3677 = vld [vmem:[%s9 + $0x44] sm:$0xf]
        %v3678 = vld [vmem:[%s9 + $0x48] sm:$0xf]
        %v3679 = vld [vmem:[%s9 + $0x4c] sm:$0xf]
        %v3680 = vld [vmem:[%s9 + $0x50] sm:$0xf]
        %v3681 = vld [vmem:[%s9 + $0x54] sm:$0xf]
        %v3682 = vld [vmem:[%s9 + $0x58] sm:$0xf]
        %v3683 = vld [vmem:[%s9 + $0x5c] sm:$0xf]
        %v3684 = vld [vmem:[%s9 + $0x60] sm:$0xf]
        %v3685 = vld [vmem:[%s9 + $0x64] sm:$0xf]
        %v3686 = vld [vmem:[%s9 + $0x68] sm:$0xf]
        %v3687 = vld [vmem:[%s9 + $0x6c] sm:$0xf]
        %v3688 = vld [vmem:[%s9 + $0x70] sm:$0xf]
        %v3689 = vld [vmem:[%s9 + $0x74] sm:$0xf]
        %v3690 = vld [vmem:[%s9 + $0x78] sm:$0xf]
        %v3691 = vld [vmem:[%s9 + $0x7c] sm:$0xf]
        %v3692 = vld [vmem:[%s9 + $0x80] sm:$0xf]
        %v3693 = vld [vmem:[%s9 + $0x84] sm:$0xf]
        %v3694 = vld [vmem:[%s9 + $0x88] sm:$0xf]
        %v3695 = vld [vmem:[%s9 + $0x8c] sm:$0xf]
        %v3696 = vld [vmem:[%s9 + $0x90] sm:$0xf]
        %v3697 = vld [vmem:[%s9 + $0x94] sm:$0xf]
        %v3698 = vld [vmem:[%s9 + $0x98] sm:$0xf]
        %v3699 = vld [vmem:[%s9 + $0x9c] sm:$0xf]
        %v3700 = vld [vmem:[%s9 + $0xa0] sm:$0xf]
        %v3701 = vld [vmem:[%s9 + $0xa4] sm:$0xf]
        %v3702 = vld [vmem:[%s9 + $0xa8] sm:$0xf]
        %v3703 = vld [vmem:[%s9 + $0xac] sm:$0xf]
        %v3704 = vld [vmem:[%s9 + $0xb0] sm:$0xf]
        %v3705 = vld [vmem:[%s9 + $0xb4] sm:$0xf]
        %v3706 = vld [vmem:[%s9 + $0xb8] sm:$0xf]
        %v3707 = vld [vmem:[%s9 + $0xbc] sm:$0xf]
        %v3708 = vld [vmem:[%s9 + $0xc0] sm:$0xf]
        %v3709 = vld [vmem:[%s9 + $0xc4] sm:$0xf]
        %v3710 = vld [vmem:[%s9 + $0xc8] sm:$0xf]
        %v3711 = vld [vmem:[%s9 + $0xcc] sm:$0xf]
        %v3712 = vld [vmem:[%s9 + $0xd0] sm:$0xf]
        %v3713 = vld [vmem:[%s9 + $0xd4] sm:$0xf]
        %v3714 = vld [vmem:[%s9 + $0xd8] sm:$0xf]
        %v3715 = vld [vmem:[%s9 + $0xdc] sm:$0xf]
        %v3716 = vld [vmem:[%s9 + $0xe0] sm:$0xf]
        %v3717 = vld [vmem:[%s9 + $0xe4] sm:$0xf]
        %v3718 = vld [vmem:[%s9 + $0xe8] sm:$0xf]
        %v3719 = vld [vmem:[%s9 + $0xec] sm:$0xf]
        %v3720 = vld [vmem:[%s9 + $0xf0] sm:$0xf]
        %v3721 = vld [vmem:[%s9 + $0xf4] sm:$0xf]
        %v3722 = vld [vmem:[%s9 + $0xf8] sm:$0xf]
        %v3723 = vld [vmem:[%s9 + $0xfc] sm:$0xf]
        %v3724 = vld [vmem:[%s9 + $0x100] sm:$0xf]
        %v3725 = vld [vmem:[%s9 + $0x104] sm:$0xf]
        %v3726 = vld [vmem:[%s9 + $0x108] sm:$0xf]
        %v3727 = vld [vmem:[%s9 + $0x10c] sm:$0xf]
        %v3728 = vld [vmem:[%s9 + $0x110] sm:$0xf]
        %v3729 = vld [vmem:[%s9 + $0x114] sm:$0xf]
        %v3730 = vld [vmem:[%s9 + $0x118] sm:$0xf]
        %v3731 = vld [vmem:[%s9 + $0x11c] sm:$0xf]
        %v3732 = vpack.c.bf16 %v3657, %v3656
        %v3733 = vpack.c.bf16 %v3659, %v3658
        %v3806 = vunpack.c.l.b16 %v3660
        %v3807 = vunpack.c.l.b16 %v3661
        %v3808 = vunpack.c.l.b16 %v3662
        %v3809 = vunpack.c.l.b16 %v3663
        %v3810 = vunpack.c.l.b16 %v3664
        %v3811 = vunpack.c.l.b16 %v3665
        %v3812 = vunpack.c.l.b16 %v3666
        %v3813 = vunpack.c.l.b16 %v3667
        %v3814 = vunpack.c.l.b16 %v3668
        %v3815 = vunpack.c.l.b16 %v3669
        %v3816 = vunpack.c.l.b16 %v3670
        %v3817 = vunpack.c.l.b16 %v3671
        %v3818 = vunpack.c.l.b16 %v3672
        %v3819 = vunpack.c.l.b16 %v3673
        %v3820 = vunpack.c.l.b16 %v3674
        %v3821 = vunpack.c.l.b16 %v3675
        %v3822 = vunpack.c.l.b16 %v3676
        %v3823 = vunpack.c.l.b16 %v3677
        %v3824 = vunpack.c.l.b16 %v3678
        %v3825 = vunpack.c.l.b16 %v3679
        %v3826 = vunpack.c.l.b16 %v3680
        %v3827 = vunpack.c.l.b16 %v3681
        %v3828 = vunpack.c.l.b16 %v3682
        %v3829 = vunpack.c.l.b16 %v3683
        %v3830 = vunpack.c.l.b16 %v3684
        %v3831 = vunpack.c.l.b16 %v3685
        %v3832 = vunpack.c.l.b16 %v3686
        %v3833 = vunpack.c.l.b16 %v3687
        %v3834 = vunpack.c.l.b16 %v3688
        %v3835 = vunpack.c.l.b16 %v3689
        %v3836 = vunpack.c.l.b16 %v3690
        %v3837 = vunpack.c.l.b16 %v3691
        %v3838 = vunpack.c.l.b16 %v3692
        %v3839 = vunpack.c.l.b16 %v3693
        %v3840 = vunpack.c.l.b16 %v3694
        %v3841 = vunpack.c.l.b16 %v3695
        %v3842 = vunpack.c.l.b16 %v3696
        %v3843 = vunpack.c.l.b16 %v3697
        %v3844 = vunpack.c.l.b16 %v3698
        %v3845 = vunpack.c.l.b16 %v3699
        %v3846 = vunpack.c.l.b16 %v3700
        %v3847 = vunpack.c.l.b16 %v3701
        %v3848 = vunpack.c.l.b16 %v3702
        %v3849 = vunpack.c.l.b16 %v3703
        %v3850 = vunpack.c.l.b16 %v3704
        %v3851 = vunpack.c.l.b16 %v3705
        %v3852 = vunpack.c.l.b16 %v3706
        %v3853 = vunpack.c.l.b16 %v3707
        %v3854 = vunpack.c.l.b16 %v3708
        %v3855 = vunpack.c.l.b16 %v3709
        %v3856 = vunpack.c.l.b16 %v3710
        %v3857 = vunpack.c.l.b16 %v3711
        %v3858 = vunpack.c.l.b16 %v3712
        %v3859 = vunpack.c.l.b16 %v3713
        %v3860 = vunpack.c.l.b16 %v3714
        %v3861 = vunpack.c.l.b16 %v3715
        %v3862 = vunpack.c.l.b16 %v3716
        %v3863 = vunpack.c.l.b16 %v3717
        %v3864 = vunpack.c.l.b16 %v3718
        %v3865 = vunpack.c.l.b16 %v3719
        %v3866 = vunpack.c.l.b16 %v3720
        %v3867 = vunpack.c.l.b16 %v3721
        %v3868 = vunpack.c.l.b16 %v3722
        %v3869 = vunpack.c.l.b16 %v3723
        %v3870 = vunpack.c.l.b16 %v3724
        %v3871 = vunpack.c.l.b16 %v3725
        %v3872 = vunpack.c.l.b16 %v3726
        %v3873 = vunpack.c.l.b16 %v3727
        %v3874 = vunpack.c.l.b16 %v3728
        %v3875 = vunpack.c.l.b16 %v3729
        %v3876 = vunpack.c.l.b16 %v3730
        %v3877 = vunpack.c.l.b16 %v3731
        %v3878 = vpack.c.b16 %v3807, %v3806
        %v3879 = vpack.c.b16 %v3809, %v3808
        %v3880 = vpack.c.b16 %v3811, %v3810
        %v3881 = vpack.c.b16 %v3813, %v3812
        %v3882 = vpack.c.b16 %v3815, %v3814
        %v3883 = vpack.c.b16 %v3817, %v3816
        %v3884 = vpack.c.b16 %v3819, %v3818
        %v3885 = vpack.c.b16 %v3821, %v3820
        %v3886 = vpack.c.b16 %v3823, %v3822
        %v3887 = vpack.c.b16 %v3825, %v3824
        %v3888 = vpack.c.b16 %v3827, %v3826
        %v3889 = vpack.c.b16 %v3829, %v3828
        %v3890 = vpack.c.b16 %v3831, %v3830
        %v3891 = vpack.c.b16 %v3833, %v3832
        %v3892 = vpack.c.b16 %v3835, %v3834
        %v3893 = vpack.c.b16 %v3837, %v3836
        %v3894 = vpack.c.b16 %v3839, %v3838
        %v3895 = vpack.c.b16 %v3841, %v3840
        %v3896 = vpack.c.b16 %v3843, %v3842
        %v3897 = vpack.c.b16 %v3845, %v3844
        %v3898 = vpack.c.b16 %v3847, %v3846
        %v3899 = vpack.c.b16 %v3849, %v3848
        %v3900 = vpack.c.b16 %v3851, %v3850
        %v3901 = vpack.c.b16 %v3853, %v3852
        %v3902 = vpack.c.b16 %v3855, %v3854
        %v3903 = vpack.c.b16 %v3857, %v3856
        %v3904 = vpack.c.b16 %v3859, %v3858
        %v3905 = vpack.c.b16 %v3861, %v3860
        %v3906 = vpack.c.b16 %v3863, %v3862
        %v3907 = vpack.c.b16 %v3865, %v3864
        %v3908 = vpack.c.b16 %v3867, %v3866
        %v3909 = vpack.c.b16 %v3869, %v3868
        %v3910 = vpack.c.b16 %v3871, %v3870
        %v3911 = vpack.c.b16 %v3873, %v3872
        %v3912 = vpack.c.b16 %v3875, %v3874
        %v3913 = vpack.c.b16 %v3877, %v3876
        %vm3914 = vcmask 261120
        %v3916 = vsel %vm3914, %v3878, 0
        %v3919 = vsel %vm3914, %v3879, 0
        %v3922 = vsel %vm3914, %v3880, 0
        %v3925 = vsel %vm3914, %v3881, 0
        %v3928 = vsel %vm3914, %v3882, 0
        %v3931 = vsel %vm3914, %v3883, 0
        %v3934 = vsel %vm3914, %v3884, 0
        %v3937 = vsel %vm3914, %v3885, 0
        %v3940 = vsel %vm3914, %v3886, 0
        %v3943 = vsel %vm3914, %v3887, 0
        %v3946 = vsel %vm3914, %v3888, 0
        %v3949 = vsel %vm3914, %v3889, 0
        %v3952 = vsel %vm3914, %v3890, 0
        %v3955 = vsel %vm3914, %v3891, 0
        %v3958 = vsel %vm3914, %v3892, 0
        %v3961 = vsel %vm3914, %v3893, 0
        %v3964 = vsel %vm3914, %v3894, 0
        %v3967 = vsel %vm3914, %v3895, 0
        %v3970 = vsel %vm3914, %v3896, 0
        %v3973 = vsel %vm3914, %v3897, 0
        %v3976 = vsel %vm3914, %v3898, 0
        %v3979 = vsel %vm3914, %v3899, 0
        %v3982 = vsel %vm3914, %v3900, 0
        %v3985 = vsel %vm3914, %v3901, 0
        %v3988 = vsel %vm3914, %v3902, 0
        %v3991 = vsel %vm3914, %v3903, 0
        %v3994 = vsel %vm3914, %v3904, 0
        %v3997 = vsel %vm3914, %v3905, 0
        %v4000 = vsel %vm3914, %v3906, 0
        %v4003 = vsel %vm3914, %v3907, 0
        %v4006 = vsel %vm3914, %v3908, 0
        %v4009 = vsel %vm3914, %v3909, 0
        %v4012 = vsel %vm3914, %v3910, 0
        %v4015 = vsel %vm3914, %v3911, 0
        %v4018 = vsel %vm3914, %v3912, 0
        %v4021 = vsel %vm3914, %v3913, 0
        %4023 = vmatpush.bf16.msra.mxu0 0
        %4024 = vmatpush.bf16.msra.mxu0 0
        %4025 = vmatpush.bf16.msra.mxu0 0
        %4026 = vmatpush.bf16.msra.mxu0 0
        %4027 = vmatpush.bf16.msra.mxu0 0
        %4028 = vmatpush.bf16.msra.mxu0 0
        %4029 = vmatpush.bf16.msra.mxu0 %v3733
        %4030 = vmatpush.bf16.msra.mxu0 %v3732
        %4031 = vmatmul.bf16.gmra.mxu0 %v3916
        %v4032 = vpop.f32.mrf.mxu0
        %v4033 = vadd.f32 0.0, %v4032
        %v4034 = vpop.f32.mrf.mxu0
        %v4035 = vadd.f32 0.0, %v4034
        %4036 = vmatmul.bf16.gmra.mxu0 %v3919
        %v4037 = vpop.f32.mrf.mxu0
        %v4038 = vadd.f32 0.0, %v4037
        %v4039 = vpop.f32.mrf.mxu0
        %v4040 = vadd.f32 0.0, %v4039
        %4041 = vmatmul.bf16.gmra.mxu0 %v3922
        %v4042 = vpop.f32.mrf.mxu0
        %v4043 = vadd.f32 0.0, %v4042
        %v4044 = vpop.f32.mrf.mxu0
        %v4045 = vadd.f32 0.0, %v4044
        %4046 = vmatmul.bf16.gmra.mxu0 %v3925
        %v4047 = vpop.f32.mrf.mxu0
        %v4048 = vadd.f32 0.0, %v4047
        %v4049 = vpop.f32.mrf.mxu0
        %v4050 = vadd.f32 0.0, %v4049
        %4051 = vmatmul.bf16.gmra.mxu0 %v3928
        %v4052 = vpop.f32.mrf.mxu0
        %v4053 = vadd.f32 0.0, %v4052
        %v4054 = vpop.f32.mrf.mxu0
        %v4055 = vadd.f32 0.0, %v4054
        %4056 = vmatmul.bf16.gmra.mxu0 %v3931
        %v4057 = vpop.f32.mrf.mxu0
        %v4058 = vadd.f32 0.0, %v4057
        %v4059 = vpop.f32.mrf.mxu0
        %v4060 = vadd.f32 0.0, %v4059
        %4061 = vmatmul.bf16.gmra.mxu0 %v3934
        %v4062 = vpop.f32.mrf.mxu0
        %v4063 = vadd.f32 0.0, %v4062
        %v4064 = vpop.f32.mrf.mxu0
        %v4065 = vadd.f32 0.0, %v4064
        %4066 = vmatmul.bf16.gmra.mxu0 %v3937
        %v4067 = vpop.f32.mrf.mxu0
        %v4068 = vadd.f32 0.0, %v4067
        %v4069 = vpop.f32.mrf.mxu0
        %v4070 = vadd.f32 0.0, %v4069
        %4071 = vmatmul.bf16.gmra.mxu0 %v3940
        %v4072 = vpop.f32.mrf.mxu0
        %v4073 = vadd.f32 0.0, %v4072
        %v4074 = vpop.f32.mrf.mxu0
        %v4075 = vadd.f32 0.0, %v4074
        %4076 = vmatmul.bf16.gmra.mxu0 %v3943
        %v4077 = vpop.f32.mrf.mxu0
        %v4078 = vadd.f32 0.0, %v4077
        %v4079 = vpop.f32.mrf.mxu0
        %v4080 = vadd.f32 0.0, %v4079
        %4081 = vmatmul.bf16.gmra.mxu0 %v3946
        %v4082 = vpop.f32.mrf.mxu0
        %v4083 = vadd.f32 0.0, %v4082
        %v4084 = vpop.f32.mrf.mxu0
        %v4085 = vadd.f32 0.0, %v4084
        %4086 = vmatmul.bf16.gmra.mxu0 %v3949
        %v4087 = vpop.f32.mrf.mxu0
        %v4088 = vadd.f32 0.0, %v4087
        %v4089 = vpop.f32.mrf.mxu0
        %v4090 = vadd.f32 0.0, %v4089
        %4091 = vmatmul.bf16.gmra.mxu0 %v3952
        %v4092 = vpop.f32.mrf.mxu0
        %v4093 = vadd.f32 0.0, %v4092
        %v4094 = vpop.f32.mrf.mxu0
        %v4095 = vadd.f32 0.0, %v4094
        %4096 = vmatmul.bf16.gmra.mxu0 %v3955
        %v4097 = vpop.f32.mrf.mxu0
        %v4098 = vadd.f32 0.0, %v4097
        %v4099 = vpop.f32.mrf.mxu0
        %v4100 = vadd.f32 0.0, %v4099
        %4101 = vmatmul.bf16.gmra.mxu0 %v3958
        %v4102 = vpop.f32.mrf.mxu0
        %v4103 = vadd.f32 0.0, %v4102
        %v4104 = vpop.f32.mrf.mxu0
        %v4105 = vadd.f32 0.0, %v4104
        %4106 = vmatmul.bf16.gmra.mxu0 %v3961
        %v4107 = vpop.f32.mrf.mxu0
        %v4108 = vadd.f32 0.0, %v4107
        %v4109 = vpop.f32.mrf.mxu0
        %v4110 = vadd.f32 0.0, %v4109
        %4111 = vmatmul.bf16.gmra.mxu0 %v3964
        %v4112 = vpop.f32.mrf.mxu0
        %v4113 = vadd.f32 0.0, %v4112
        %v4114 = vpop.f32.mrf.mxu0
        %v4115 = vadd.f32 0.0, %v4114
        %4116 = vmatmul.bf16.gmra.mxu0 %v3967
        %v4117 = vpop.f32.mrf.mxu0
        %v4118 = vadd.f32 0.0, %v4117
        %v4119 = vpop.f32.mrf.mxu0
        %v4120 = vadd.f32 0.0, %v4119
        %4121 = vmatmul.bf16.gmra.mxu0 %v3970
        %v4122 = vpop.f32.mrf.mxu0
        %v4123 = vadd.f32 0.0, %v4122
        %v4124 = vpop.f32.mrf.mxu0
        %v4125 = vadd.f32 0.0, %v4124
        %4126 = vmatmul.bf16.gmra.mxu0 %v3973
        %v4127 = vpop.f32.mrf.mxu0
        %v4128 = vadd.f32 0.0, %v4127
        %v4129 = vpop.f32.mrf.mxu0
        %v4130 = vadd.f32 0.0, %v4129
        %4131 = vmatmul.bf16.gmra.mxu0 %v3976
        %v4132 = vpop.f32.mrf.mxu0
        %v4133 = vadd.f32 0.0, %v4132
        %v4134 = vpop.f32.mrf.mxu0
        %v4135 = vadd.f32 0.0, %v4134
        %4136 = vmatmul.bf16.gmra.mxu0 %v3979
        %v4137 = vpop.f32.mrf.mxu0
        %v4138 = vadd.f32 0.0, %v4137
        %v4139 = vpop.f32.mrf.mxu0
        %v4140 = vadd.f32 0.0, %v4139
        %4141 = vmatmul.bf16.gmra.mxu0 %v3982
        %v4142 = vpop.f32.mrf.mxu0
        %v4143 = vadd.f32 0.0, %v4142
        %v4144 = vpop.f32.mrf.mxu0
        %v4145 = vadd.f32 0.0, %v4144
        %4146 = vmatmul.bf16.gmra.mxu0 %v3985
        %v4147 = vpop.f32.mrf.mxu0
        %v4148 = vadd.f32 0.0, %v4147
        %v4149 = vpop.f32.mrf.mxu0
        %v4150 = vadd.f32 0.0, %v4149
        %4151 = vmatmul.bf16.gmra.mxu0 %v3988
        %v4152 = vpop.f32.mrf.mxu0
        %v4153 = vadd.f32 0.0, %v4152
        %v4154 = vpop.f32.mrf.mxu0
        %v4155 = vadd.f32 0.0, %v4154
        %4156 = vmatmul.bf16.gmra.mxu0 %v3991
        %v4157 = vpop.f32.mrf.mxu0
        %v4158 = vadd.f32 0.0, %v4157
        %v4159 = vpop.f32.mrf.mxu0
        %v4160 = vadd.f32 0.0, %v4159
        %4161 = vmatmul.bf16.gmra.mxu0 %v3994
        %v4162 = vpop.f32.mrf.mxu0
        %v4163 = vadd.f32 0.0, %v4162
        %v4164 = vpop.f32.mrf.mxu0
        %v4165 = vadd.f32 0.0, %v4164
        %4166 = vmatmul.bf16.gmra.mxu0 %v3997
        %v4167 = vpop.f32.mrf.mxu0
        %v4168 = vadd.f32 0.0, %v4167
        %v4169 = vpop.f32.mrf.mxu0
        %v4170 = vadd.f32 0.0, %v4169
        %4171 = vmatmul.bf16.gmra.mxu0 %v4000
        %v4172 = vpop.f32.mrf.mxu0
        %v4173 = vadd.f32 0.0, %v4172
        %v4174 = vpop.f32.mrf.mxu0
        %v4175 = vadd.f32 0.0, %v4174
        %4176 = vmatmul.bf16.gmra.mxu0 %v4003
        %v4177 = vpop.f32.mrf.mxu0
        %v4178 = vadd.f32 0.0, %v4177
        %v4179 = vpop.f32.mrf.mxu0
        %v4180 = vadd.f32 0.0, %v4179
        %4181 = vmatmul.bf16.gmra.mxu0 %v4006
        %v4182 = vpop.f32.mrf.mxu0
        %v4183 = vadd.f32 0.0, %v4182
        %v4184 = vpop.f32.mrf.mxu0
        %v4185 = vadd.f32 0.0, %v4184
        %4186 = vmatmul.bf16.gmra.mxu0 %v4009
        %v4187 = vpop.f32.mrf.mxu0
        %v4188 = vadd.f32 0.0, %v4187
        %v4189 = vpop.f32.mrf.mxu0
        %v4190 = vadd.f32 0.0, %v4189
        %4191 = vmatmul.bf16.gmra.mxu0 %v4012
        %v4192 = vpop.f32.mrf.mxu0
        %v4193 = vadd.f32 0.0, %v4192
        %v4194 = vpop.f32.mrf.mxu0
        %v4195 = vadd.f32 0.0, %v4194
        %4196 = vmatmul.bf16.gmra.mxu0 %v4015
        %v4197 = vpop.f32.mrf.mxu0
        %v4198 = vadd.f32 0.0, %v4197
        %v4199 = vpop.f32.mrf.mxu0
        %v4200 = vadd.f32 0.0, %v4199
        %4201 = vmatmul.bf16.gmra.mxu0 %v4018
        %v4202 = vpop.f32.mrf.mxu0
        %v4203 = vadd.f32 0.0, %v4202
        %v4204 = vpop.f32.mrf.mxu0
        %v4205 = vadd.f32 0.0, %v4204
        %4206 = vmatmul.bf16.gmra.mxu0 %v4021
        %v4207 = vpop.f32.mrf.mxu0
        %v4208 = vadd.f32 0.0, %v4207
        %v4209 = vpop.f32.mrf.mxu0
        %v4210 = vadd.f32 0.0, %v4209
        %4211 = vdwg.mxu0
        %v4212 = vpack.c.bf16 %v4033, %v4033
        %v4213 = vpack.c.bf16 %v4035, %v4035
        %v4214 = vpack.c.bf16 %v4038, %v4038
        %v4215 = vpack.c.bf16 %v4040, %v4040
        %v4216 = vpack.c.bf16 %v4043, %v4043
        %v4217 = vpack.c.bf16 %v4045, %v4045
        %v4218 = vpack.c.bf16 %v4048, %v4048
        %v4219 = vpack.c.bf16 %v4050, %v4050
        %v4220 = vpack.c.bf16 %v4053, %v4053
        %v4221 = vpack.c.bf16 %v4055, %v4055
        %v4222 = vpack.c.bf16 %v4058, %v4058
        %v4223 = vpack.c.bf16 %v4060, %v4060
        %v4224 = vpack.c.bf16 %v4063, %v4063
        %v4225 = vpack.c.bf16 %v4065, %v4065
        %v4226 = vpack.c.bf16 %v4068, %v4068
        %v4227 = vpack.c.bf16 %v4070, %v4070
        %v4228 = vpack.c.bf16 %v4073, %v4073
        %v4229 = vpack.c.bf16 %v4075, %v4075
        %v4230 = vpack.c.bf16 %v4078, %v4078
        %v4231 = vpack.c.bf16 %v4080, %v4080
        %v4232 = vpack.c.bf16 %v4083, %v4083
        %v4233 = vpack.c.bf16 %v4085, %v4085
        %v4234 = vpack.c.bf16 %v4088, %v4088
        %v4235 = vpack.c.bf16 %v4090, %v4090
        %v4236 = vpack.c.bf16 %v4093, %v4093
        %v4237 = vpack.c.bf16 %v4095, %v4095
        %v4238 = vpack.c.bf16 %v4098, %v4098
        %v4239 = vpack.c.bf16 %v4100, %v4100
        %v4240 = vpack.c.bf16 %v4103, %v4103
        %v4241 = vpack.c.bf16 %v4105, %v4105
        %v4242 = vpack.c.bf16 %v4108, %v4108
        %v4243 = vpack.c.bf16 %v4110, %v4110
        %v4244 = vpack.c.bf16 %v4113, %v4113
        %v4245 = vpack.c.bf16 %v4115, %v4115
        %v4246 = vpack.c.bf16 %v4118, %v4118
        %v4247 = vpack.c.bf16 %v4120, %v4120
        %v4248 = vpack.c.bf16 %v4123, %v4123
        %v4249 = vpack.c.bf16 %v4125, %v4125
        %v4250 = vpack.c.bf16 %v4128, %v4128
        %v4251 = vpack.c.bf16 %v4130, %v4130
        %v4252 = vpack.c.bf16 %v4133, %v4133
        %v4253 = vpack.c.bf16 %v4135, %v4135
        %v4254 = vpack.c.bf16 %v4138, %v4138
        %v4255 = vpack.c.bf16 %v4140, %v4140
        %v4256 = vpack.c.bf16 %v4143, %v4143
        %v4257 = vpack.c.bf16 %v4145, %v4145
        %v4258 = vpack.c.bf16 %v4148, %v4148
        %v4259 = vpack.c.bf16 %v4150, %v4150
        %v4260 = vpack.c.bf16 %v4153, %v4153
        %v4261 = vpack.c.bf16 %v4155, %v4155
        %v4262 = vpack.c.bf16 %v4158, %v4158
        %v4263 = vpack.c.bf16 %v4160, %v4160
        %v4264 = vpack.c.bf16 %v4163, %v4163
        %v4265 = vpack.c.bf16 %v4165, %v4165
        %v4266 = vpack.c.bf16 %v4168, %v4168
        %v4267 = vpack.c.bf16 %v4170, %v4170
        %v4268 = vpack.c.bf16 %v4173, %v4173
        %v4269 = vpack.c.bf16 %v4175, %v4175
        %v4270 = vpack.c.bf16 %v4178, %v4178
        %v4271 = vpack.c.bf16 %v4180, %v4180
        %v4272 = vpack.c.bf16 %v4183, %v4183
        %v4273 = vpack.c.bf16 %v4185, %v4185
        %v4274 = vpack.c.bf16 %v4188, %v4188
        %v4275 = vpack.c.bf16 %v4190, %v4190
        %v4276 = vpack.c.bf16 %v4193, %v4193
        %v4277 = vpack.c.bf16 %v4195, %v4195
        %v4278 = vpack.c.bf16 %v4198, %v4198
        %v4279 = vpack.c.bf16 %v4200, %v4200
        %v4280 = vpack.c.bf16 %v4203, %v4203
        %v4281 = vpack.c.bf16 %v4205, %v4205
        %v4282 = vpack.c.bf16 %v4208, %v4208
        %v4283 = vpack.c.bf16 %v4210, %v4210
        %v4284 = vld [vmem:[%s11] sm:$0xf]
        %v4285 = vld [vmem:[%s11 + $0x4] sm:$0xf]
        %s4286 = scalar_lea.vmem %s11, 8
        %v4287 = vld [vmem:[%s4286] sm:$0xf]
        %v4288 = vld [vmem:[%s4286 + $0x4] sm:$0xf]
        %v4297 = vunpack.c.l.b16 %v4220
        %v4298 = vunpack.c.l.b16 %v4221
        %v4299 = vunpack.c.l.b16 %v4222
        %v4300 = vunpack.c.l.b16 %v4223
        %v4301 = vunpack.c.l.b16 %v4224
        %v4302 = vunpack.c.l.b16 %v4225
        %v4303 = vunpack.c.l.b16 %v4226
        %v4304 = vunpack.c.l.b16 %v4227
        %v4305 = vpack.c.b16 %v4298, %v4297
        %v4306 = vpack.c.b16 %v4300, %v4299
        %v4307 = vpack.c.b16 %v4302, %v4301
        %v4308 = vpack.c.b16 %v4304, %v4303
        %v4311 = vunpack.c.l.b16 %v4287
        %v4312 = vunpack.c.l.b16 %v4288
        %v4313 = vpack.c.b16 %v4312, %v4311
        %v4316 = vsel %vm2798, %v4305, 0
        %v4319 = vsel %vm2798, %v4306, 0
        %v4322 = vsel %vm2798, %v4307, 0
        %v4325 = vsel %vm2798, %v4308, 0
        %4327 = vmatpush.bf16.msra.mxu0 0
        %4328 = vmatpush.bf16.msra.mxu0 0
        %4329 = vmatpush.bf16.msra.mxu0 0
        %4330 = vmatpush.bf16.msra.mxu0 0
        %4331 = vmatpush.bf16.msra.mxu0 0
        %4332 = vmatpush.bf16.msra.mxu0 0
        %4333 = vmatpush.bf16.msra.mxu0 0
        %4334 = vmatpush.bf16.msra.mxu0 %v4313
        %4335 = vmatmul.bf16.gmra.mxu0 %v4316
        %v4336 = vpop.f32.mrf.mxu0
        %v4337 = vadd.f32 0.0, %v4336
        %v4338 = vpop.f32.mrf.mxu0
        %v4339 = vadd.f32 0.0, %v4338
        %4340 = vmatmul.bf16.gmra.mxu0 %v4319
        %v4341 = vpop.f32.mrf.mxu0
        %v4342 = vadd.f32 0.0, %v4341
        %v4343 = vpop.f32.mrf.mxu0
        %v4344 = vadd.f32 0.0, %v4343
        %4345 = vmatmul.bf16.gmra.mxu0 %v4322
        %v4346 = vpop.f32.mrf.mxu0
        %v4347 = vadd.f32 0.0, %v4346
        %v4348 = vpop.f32.mrf.mxu0
        %v4349 = vadd.f32 0.0, %v4348
        %4350 = vmatmul.bf16.gmra.mxu0 %v4325
        %v4351 = vpop.f32.mrf.mxu0
        %v4352 = vadd.f32 0.0, %v4351
        %v4353 = vpop.f32.mrf.mxu0
        %v4354 = vadd.f32 0.0, %v4353
        %4355 = vdwg.mxu0
        %v4364 = vunpack.c.l.b16 %v4212
        %v4365 = vunpack.c.l.b16 %v4213
        %v4366 = vunpack.c.l.b16 %v4214
        %v4367 = vunpack.c.l.b16 %v4215
        %v4368 = vunpack.c.l.b16 %v4216
        %v4369 = vunpack.c.l.b16 %v4217
        %v4370 = vunpack.c.l.b16 %v4218
        %v4371 = vunpack.c.l.b16 %v4219
        %v4372 = vpack.c.b16 %v4365, %v4364
        %v4373 = vpack.c.b16 %v4367, %v4366
        %v4374 = vpack.c.b16 %v4369, %v4368
        %v4375 = vpack.c.b16 %v4371, %v4370
        %v4378 = vunpack.c.l.b16 %v4284
        %v4379 = vunpack.c.l.b16 %v4285
        %v4380 = vpack.c.b16 %v4379, %v4378
        %v4383 = vsel %vm2798, %v4372, 0
        %v4386 = vsel %vm2798, %v4373, 0
        %v4389 = vsel %vm2798, %v4374, 0
        %v4392 = vsel %vm2798, %v4375, 0
        %4394 = vmatpush.bf16.msra.mxu0 0
        %4395 = vmatpush.bf16.msra.mxu0 0
        %4396 = vmatpush.bf16.msra.mxu0 0
        %4397 = vmatpush.bf16.msra.mxu0 0
        %4398 = vmatpush.bf16.msra.mxu0 0
        %4399 = vmatpush.bf16.msra.mxu0 0
        %4400 = vmatpush.bf16.msra.mxu0 0
        %4401 = vmatpush.bf16.msra.mxu0 %v4380
        %4402 = vmatmul.bf16.gmra.mxu0 %v4383
        %v4403 = vpop.f32.mrf.mxu0
        %v4404 = vadd.f32 %v4337, %v4403
        %v4405 = vpop.f32.mrf.mxu0
        %v4406 = vadd.f32 %v4339, %v4405
        %4407 = vmatmul.bf16.gmra.mxu0 %v4386
        %v4408 = vpop.f32.mrf.mxu0
        %v4409 = vadd.f32 %v4342, %v4408
        %v4410 = vpop.f32.mrf.mxu0
        %v4411 = vadd.f32 %v4344, %v4410
        %4412 = vmatmul.bf16.gmra.mxu0 %v4389
        %v4413 = vpop.f32.mrf.mxu0
        %v4414 = vadd.f32 %v4347, %v4413
        %v4415 = vpop.f32.mrf.mxu0
        %v4416 = vadd.f32 %v4349, %v4415
        %4417 = vmatmul.bf16.gmra.mxu0 %v4392
        %v4418 = vpop.f32.mrf.mxu0
        %v4419 = vadd.f32 %v4352, %v4418
        %v4420 = vpop.f32.mrf.mxu0
        %v4421 = vadd.f32 %v4354, %v4420
        %4422 = vdwg.mxu0
        %s4423 = scalar_lea.vmem %s11, 16
        %v4424 = vld [vmem:[%s4423] sm:$0xf]
        %v4425 = vld [vmem:[%s4423 + $0x4] sm:$0xf]
        %v4434 = vunpack.c.l.b16 %v4228
        %v4435 = vunpack.c.l.b16 %v4229
        %v4436 = vunpack.c.l.b16 %v4230
        %v4437 = vunpack.c.l.b16 %v4231
        %v4438 = vunpack.c.l.b16 %v4232
        %v4439 = vunpack.c.l.b16 %v4233
        %v4440 = vunpack.c.l.b16 %v4234
        %v4441 = vunpack.c.l.b16 %v4235
        %v4442 = vpack.c.b16 %v4435, %v4434
        %v4443 = vpack.c.b16 %v4437, %v4436
        %v4444 = vpack.c.b16 %v4439, %v4438
        %v4445 = vpack.c.b16 %v4441, %v4440
        %v4448 = vunpack.c.l.b16 %v4424
        %v4449 = vunpack.c.l.b16 %v4425
        %v4450 = vpack.c.b16 %v4449, %v4448
        %v4453 = vsel %vm2798, %v4442, 0
        %v4456 = vsel %vm2798, %v4443, 0
        %v4459 = vsel %vm2798, %v4444, 0
        %v4462 = vsel %vm2798, %v4445, 0
        %4464 = vmatpush.bf16.msra.mxu0 0
        %4465 = vmatpush.bf16.msra.mxu0 0
        %4466 = vmatpush.bf16.msra.mxu0 0
        %4467 = vmatpush.bf16.msra.mxu0 0
        %4468 = vmatpush.bf16.msra.mxu0 0
        %4469 = vmatpush.bf16.msra.mxu0 0
        %4470 = vmatpush.bf16.msra.mxu0 0
        %4471 = vmatpush.bf16.msra.mxu0 %v4450
        %4472 = vmatmul.bf16.gmra.mxu0 %v4453
        %v4473 = vpop.f32.mrf.mxu0
        %v4474 = vadd.f32 0.0, %v4473
        %v4475 = vpop.f32.mrf.mxu0
        %v4476 = vadd.f32 0.0, %v4475
        %4477 = vmatmul.bf16.gmra.mxu0 %v4456
        %v4478 = vpop.f32.mrf.mxu0
        %v4479 = vadd.f32 0.0, %v4478
        %v4480 = vpop.f32.mrf.mxu0
        %v4481 = vadd.f32 0.0, %v4480
        %4482 = vmatmul.bf16.gmra.mxu0 %v4459
        %v4483 = vpop.f32.mrf.mxu0
        %v4484 = vadd.f32 0.0, %v4483
        %v4485 = vpop.f32.mrf.mxu0
        %v4486 = vadd.f32 0.0, %v4485
        %4487 = vmatmul.bf16.gmra.mxu0 %v4462
        %v4488 = vpop.f32.mrf.mxu0
        %v4489 = vadd.f32 0.0, %v4488
        %v4490 = vpop.f32.mrf.mxu0
        %v4491 = vadd.f32 0.0, %v4490
        %4492 = vdwg.mxu0
        %v4493 = vadd.f32 %v4404, %v4474
        %v4494 = vadd.f32 %v4406, %v4476
        %v4495 = vadd.f32 %v4409, %v4479
        %v4496 = vadd.f32 %v4411, %v4481
        %v4497 = vadd.f32 %v4414, %v4484
        %v4498 = vadd.f32 %v4416, %v4486
        %v4499 = vadd.f32 %v4419, %v4489
        %v4500 = vadd.f32 %v4421, %v4491
        %s4501 = scalar_lea.vmem %s11, 24
        %v4502 = vld [vmem:[%s4501] sm:$0xf]
        %v4503 = vld [vmem:[%s4501 + $0x4] sm:$0xf]
        %v4512 = vunpack.c.l.b16 %v4236
        %v4513 = vunpack.c.l.b16 %v4237
        %v4514 = vunpack.c.l.b16 %v4238
        %v4515 = vunpack.c.l.b16 %v4239
        %v4516 = vunpack.c.l.b16 %v4240
        %v4517 = vunpack.c.l.b16 %v4241
        %v4518 = vunpack.c.l.b16 %v4242
        %v4519 = vunpack.c.l.b16 %v4243
        %v4520 = vpack.c.b16 %v4513, %v4512
        %v4521 = vpack.c.b16 %v4515, %v4514
        %v4522 = vpack.c.b16 %v4517, %v4516
        %v4523 = vpack.c.b16 %v4519, %v4518
        %v4526 = vunpack.c.l.b16 %v4502
        %v4527 = vunpack.c.l.b16 %v4503
        %v4528 = vpack.c.b16 %v4527, %v4526
        %v4531 = vsel %vm2798, %v4520, 0
        %v4534 = vsel %vm2798, %v4521, 0
        %v4537 = vsel %vm2798, %v4522, 0
        %v4540 = vsel %vm2798, %v4523, 0
        %4542 = vmatpush.bf16.msra.mxu0 0
        %4543 = vmatpush.bf16.msra.mxu0 0
        %4544 = vmatpush.bf16.msra.mxu0 0
        %4545 = vmatpush.bf16.msra.mxu0 0
        %4546 = vmatpush.bf16.msra.mxu0 0
        %4547 = vmatpush.bf16.msra.mxu0 0
        %4548 = vmatpush.bf16.msra.mxu0 0
        %4549 = vmatpush.bf16.msra.mxu0 %v4528
        %4550 = vmatmul.bf16.gmra.mxu0 %v4531
        %v4551 = vpop.f32.mrf.mxu0
        %v4552 = vadd.f32 0.0, %v4551
        %v4553 = vpop.f32.mrf.mxu0
        %v4554 = vadd.f32 0.0, %v4553
        %4555 = vmatmul.bf16.gmra.mxu0 %v4534
        %v4556 = vpop.f32.mrf.mxu0
        %v4557 = vadd.f32 0.0, %v4556
        %v4558 = vpop.f32.mrf.mxu0
        %v4559 = vadd.f32 0.0, %v4558
        %4560 = vmatmul.bf16.gmra.mxu0 %v4537
        %v4561 = vpop.f32.mrf.mxu0
        %v4562 = vadd.f32 0.0, %v4561
        %v4563 = vpop.f32.mrf.mxu0
        %v4564 = vadd.f32 0.0, %v4563
        %4565 = vmatmul.bf16.gmra.mxu0 %v4540
        %v4566 = vpop.f32.mrf.mxu0
        %v4567 = vadd.f32 0.0, %v4566
        %v4568 = vpop.f32.mrf.mxu0
        %v4569 = vadd.f32 0.0, %v4568
        %4570 = vdwg.mxu0
        %v4571 = vadd.f32 %v4493, %v4552
        %v4572 = vadd.f32 %v4494, %v4554
        %v4573 = vadd.f32 %v4495, %v4557
        %v4574 = vadd.f32 %v4496, %v4559
        %v4575 = vadd.f32 %v4497, %v4562
        %v4576 = vadd.f32 %v4498, %v4564
        %v4577 = vadd.f32 %v4499, %v4567
        %v4578 = vadd.f32 %v4500, %v4569
        %s4579 = scalar_lea.vmem %s11, 32
        %v4580 = vld [vmem:[%s4579] sm:$0xf]
        %v4581 = vld [vmem:[%s4579 + $0x4] sm:$0xf]
        %v4590 = vunpack.c.l.b16 %v4244
        %v4591 = vunpack.c.l.b16 %v4245
        %v4592 = vunpack.c.l.b16 %v4246
        %v4593 = vunpack.c.l.b16 %v4247
        %v4594 = vunpack.c.l.b16 %v4248
        %v4595 = vunpack.c.l.b16 %v4249
        %v4596 = vunpack.c.l.b16 %v4250
        %v4597 = vunpack.c.l.b16 %v4251
        %v4598 = vpack.c.b16 %v4591, %v4590
        %v4599 = vpack.c.b16 %v4593, %v4592
        %v4600 = vpack.c.b16 %v4595, %v4594
        %v4601 = vpack.c.b16 %v4597, %v4596
        %v4604 = vunpack.c.l.b16 %v4580
        %v4605 = vunpack.c.l.b16 %v4581
        %v4606 = vpack.c.b16 %v4605, %v4604
        %v4609 = vsel %vm2798, %v4598, 0
        %v4612 = vsel %vm2798, %v4599, 0
        %v4615 = vsel %vm2798, %v4600, 0
        %v4618 = vsel %vm2798, %v4601, 0
        %4620 = vmatpush.bf16.msra.mxu0 0
        %4621 = vmatpush.bf16.msra.mxu0 0
        %4622 = vmatpush.bf16.msra.mxu0 0
        %4623 = vmatpush.bf16.msra.mxu0 0
        %4624 = vmatpush.bf16.msra.mxu0 0
        %4625 = vmatpush.bf16.msra.mxu0 0
        %4626 = vmatpush.bf16.msra.mxu0 0
        %4627 = vmatpush.bf16.msra.mxu0 %v4606
        %4628 = vmatmul.bf16.gmra.mxu0 %v4609
        %v4629 = vpop.f32.mrf.mxu0
        %v4630 = vadd.f32 0.0, %v4629
        %v4631 = vpop.f32.mrf.mxu0
        %v4632 = vadd.f32 0.0, %v4631
        %4633 = vmatmul.bf16.gmra.mxu0 %v4612
        %v4634 = vpop.f32.mrf.mxu0
        %v4635 = vadd.f32 0.0, %v4634
        %v4636 = vpop.f32.mrf.mxu0
        %v4637 = vadd.f32 0.0, %v4636
        %4638 = vmatmul.bf16.gmra.mxu0 %v4615
        %v4639 = vpop.f32.mrf.mxu0
        %v4640 = vadd.f32 0.0, %v4639
        %v4641 = vpop.f32.mrf.mxu0
        %v4642 = vadd.f32 0.0, %v4641
        %4643 = vmatmul.bf16.gmra.mxu0 %v4618
        %v4644 = vpop.f32.mrf.mxu0
        %v4645 = vadd.f32 0.0, %v4644
        %v4646 = vpop.f32.mrf.mxu0
        %v4647 = vadd.f32 0.0, %v4646
        %4648 = vdwg.mxu0
        %v4649 = vadd.f32 %v4571, %v4630
        %v4650 = vadd.f32 %v4572, %v4632
        %v4651 = vadd.f32 %v4573, %v4635
        %v4652 = vadd.f32 %v4574, %v4637
        %v4653 = vadd.f32 %v4575, %v4640
        %v4654 = vadd.f32 %v4576, %v4642
        %v4655 = vadd.f32 %v4577, %v4645
        %v4656 = vadd.f32 %v4578, %v4647
        %s4657 = scalar_lea.vmem %s11, 40
        %v4658 = vld [vmem:[%s4657] sm:$0xf]
        %v4659 = vld [vmem:[%s4657 + $0x4] sm:$0xf]
        %v4668 = vunpack.c.l.b16 %v4252
        %v4669 = vunpack.c.l.b16 %v4253
        %v4670 = vunpack.c.l.b16 %v4254
        %v4671 = vunpack.c.l.b16 %v4255
        %v4672 = vunpack.c.l.b16 %v4256
        %v4673 = vunpack.c.l.b16 %v4257
        %v4674 = vunpack.c.l.b16 %v4258
        %v4675 = vunpack.c.l.b16 %v4259
        %v4676 = vpack.c.b16 %v4669, %v4668
        %v4677 = vpack.c.b16 %v4671, %v4670
        %v4678 = vpack.c.b16 %v4673, %v4672
        %v4679 = vpack.c.b16 %v4675, %v4674
        %v4682 = vunpack.c.l.b16 %v4658
        %v4683 = vunpack.c.l.b16 %v4659
        %v4684 = vpack.c.b16 %v4683, %v4682
        %v4687 = vsel %vm2798, %v4676, 0
        %v4690 = vsel %vm2798, %v4677, 0
        %v4693 = vsel %vm2798, %v4678, 0
        %v4696 = vsel %vm2798, %v4679, 0
        %4698 = vmatpush.bf16.msra.mxu0 0
        %4699 = vmatpush.bf16.msra.mxu0 0
        %4700 = vmatpush.bf16.msra.mxu0 0
        %4701 = vmatpush.bf16.msra.mxu0 0
        %4702 = vmatpush.bf16.msra.mxu0 0
        %4703 = vmatpush.bf16.msra.mxu0 0
        %4704 = vmatpush.bf16.msra.mxu0 0
        %4705 = vmatpush.bf16.msra.mxu0 %v4684
        %4706 = vmatmul.bf16.gmra.mxu0 %v4687
        %v4707 = vpop.f32.mrf.mxu0
        %v4708 = vadd.f32 0.0, %v4707
        %v4709 = vpop.f32.mrf.mxu0
        %v4710 = vadd.f32 0.0, %v4709
        %4711 = vmatmul.bf16.gmra.mxu0 %v4690
        %v4712 = vpop.f32.mrf.mxu0
        %v4713 = vadd.f32 0.0, %v4712
        %v4714 = vpop.f32.mrf.mxu0
        %v4715 = vadd.f32 0.0, %v4714
        %4716 = vmatmul.bf16.gmra.mxu0 %v4693
        %v4717 = vpop.f32.mrf.mxu0
        %v4718 = vadd.f32 0.0, %v4717
        %v4719 = vpop.f32.mrf.mxu0
        %v4720 = vadd.f32 0.0, %v4719
        %4721 = vmatmul.bf16.gmra.mxu0 %v4696
        %v4722 = vpop.f32.mrf.mxu0
        %v4723 = vadd.f32 0.0, %v4722
        %v4724 = vpop.f32.mrf.mxu0
        %v4725 = vadd.f32 0.0, %v4724
        %4726 = vdwg.mxu0
        %v4727 = vadd.f32 %v4649, %v4708
        %v4728 = vadd.f32 %v4650, %v4710
        %v4729 = vadd.f32 %v4651, %v4713
        %v4730 = vadd.f32 %v4652, %v4715
        %v4731 = vadd.f32 %v4653, %v4718
        %v4732 = vadd.f32 %v4654, %v4720
        %v4733 = vadd.f32 %v4655, %v4723
        %v4734 = vadd.f32 %v4656, %v4725
        %s4735 = scalar_lea.vmem %s11, 48
        %v4736 = vld [vmem:[%s4735] sm:$0xf]
        %v4737 = vld [vmem:[%s4735 + $0x4] sm:$0xf]
        %v4746 = vunpack.c.l.b16 %v4260
        %v4747 = vunpack.c.l.b16 %v4261
        %v4748 = vunpack.c.l.b16 %v4262
        %v4749 = vunpack.c.l.b16 %v4263
        %v4750 = vunpack.c.l.b16 %v4264
        %v4751 = vunpack.c.l.b16 %v4265
        %v4752 = vunpack.c.l.b16 %v4266
        %v4753 = vunpack.c.l.b16 %v4267
        %v4754 = vpack.c.b16 %v4747, %v4746
        %v4755 = vpack.c.b16 %v4749, %v4748
        %v4756 = vpack.c.b16 %v4751, %v4750
        %v4757 = vpack.c.b16 %v4753, %v4752
        %v4760 = vunpack.c.l.b16 %v4736
        %v4761 = vunpack.c.l.b16 %v4737
        %v4762 = vpack.c.b16 %v4761, %v4760
        %v4765 = vsel %vm2798, %v4754, 0
        %v4768 = vsel %vm2798, %v4755, 0
        %v4771 = vsel %vm2798, %v4756, 0
        %v4774 = vsel %vm2798, %v4757, 0
        %4776 = vmatpush.bf16.msra.mxu0 0
        %4777 = vmatpush.bf16.msra.mxu0 0
        %4778 = vmatpush.bf16.msra.mxu0 0
        %4779 = vmatpush.bf16.msra.mxu0 0
        %4780 = vmatpush.bf16.msra.mxu0 0
        %4781 = vmatpush.bf16.msra.mxu0 0
        %4782 = vmatpush.bf16.msra.mxu0 0
        %4783 = vmatpush.bf16.msra.mxu0 %v4762
        %4784 = vmatmul.bf16.gmra.mxu0 %v4765
        %v4785 = vpop.f32.mrf.mxu0
        %v4786 = vadd.f32 0.0, %v4785
        %v4787 = vpop.f32.mrf.mxu0
        %v4788 = vadd.f32 0.0, %v4787
        %4789 = vmatmul.bf16.gmra.mxu0 %v4768
        %v4790 = vpop.f32.mrf.mxu0
        %v4791 = vadd.f32 0.0, %v4790
        %v4792 = vpop.f32.mrf.mxu0
        %v4793 = vadd.f32 0.0, %v4792
        %4794 = vmatmul.bf16.gmra.mxu0 %v4771
        %v4795 = vpop.f32.mrf.mxu0
        %v4796 = vadd.f32 0.0, %v4795
        %v4797 = vpop.f32.mrf.mxu0
        %v4798 = vadd.f32 0.0, %v4797
        %4799 = vmatmul.bf16.gmra.mxu0 %v4774
        %v4800 = vpop.f32.mrf.mxu0
        %v4801 = vadd.f32 0.0, %v4800
        %v4802 = vpop.f32.mrf.mxu0
        %v4803 = vadd.f32 0.0, %v4802
        %4804 = vdwg.mxu0
        %v4805 = vadd.f32 %v4727, %v4786
        %v4806 = vadd.f32 %v4728, %v4788
        %v4807 = vadd.f32 %v4729, %v4791
        %v4808 = vadd.f32 %v4730, %v4793
        %v4809 = vadd.f32 %v4731, %v4796
        %v4810 = vadd.f32 %v4732, %v4798
        %v4811 = vadd.f32 %v4733, %v4801
        %v4812 = vadd.f32 %v4734, %v4803
        %s4813 = scalar_lea.vmem %s11, 56
        %v4814 = vld [vmem:[%s4813] sm:$0xf]
        %v4815 = vld [vmem:[%s4813 + $0x4] sm:$0xf]
        %v4824 = vunpack.c.l.b16 %v4268
        %v4825 = vunpack.c.l.b16 %v4269
        %v4826 = vunpack.c.l.b16 %v4270
        %v4827 = vunpack.c.l.b16 %v4271
        %v4828 = vunpack.c.l.b16 %v4272
        %v4829 = vunpack.c.l.b16 %v4273
        %v4830 = vunpack.c.l.b16 %v4274
        %v4831 = vunpack.c.l.b16 %v4275
        %v4832 = vpack.c.b16 %v4825, %v4824
        %v4833 = vpack.c.b16 %v4827, %v4826
        %v4834 = vpack.c.b16 %v4829, %v4828
        %v4835 = vpack.c.b16 %v4831, %v4830
        %v4838 = vunpack.c.l.b16 %v4814
        %v4839 = vunpack.c.l.b16 %v4815
        %v4840 = vpack.c.b16 %v4839, %v4838
        %v4843 = vsel %vm2798, %v4832, 0
        %v4846 = vsel %vm2798, %v4833, 0
        %v4849 = vsel %vm2798, %v4834, 0
        %v4852 = vsel %vm2798, %v4835, 0
        %4854 = vmatpush.bf16.msra.mxu0 0
        %4855 = vmatpush.bf16.msra.mxu0 0
        %4856 = vmatpush.bf16.msra.mxu0 0
        %4857 = vmatpush.bf16.msra.mxu0 0
        %4858 = vmatpush.bf16.msra.mxu0 0
        %4859 = vmatpush.bf16.msra.mxu0 0
        %4860 = vmatpush.bf16.msra.mxu0 0
        %4861 = vmatpush.bf16.msra.mxu0 %v4840
        %4862 = vmatmul.bf16.gmra.mxu0 %v4843
        %v4863 = vpop.f32.mrf.mxu0
        %v4864 = vadd.f32 0.0, %v4863
        %v4865 = vpop.f32.mrf.mxu0
        %v4866 = vadd.f32 0.0, %v4865
        %4867 = vmatmul.bf16.gmra.mxu0 %v4846
        %v4868 = vpop.f32.mrf.mxu0
        %v4869 = vadd.f32 0.0, %v4868
        %v4870 = vpop.f32.mrf.mxu0
        %v4871 = vadd.f32 0.0, %v4870
        %4872 = vmatmul.bf16.gmra.mxu0 %v4849
        %v4873 = vpop.f32.mrf.mxu0
        %v4874 = vadd.f32 0.0, %v4873
        %v4875 = vpop.f32.mrf.mxu0
        %v4876 = vadd.f32 0.0, %v4875
        %4877 = vmatmul.bf16.gmra.mxu0 %v4852
        %v4878 = vpop.f32.mrf.mxu0
        %v4879 = vadd.f32 0.0, %v4878
        %v4880 = vpop.f32.mrf.mxu0
        %v4881 = vadd.f32 0.0, %v4880
        %4882 = vdwg.mxu0
        %v4883 = vadd.f32 %v4805, %v4864
        %v4884 = vadd.f32 %v4806, %v4866
        %v4885 = vadd.f32 %v4807, %v4869
        %v4886 = vadd.f32 %v4808, %v4871
        %v4887 = vadd.f32 %v4809, %v4874
        %v4888 = vadd.f32 %v4810, %v4876
        %v4889 = vadd.f32 %v4811, %v4879
        %v4890 = vadd.f32 %v4812, %v4881
        %s4891 = scalar_lea.vmem %s11, 64
        %v4892 = vld [vmem:[%s4891] sm:$0xf]
        %v4893 = vld [vmem:[%s4891 + $0x4] sm:$0xf]
        %v4902 = vunpack.c.l.b16 %v4276
        %v4903 = vunpack.c.l.b16 %v4277
        %v4904 = vunpack.c.l.b16 %v4278
        %v4905 = vunpack.c.l.b16 %v4279
        %v4906 = vunpack.c.l.b16 %v4280
        %v4907 = vunpack.c.l.b16 %v4281
        %v4908 = vunpack.c.l.b16 %v4282
        %v4909 = vunpack.c.l.b16 %v4283
        %v4910 = vpack.c.b16 %v4903, %v4902
        %v4911 = vpack.c.b16 %v4905, %v4904
        %v4912 = vpack.c.b16 %v4907, %v4906
        %v4913 = vpack.c.b16 %v4909, %v4908
        %v4916 = vunpack.c.l.b16 %v4892
        %v4917 = vunpack.c.l.b16 %v4893
        %v4918 = vpack.c.b16 %v4917, %v4916
        %v4921 = vsel %vm2798, %v4910, 0
        %v4924 = vsel %vm2798, %v4911, 0
        %v4927 = vsel %vm2798, %v4912, 0
        %v4930 = vsel %vm2798, %v4913, 0
        %4932 = vmatpush.bf16.msra.mxu0 0
        %4933 = vmatpush.bf16.msra.mxu0 0
        %4934 = vmatpush.bf16.msra.mxu0 0
        %4935 = vmatpush.bf16.msra.mxu0 0
        %4936 = vmatpush.bf16.msra.mxu0 0
        %4937 = vmatpush.bf16.msra.mxu0 0
        %4938 = vmatpush.bf16.msra.mxu0 0
        %4939 = vmatpush.bf16.msra.mxu0 %v4918
        %4940 = vmatmul.bf16.gmra.mxu0 %v4921
        %v4941 = vpop.f32.mrf.mxu0
        %v4942 = vadd.f32 0.0, %v4941
        %v4943 = vpop.f32.mrf.mxu0
        %v4944 = vadd.f32 0.0, %v4943
        %4945 = vmatmul.bf16.gmra.mxu0 %v4924
        %v4946 = vpop.f32.mrf.mxu0
        %v4947 = vadd.f32 0.0, %v4946
        %v4948 = vpop.f32.mrf.mxu0
        %v4949 = vadd.f32 0.0, %v4948
        %4950 = vmatmul.bf16.gmra.mxu0 %v4927
        %v4951 = vpop.f32.mrf.mxu0
        %v4952 = vadd.f32 0.0, %v4951
        %v4953 = vpop.f32.mrf.mxu0
        %v4954 = vadd.f32 0.0, %v4953
        %4955 = vmatmul.bf16.gmra.mxu0 %v4930
        %v4956 = vpop.f32.mrf.mxu0
        %v4957 = vadd.f32 0.0, %v4956
        %v4958 = vpop.f32.mrf.mxu0
        %v4959 = vadd.f32 0.0, %v4958
        %4960 = vdwg.mxu0
        %v4961 = vadd.f32 %v4883, %v4942
        %v4962 = vadd.f32 %v4884, %v4944
        %v4963 = vadd.f32 %v4885, %v4947
        %v4964 = vadd.f32 %v4886, %v4949
        %v4965 = vadd.f32 %v4887, %v4952
        %v4966 = vadd.f32 %v4888, %v4954
        %v4967 = vadd.f32 %v4889, %v4957
        %v4968 = vadd.f32 %v4890, %v4959
        %v4969 = vld [vmem:[%s10] sm:$0xff]
        %v4970 = vld [vmem:[%s10 + $0x8] sm:$0xff]
        %v4971 = vld [vmem:[%s10 + $0x10] sm:$0xff]
        %v4972 = vld [vmem:[%s10 + $0x18] sm:$0xff]
        %v4973 = vld [vmem:[%s10 + $0x20] sm:$0xff]
        %v4974 = vld [vmem:[%s10 + $0x28] sm:$0xff]
        %v4975 = vld [vmem:[%s10 + $0x30] sm:$0xff]
        %v4976 = vld [vmem:[%s10 + $0x38] sm:$0xff]
        %4978 = vset.pattern.permute.xlu0 0
        %4979 = vperm.xlu0 %4978, %v4969
        %v4980 = vpop.permute.xlu0 %4979
        %4983 = vset.pattern.permute.xlu0 0
        %4984 = vperm.xlu0 %4983, %v4970
        %v4985 = vpop.permute.xlu0 %4984
        %4988 = vset.pattern.permute.xlu0 0
        %4989 = vperm.xlu0 %4988, %v4971
        %v4990 = vpop.permute.xlu0 %4989
        %4993 = vset.pattern.permute.xlu0 0
        %4994 = vperm.xlu0 %4993, %v4972
        %v4995 = vpop.permute.xlu0 %4994
        %4998 = vset.pattern.permute.xlu0 0
        %4999 = vperm.xlu0 %4998, %v4973
        %v5000 = vpop.permute.xlu0 %4999
        %5003 = vset.pattern.permute.xlu0 0
        %5004 = vperm.xlu0 %5003, %v4974
        %v5005 = vpop.permute.xlu0 %5004
        %5008 = vset.pattern.permute.xlu0 0
        %5009 = vperm.xlu0 %5008, %v4975
        %v5010 = vpop.permute.xlu0 %5009
        %5013 = vset.pattern.permute.xlu0 0
        %5014 = vperm.xlu0 %5013, %v4976
        %v5015 = vpop.permute.xlu0 %5014
        %v5017 = vadd.f32 %v4961, %v4980
        %v5018 = vadd.f32 %v4962, %v4985
        %v5019 = vadd.f32 %v4963, %v4990
        %v5020 = vadd.f32 %v4964, %v4995
        %v5021 = vadd.f32 %v4965, %v5000
        %v5022 = vadd.f32 %v4966, %v5005
        %v5023 = vadd.f32 %v4967, %v5010
        %v5024 = vadd.f32 %v4968, %v5015
        %v5025 = vmax.f32 %v5017, 0.0
        %v5026 = vmax.f32 %v5018, 0.0
        %v5027 = vmax.f32 %v5019, 0.0
        %v5028 = vmax.f32 %v5020, 0.0
        %v5029 = vmax.f32 %v5021, 0.0
        %v5030 = vmax.f32 %v5022, 0.0
        %v5031 = vmax.f32 %v5023, 0.0
        %v5032 = vmax.f32 %v5024, 0.0
        %v5033 = vld [vmem:[%s16] sm:$0xff]
        %v5034 = vld [vmem:[%s16 + $0x8] sm:$0xff]
        %v5035 = vld [vmem:[%s16 + $0x10] sm:$0xff]
        %v5036 = vld [vmem:[%s16 + $0x18] sm:$0xff]
        %v5037 = vld [vmem:[%s16 + $0x20] sm:$0xff]
        %v5038 = vld [vmem:[%s16 + $0x28] sm:$0xff]
        %v5039 = vld [vmem:[%s16 + $0x30] sm:$0xff]
        %v5040 = vld [vmem:[%s16 + $0x38] sm:$0xff]
        %v5041 = vld [vmem:[%s12] sm:$0xf]
        %v5042 = vld [vmem:[%s12 + $0x4] sm:$0xf]
        %5044 = vset.pattern.permute.xlu0 0
        %5045 = vperm.xlu0 %5044, %v5033
        %v5046 = vpop.permute.xlu0 %5045
        %5049 = vset.pattern.permute.xlu0 0
        %5050 = vperm.xlu0 %5049, %v5034
        %v5051 = vpop.permute.xlu0 %5050
        %v5055 = vunpack.c.l.b16 %v5041
        %v5056 = vunpack.c.l.b16 %v5042
        %v5057 = vpack.c.b16 %v5056, %v5055
        %v5059 = vsel %vm978, %v5057, 0
        %5061 = vmatpush.bf16.msra.mxu0 0
        %5062 = vmatpush.bf16.msra.mxu0 0
        %5063 = vmatpush.bf16.msra.mxu0 0
        %5064 = vmatpush.bf16.msra.mxu0 0
        %5065 = vmatpush.bf16.msra.mxu0 0
        %5066 = vmatpush.bf16.msra.mxu0 0
        %5067 = vmatpush.bf16.msra.mxu0 0
        %5068 = vmatpush.bf16.msra.mxu0 %v1008
        %5069 = vmatmul.bf16.gmra.mxu0 %v5059
        %v5070 = vpop.f32.mrf.mxu0
        %v5071 = vadd.f32 %v5046, %v5070
        %v5072 = vpop.f32.mrf.mxu0
        %v5073 = vadd.f32 %v5051, %v5072
        %5074 = vdwg.mxu0
        %5075 = vmatpush.bf16.msra.mxu0 0
        %5076 = vmatpush.bf16.msra.mxu0 0
        %5077 = vmatpush.bf16.msra.mxu0 0
        %5078 = vmatpush.bf16.msra.mxu0 0
        %5079 = vmatpush.bf16.msra.mxu0 0
        %5080 = vmatpush.bf16.msra.mxu0 0
        %5081 = vmatpush.bf16.msra.mxu0 0
        %5082 = vmatpush.bf16.msra.mxu0 %v1011
        %5083 = vmatmul.bf16.gmra.mxu0 %v5059
        %v5084 = vpop.f32.mrf.mxu0
        %v5085 = vadd.f32 %v5046, %v5084
        %v5086 = vpop.f32.mrf.mxu0
        %v5087 = vadd.f32 %v5051, %v5086
        %5088 = vdwg.mxu0
        %v5089 = vmax.f32 %v5071, 0.0
        %v5090 = vmax.f32 %v5085, 0.0
        %v5091 = vmax.f32 %v5073, 0.0
        %v5092 = vmax.f32 %v5087, 0.0
        %v5093 = vld [vmem:[%s13] sm:$0xf]
        %v5094 = vld [vmem:[%s13 + $0x4] sm:$0xf]
        %5096 = vset.pattern.permute.xlu0 0
        %5097 = vperm.xlu0 %5096, %v5035
        %v5098 = vpop.permute.xlu0 %5097
        %5101 = vset.pattern.permute.xlu0 0
        %5102 = vperm.xlu0 %5101, %v5036
        %v5103 = vpop.permute.xlu0 %5102
        %v5107 = vunpack.c.l.b16 %v5093
        %v5108 = vunpack.c.l.b16 %v5094
        %v5109 = vpack.c.b16 %v5108, %v5107
        %v5111 = vsel %vm2798, %v5109, 0
        %5113 = vmatpush.bf16.msra.mxu0 0
        %5114 = vmatpush.bf16.msra.mxu0 0
        %5115 = vmatpush.bf16.msra.mxu0 0
        %5116 = vmatpush.bf16.msra.mxu0 0
        %5117 = vmatpush.bf16.msra.mxu0 0
        %5118 = vmatpush.bf16.msra.mxu0 0
        %5119 = vmatpush.bf16.msra.mxu0 0
        %5120 = vmatpush.bf16.msra.mxu0 %v2707
        %5121 = vmatmul.bf16.gmra.mxu0 %v5111
        %v5122 = vpop.f32.mrf.mxu0
        %v5123 = vadd.f32 %v5098, %v5122
        %v5124 = vpop.f32.mrf.mxu0
        %v5125 = vadd.f32 %v5103, %v5124
        %5126 = vdwg.mxu0
        %v5127 = vmax.f32 %v5123, 0.0
        %v5128 = vmax.f32 %v5125, 0.0
        %v5129 = vld [vmem:[%s14] sm:$0xf]
        %v5130 = vld [vmem:[%s14 + $0x4] sm:$0xf]
        %5132 = vset.pattern.permute.xlu0 0
        %5133 = vperm.xlu0 %5132, %v5037
        %v5134 = vpop.permute.xlu0 %5133
        %5137 = vset.pattern.permute.xlu0 0
        %5138 = vperm.xlu0 %5137, %v5038
        %v5139 = vpop.permute.xlu0 %5138
        %v5143 = vunpack.c.l.b16 %v5129
        %v5144 = vunpack.c.l.b16 %v5130
        %v5145 = vpack.c.b16 %v5144, %v5143
        %v5147 = vsel %vm3914, %v5145, 0
        %5149 = vmatpush.bf16.msra.mxu0 0
        %5150 = vmatpush.bf16.msra.mxu0 0
        %5151 = vmatpush.bf16.msra.mxu0 0
        %5152 = vmatpush.bf16.msra.mxu0 0
        %5153 = vmatpush.bf16.msra.mxu0 0
        %5154 = vmatpush.bf16.msra.mxu0 0
        %5155 = vmatpush.bf16.msra.mxu0 %v3733
        %5156 = vmatpush.bf16.msra.mxu0 %v3732
        %5157 = vmatmul.bf16.gmra.mxu0 %v5147
        %v5158 = vpop.f32.mrf.mxu0
        %v5159 = vadd.f32 %v5134, %v5158
        %v5160 = vpop.f32.mrf.mxu0
        %v5161 = vadd.f32 %v5139, %v5160
        %5162 = vdwg.mxu0
        %v5163 = vmax.f32 %v5159, 0.0
        %v5164 = vmax.f32 %v5161, 0.0
        %v5165 = vld [vmem:[%s15] sm:$0xf]
        %v5166 = vld [vmem:[%s15 + $0x4] sm:$0xf]
        %v5167 = vpack.c.bf16 %v5026, %v5025
        %v5168 = vpack.c.bf16 %v5028, %v5027
        %v5169 = vpack.c.bf16 %v5030, %v5029
        %v5170 = vpack.c.bf16 %v5032, %v5031
        %5172 = vset.pattern.permute.xlu0 0
        %5173 = vperm.xlu0 %5172, %v5039
        %v5174 = vpop.permute.xlu0 %5173
        %5177 = vset.pattern.permute.xlu0 0
        %5178 = vperm.xlu0 %5177, %v5040
        %v5179 = vpop.permute.xlu0 %5178
        %v5183 = vunpack.c.l.b16 %v5165
        %v5184 = vunpack.c.l.b16 %v5166
        %v5185 = vpack.c.b16 %v5184, %v5183
        %v5187 = vsel %vm3039, %v5185, 0
        %5189 = vmatpush.bf16.msra.mxu0 0
        %5190 = vmatpush.bf16.msra.mxu0 0
        %5191 = vmatpush.bf16.msra.mxu0 0
        %5192 = vmatpush.bf16.msra.mxu0 0
        %5193 = vmatpush.bf16.msra.mxu0 %v5170
        %5194 = vmatpush.bf16.msra.mxu0 %v5169
        %5195 = vmatpush.bf16.msra.mxu0 %v5168
        %5196 = vmatpush.bf16.msra.mxu0 %v5167
        %5197 = vmatmul.bf16.gmra.mxu0 %v5187
        %v5198 = vpop.f32.mrf.mxu0
        %v5199 = vadd.f32 %v5174, %v5198
        %v5200 = vpop.f32.mrf.mxu0
        %v5201 = vadd.f32 %v5179, %v5200
        %5202 = vdwg.mxu0
        %v5203 = vmax.f32 %v5199, 0.0
        %v5204 = vmax.f32 %v5201, 0.0
        %v5205 = vadd.f32 %v5089, %v5090
        %5206 = vadd.xlane.f32.xlu0 %v5205
        %v5207 = vpop.xlane.xlu0 %5206
        %v5208 = vadd.f32 %v5091, %v5092
        %5209 = vadd.xlane.f32.xlu0 %v5208
        %v5210 = vpop.xlane.xlu0 %5209
        %v5211 = vrcp.pop 256.0
        %v5212 = vmul.f32 256.0, %v5211
        %v5213 = vsub.f32 1.0, %v5212
        %v5214 = vmul.f32 %v5211, %v5213
        %v5215 = vadd.f32 %v5211, %v5214
        %vm5216 = vweird.f32 %v5211
        %v5217 = vsel %vm5216, %v5211, %v5215
        %v5218 = vmul.f32 %v5207, %v5217
        %v5219 = vmul.f32 %v5210, %v5217
        %v5220 = vsel %vm3039, %v5127, 0.0
        %5221 = vadd.xlane.f32.xlu0 %v5220
        %v5222 = vpop.xlane.xlu0 %5221
        %v5223 = vsel %vm3039, %v5128, 0.0
        %5224 = vadd.xlane.f32.xlu0 %v5223
        %v5225 = vpop.xlane.xlu0 %5224
        %v5226 = vrcp.pop 64.0
        %v5227 = vmul.f32 64.0, %v5226
        %v5228 = vsub.f32 1.0, %v5227
        %v5229 = vmul.f32 %v5226, %v5228
        %v5230 = vadd.f32 %v5226, %v5229
        %vm5231 = vweird.f32 %v5226
        %v5232 = vsel %vm5231, %v5226, %v5230
        %v5233 = vmul.f32 %v5222, %v5232
        %v5234 = vmul.f32 %v5225, %v5232
        %v5235 = vadd.f32 %v5218, %v5233
        %v5236 = vadd.f32 %v5219, %v5234
        %v5237 = vsel %vm2798, %v5163, 0.0
        %5238 = vadd.xlane.f32.xlu0 %v5237
        %v5239 = vpop.xlane.xlu0 %5238
        %v5240 = vsel %vm2798, %v5164, 0.0
        %5241 = vadd.xlane.f32.xlu0 %v5240
        %v5242 = vpop.xlane.xlu0 %5241
        %v5243 = vrcp.pop 16.0
        %v5244 = vmul.f32 16.0, %v5243
        %v5245 = vsub.f32 1.0, %v5244
        %v5246 = vmul.f32 %v5243, %v5245
        %v5247 = vadd.f32 %v5243, %v5246
        %vm5248 = vweird.f32 %v5243
        %v5249 = vsel %vm5248, %v5243, %v5247
        %v5250 = vmul.f32 %v5239, %v5249
        %v5251 = vmul.f32 %v5242, %v5249
        %v5252 = vadd.f32 %v5235, %v5250
        %v5253 = vadd.f32 %v5236, %v5251
        %vm5254 = vcmask 31744
        %v5255 = vsel %vm5254, %v5203, 0.0
        %5256 = vadd.xlane.f32.xlu0 %v5255
        %v5257 = vpop.xlane.xlu0 %5256
        %v5258 = vsel %vm5254, %v5204, 0.0
        %5259 = vadd.xlane.f32.xlu0 %v5258
        %v5260 = vpop.xlane.xlu0 %5259
        %v5261 = vrcp.pop 4.0
        %v5262 = vmul.f32 4.0, %v5261
        %v5263 = vsub.f32 1.0, %v5262
        %v5264 = vmul.f32 %v5261, %v5263
        %v5265 = vadd.f32 %v5261, %v5264
        %vm5266 = vweird.f32 %v5261
        %v5267 = vsel %vm5266, %v5261, %v5265
        %v5268 = vmul.f32 %v5257, %v5267
        %v5269 = vmul.f32 %v5260, %v5267
        %v5270 = vadd.f32 %v5252, %v5268
        %v5271 = vadd.f32 %v5253, %v5269
        %v5272 = vld [vmem:[%s17] sm:$0xff]
        %v5273 = vld [vmem:[%s17 + $0x8] sm:$0xff]
        %v5274 = vmul.f32 %v5272, %v5270
        %v5275 = vmul.f32 %v5273, %v5271
        %v5276 = vsel %vm978, %v5274, 0.0
        %v5277 = vsel %vm978, %v5275, 0.0
        %v5278 = vadd.f32 %v5276, %v5277
        %v5279 = vrot.slane %v5278, 4
        %v5280 = vadd.f32 %v5278, %v5279
        %v5281 = vrot.slane %v5280, 2
        %v5282 = vadd.f32 %v5280, %v5281
        %v5283 = vrot.slane %v5282, 1
        %v5284 = vadd.f32 %v5282, %v5283
        %v5285 = vld [vmem:[%s18] sm:$0x1]
        %v5286 = vadd.f32 %v5284, %v5285
        %v5287 = vmax.f32 %v5286, 0.0
        %v5288 = vld [vmem:[%s19] sm:$0xff]
        %v5289 = vld [vmem:[%s19 + $0x8] sm:$0xff]
        %v5290 = vld [vmem:[%s19 + $0x10] sm:$0xff]
        %v5291 = vld [vmem:[%s19 + $0x18] sm:$0xff]
        %v5292 = vld [vmem:[%s19 + $0x20] sm:$0xff]
        %v5293 = vld [vmem:[%s19 + $0x28] sm:$0xff]
        %v5294 = vld [vmem:[%s19 + $0x30] sm:$0xff]
        %v5295 = vld [vmem:[%s19 + $0x38] sm:$0xff]
        %v5296 = vperm.slane %v5287, 0
        %v5297 = vmul.f32 %v5288, %v5296
        %v5298 = vmul.f32 %v5289, %v5296
        %v5299 = vmul.f32 %v5290, %v5296
        %v5300 = vmul.f32 %v5291, %v5296
        %v5301 = vmul.f32 %v5292, %v5296
        %v5302 = vmul.f32 %v5293, %v5296
        %v5303 = vmul.f32 %v5294, %v5296
        %v5304 = vmul.f32 %v5295, %v5296
        %v5305 = vsel %vm978, %v5297, 0.0
        %5306 = vadd.xlane.f32.xlu0 %v5305
        %v5307 = vpop.xlane.xlu0 %5306
        %v5308 = vsel %vm978, %v5298, 0.0
        %5309 = vadd.xlane.f32.xlu0 %v5308
        %v5310 = vpop.xlane.xlu0 %5309
        %v5311 = vsel %vm978, %v5299, 0.0
        %5312 = vadd.xlane.f32.xlu0 %v5311
        %v5313 = vpop.xlane.xlu0 %5312
        %v5314 = vsel %vm978, %v5300, 0.0
        %5315 = vadd.xlane.f32.xlu0 %v5314
        %v5316 = vpop.xlane.xlu0 %5315
        %v5317 = vsel %vm978, %v5301, 0.0
        %5318 = vadd.xlane.f32.xlu0 %v5317
        %v5319 = vpop.xlane.xlu0 %5318
        %v5320 = vsel %vm978, %v5302, 0.0
        %5321 = vadd.xlane.f32.xlu0 %v5320
        %v5322 = vpop.xlane.xlu0 %5321
        %v5323 = vsel %vm978, %v5303, 0.0
        %5324 = vadd.xlane.f32.xlu0 %v5323
        %v5325 = vpop.xlane.xlu0 %5324
        %v5326 = vsel %vm978, %v5304, 0.0
        %5327 = vadd.xlane.f32.xlu0 %v5326
        %v5328 = vpop.xlane.xlu0 %5327
        %v5329 = vld [vmem:[%s20] sm:$0xff]
        %v5330 = vld [vmem:[%s20 + $0x8] sm:$0xff]
        %v5331 = vld [vmem:[%s20 + $0x10] sm:$0xff]
        %v5332 = vld [vmem:[%s20 + $0x18] sm:$0xff]
        %v5333 = vld [vmem:[%s20 + $0x20] sm:$0xff]
        %v5334 = vld [vmem:[%s20 + $0x28] sm:$0xff]
        %v5335 = vld [vmem:[%s20 + $0x30] sm:$0xff]
        %v5336 = vld [vmem:[%s20 + $0x38] sm:$0xff]
        %v5337 = vadd.f32 %v5307, %v5329
        %v5338 = vadd.f32 %v5310, %v5330
        %v5339 = vadd.f32 %v5313, %v5331
        %v5340 = vadd.f32 %v5316, %v5332
        %v5341 = vadd.f32 %v5319, %v5333
        %v5342 = vadd.f32 %v5322, %v5334
        %v5343 = vadd.f32 %v5325, %v5335
        %v5344 = vadd.f32 %v5328, %v5336
        %v5345 = vmax.f32 %v5337, %v5339
        %v5346 = vmax.f32 %v5338, %v5340
        %v5347 = vmax.f32 %v5345, %v5341
        %v5348 = vmax.f32 %v5346, %v5342
        %v5349 = vmax.f32 %v5347, %v5343
        %v5350 = vmax.f32 %v5348, %v5344
        %v5351 = vsub.f32 %v5337, %v5349
        %v5352 = vsub.f32 %v5338, %v5350
        %v5353 = vmul.f32 %v5351, 1.442695
        %v5354 = vpow.pop %v5353
        %v5355 = vmul.f32 %v5352, 1.442695
        %v5356 = vpow.pop %v5355
        %v5357 = vsub.f32 %v5339, %v5349
        %v5358 = vsub.f32 %v5340, %v5350
        %v5359 = vmul.f32 %v5357, 1.442695
        %v5360 = vpow.pop %v5359
        %v5361 = vmul.f32 %v5358, 1.442695
        %v5362 = vpow.pop %v5361
        %v5363 = vsub.f32 %v5341, %v5349
        %v5364 = vsub.f32 %v5342, %v5350
        %v5365 = vmul.f32 %v5363, 1.442695
        %v5366 = vpow.pop %v5365
        %v5367 = vmul.f32 %v5364, 1.442695
        %v5368 = vpow.pop %v5367
        %v5369 = vsub.f32 %v5343, %v5349
        %v5370 = vsub.f32 %v5344, %v5350
        %v5371 = vmul.f32 %v5369, 1.442695
        %v5372 = vpow.pop %v5371
        %v5373 = vmul.f32 %v5370, 1.442695
        %v5374 = vpow.pop %v5373
        %v5375 = vadd.f32 %v5354, %v5360
        %v5376 = vadd.f32 %v5356, %v5362
        %v5377 = vadd.f32 %v5375, %v5366
        %v5378 = vadd.f32 %v5376, %v5368
        %v5379 = vadd.f32 %v5377, %v5372
        %v5380 = vadd.f32 %v5378, %v5374
        %v5381 = vld [vmem:[%s21] sm:$0x3]
        %v5382 = vrcp.pop %v5379
        %v5383 = vmul.f32 %v5379, %v5382
        %v5384 = vsub.f32 1.0, %v5383
        %v5385 = vmul.f32 %v5382, %v5384
        %v5386 = vadd.f32 %v5382, %v5385
        %vm5387 = vweird.f32 %v5379
        %vm5388 = vweird.f32 %v5382
        %vm5389 = vmor %vm5387, %vm5388
        %v5390 = vsel %vm5389, %v5382, %v5386
        %v5391 = vand.u32 2147483647, %v5379
        %vm5392 = vcmp.eq.f32.partialorder %v5391, 8.507059e+37
        %v5393 = vand.u32 %v5379, 2147483648
        %v5394 = vor.u32 1.1754944e-38, %v5393
        %v5395 = vsel %vm5392, %v5394, %v5390
        %v5396 = vmul.f32 %v5354, %v5395
        %v5397 = vrcp.pop %v5380
        %v5398 = vmul.f32 %v5380, %v5397
        %v5399 = vsub.f32 1.0, %v5398
        %v5400 = vmul.f32 %v5397, %v5399
        %v5401 = vadd.f32 %v5397, %v5400
        %vm5402 = vweird.f32 %v5380
        %vm5403 = vweird.f32 %v5397
        %vm5404 = vmor %vm5402, %vm5403
        %v5405 = vsel %vm5404, %v5397, %v5401
        %v5406 = vand.u32 2147483647, %v5380
        %vm5407 = vcmp.eq.f32.partialorder %v5406, 8.507059e+37
        %v5408 = vand.u32 %v5380, 2147483648
        %v5409 = vor.u32 1.1754944e-38, %v5408
        %v5410 = vsel %vm5407, %v5409, %v5405
        %v5411 = vmul.f32 %v5356, %v5410
        %5413 = vset.pattern.permute.xlu0 0
        %5414 = vperm.xlu0 %5413, %v5396
        %v5415 = vpop.permute.xlu0 %5414
        %5418 = vset.pattern.permute.xlu0 0
        %5419 = vperm.xlu0 %5418, %v5411
        %v5420 = vpop.permute.xlu0 %5419
        %v5422 = vmul.f32 %v5415, %v5089
        %v5423 = vmul.f32 %v5415, %v5090
        %v5424 = vmul.f32 %v5420, %v5091
        %v5425 = vmul.f32 %v5420, %v5092
        %v5426 = vpack.c.bf16 %v5424, %v5422
        %v5427 = vpack.c.bf16 %v5425, %v5423
        %v5428 = vmul.f32 %v5360, %v5395
        %v5429 = vmul.f32 %v5362, %v5410
        %5431 = vset.pattern.permute.xlu0 0
        %5432 = vperm.xlu0 %5431, %v5428
        %v5433 = vpop.permute.xlu0 %5432
        %5436 = vset.pattern.permute.xlu0 0
        %5437 = vperm.xlu0 %5436, %v5429
        %v5438 = vpop.permute.xlu0 %5437
        %v5440 = vmul.f32 %v5433, %v5127
        %v5441 = vmul.f32 %v5438, %v5128
        %v5442 = vpack.c.bf16 %v5441, %v5440
        %v5444 = vsel %vm2798, %v5381, 0
        %5446 = vmatpush.bf16.msra.mxu0 0
        %5447 = vmatpush.bf16.msra.mxu0 0
        %5448 = vmatpush.bf16.msra.mxu0 0
        %5449 = vmatpush.bf16.msra.mxu0 0
        %5450 = vmatpush.bf16.msra.mxu0 0
        %5451 = vmatpush.bf16.msra.mxu0 0
        %5452 = vmatpush.bf16.msra.mxu0 0
        %5453 = vmatpush.bf16.msra.mxu0 %v5442
        %5454 = vmatmul.bf16.gmra.mxu0 %v5444
        %v5455 = vpop.f32.mrf.mxu0
        %v5456 = vadd.f32 0.0, %v5455
        %v5457 = vpop.f32.mrf.mxu0
        %5458 = vdwg.mxu0
        %v5459 = vpack.c.bf16 %v5456, %v5456
        %v5460 = vld [vmem:[%s23] sm:$0xff]
        %v5461 = vld [vmem:[%s23 + $0x8] sm:$0xff]
        %v5462 = vld [vmem:[%s23 + $0x10] sm:$0xff]
        %v5463 = vld [vmem:[%s23 + $0x18] sm:$0xff]
        %v5464 = vld [vmem:[%s23 + $0x20] sm:$0xff]
        %v5465 = vld [vmem:[%s23 + $0x28] sm:$0xff]
        %v5466 = vld [vmem:[%s23 + $0x30] sm:$0xff]
        %v5467 = vld [vmem:[%s23 + $0x38] sm:$0xff]
        %v5476 = vunpack.c.l.b16 %v5460
        %v5477 = vunpack.c.h.b16 %v5460
        %v5478 = vunpack.c.l.b16 %v5461
        %v5479 = vunpack.c.h.b16 %v5461
        %v5480 = vunpack.c.l.b16 %v5462
        %v5481 = vunpack.c.h.b16 %v5462
        %v5482 = vunpack.c.l.b16 %v5463
        %v5483 = vunpack.c.h.b16 %v5463
        %v5484 = vunpack.c.l.b16 %v5464
        %v5485 = vunpack.c.h.b16 %v5464
        %v5486 = vunpack.c.l.b16 %v5465
        %v5487 = vunpack.c.h.b16 %v5465
        %v5488 = vunpack.c.l.b16 %v5466
        %v5489 = vunpack.c.h.b16 %v5466
        %v5490 = vunpack.c.l.b16 %v5467
        %v5491 = vunpack.c.h.b16 %v5467
        %v5492 = vpack.c.b16 %v5478, %v5476
        %v5493 = vpack.c.b16 %v5479, %v5477
        %v5494 = vpack.c.b16 %v5482, %v5480
        %v5495 = vpack.c.b16 %v5483, %v5481
        %v5496 = vpack.c.b16 %v5486, %v5484
        %v5497 = vpack.c.b16 %v5487, %v5485
        %v5498 = vpack.c.b16 %v5490, %v5488
        %v5499 = vpack.c.b16 %v5491, %v5489
        %v5509 = vsel %vm3039, %v5459, 0
        %5511 = vmatpush.bf16.msra.mxu0 0
        %5512 = vmatpush.bf16.msra.mxu0 0
        %5513 = vmatpush.bf16.msra.mxu0 0
        %5514 = vmatpush.bf16.msra.mxu0 0
        %5515 = vmatpush.bf16.msra.mxu0 %v5498
        %5516 = vmatpush.bf16.msra.mxu0 %v5496
        %5517 = vmatpush.bf16.msra.mxu0 %v5494
        %5518 = vmatpush.bf16.msra.mxu0 %v5492
        %5519 = vmatmul.bf16.gmra.mxu0 %v5509
        %v5520 = vpop.f32.mrf.mxu0
        %v5521 = vadd.f32 0.0, %v5520
        %v5522 = vpop.f32.mrf.mxu0
        %5523 = vdwg.mxu0
        %5524 = vmatpush.bf16.msra.mxu0 0
        %5525 = vmatpush.bf16.msra.mxu0 0
        %5526 = vmatpush.bf16.msra.mxu0 0
        %5527 = vmatpush.bf16.msra.mxu0 0
        %5528 = vmatpush.bf16.msra.mxu0 %v5499
        %5529 = vmatpush.bf16.msra.mxu0 %v5497
        %5530 = vmatpush.bf16.msra.mxu0 %v5495
        %5531 = vmatpush.bf16.msra.mxu0 %v5493
        %5532 = vmatmul.bf16.gmra.mxu0 %v5509
        %v5533 = vpop.f32.mrf.mxu0
        %v5534 = vadd.f32 0.0, %v5533
        %v5535 = vpop.f32.mrf.mxu0
        %5536 = vdwg.mxu0
        %5537 = vmatpush.bf16.msra.mxu0 0
        %5538 = vmatpush.bf16.msra.mxu0 0
        %5539 = vmatpush.bf16.msra.mxu0 0
        %5540 = vmatpush.bf16.msra.mxu0 0
        %5541 = vmatpush.bf16.msra.mxu0 0
        %5542 = vmatpush.bf16.msra.mxu0 0
        %5543 = vmatpush.bf16.msra.mxu0 0
        %5544 = vmatpush.bf16.msra.mxu0 %v5426
        %5545 = vmatmul.bf16.gmra.mxu0 %v5444
        %v5546 = vpop.f32.mrf.mxu0
        %v5547 = vadd.f32 %v5521, %v5546
        %v5548 = vpop.f32.mrf.mxu0
        %5549 = vdwg.mxu0
        %5550 = vmatpush.bf16.msra.mxu0 0
        %5551 = vmatpush.bf16.msra.mxu0 0
        %5552 = vmatpush.bf16.msra.mxu0 0
        %5553 = vmatpush.bf16.msra.mxu0 0
        %5554 = vmatpush.bf16.msra.mxu0 0
        %5555 = vmatpush.bf16.msra.mxu0 0
        %5556 = vmatpush.bf16.msra.mxu0 0
        %5557 = vmatpush.bf16.msra.mxu0 %v5427
        %5558 = vmatmul.bf16.gmra.mxu0 %v5444
        %v5559 = vpop.f32.mrf.mxu0
        %v5560 = vadd.f32 %v5534, %v5559
        %v5561 = vpop.f32.mrf.mxu0
        %5562 = vdwg.mxu0
        %v5563 = vmul.f32 %v5366, %v5395
        %v5564 = vmul.f32 %v5368, %v5410
        %5566 = vset.pattern.permute.xlu0 0
        %5567 = vperm.xlu0 %5566, %v5563
        %v5568 = vpop.permute.xlu0 %5567
        %5571 = vset.pattern.permute.xlu0 0
        %5572 = vperm.xlu0 %5571, %v5564
        %v5573 = vpop.permute.xlu0 %5572
        %v5575 = vmul.f32 %v5568, %v5163
        %v5576 = vmul.f32 %v5573, %v5164
        %v5577 = vpack.c.bf16 %v5576, %v5575
        %5578 = vmatpush.bf16.msra.mxu0 0
        %5579 = vmatpush.bf16.msra.mxu0 0
        %5580 = vmatpush.bf16.msra.mxu0 0
        %5581 = vmatpush.bf16.msra.mxu0 0
        %5582 = vmatpush.bf16.msra.mxu0 0
        %5583 = vmatpush.bf16.msra.mxu0 0
        %5584 = vmatpush.bf16.msra.mxu0 0
        %5585 = vmatpush.bf16.msra.mxu0 %v5577
        %5586 = vmatmul.bf16.gmra.mxu0 %v5444
        %v5587 = vpop.f32.mrf.mxu0
        %v5588 = vadd.f32 0.0, %v5587
        %v5589 = vpop.f32.mrf.mxu0
        %5590 = vdwg.mxu0
        %v5591 = vpack.c.bf16 %v5588, %v5588
        %v5592 = vld [vmem:[%s24] sm:$0xff]
        %v5593 = vld [vmem:[%s24 + $0x8] sm:$0xff]
        %v5596 = vunpack.c.l.b16 %v5592
        %v5597 = vunpack.c.h.b16 %v5592
        %v5598 = vunpack.c.l.b16 %v5593
        %v5599 = vunpack.c.h.b16 %v5593
        %v5600 = vpack.c.b16 %v5598, %v5596
        %v5601 = vpack.c.b16 %v5599, %v5597
        %v5605 = vsel %vm2798, %v5591, 0
        %5607 = vmatpush.bf16.msra.mxu0 0
        %5608 = vmatpush.bf16.msra.mxu0 0
        %5609 = vmatpush.bf16.msra.mxu0 0
        %5610 = vmatpush.bf16.msra.mxu0 0
        %5611 = vmatpush.bf16.msra.mxu0 0
        %5612 = vmatpush.bf16.msra.mxu0 0
        %5613 = vmatpush.bf16.msra.mxu0 0
        %5614 = vmatpush.bf16.msra.mxu0 %v5600
        %5615 = vmatmul.bf16.gmra.mxu0 %v5605
        %v5616 = vpop.f32.mrf.mxu0
        %v5617 = vadd.f32 0.0, %v5616
        %v5618 = vpop.f32.mrf.mxu0
        %5619 = vdwg.mxu0
        %5620 = vmatpush.bf16.msra.mxu0 0
        %5621 = vmatpush.bf16.msra.mxu0 0
        %5622 = vmatpush.bf16.msra.mxu0 0
        %5623 = vmatpush.bf16.msra.mxu0 0
        %5624 = vmatpush.bf16.msra.mxu0 0
        %5625 = vmatpush.bf16.msra.mxu0 0
        %5626 = vmatpush.bf16.msra.mxu0 0
        %5627 = vmatpush.bf16.msra.mxu0 %v5601
        %5628 = vmatmul.bf16.gmra.mxu0 %v5605
        %v5629 = vpop.f32.mrf.mxu0
        %v5630 = vadd.f32 0.0, %v5629
        %v5631 = vpop.f32.mrf.mxu0
        %5632 = vdwg.mxu0
        %v5633 = vadd.f32 %v5547, %v5617
        %v5634 = vadd.f32 %v5560, %v5630
        %v5635 = vmul.f32 %v5372, %v5395
        %v5636 = vmul.f32 %v5374, %v5410
        %5638 = vset.pattern.permute.xlu0 0
        %5639 = vperm.xlu0 %5638, %v5635
        %v5640 = vpop.permute.xlu0 %5639
        %5643 = vset.pattern.permute.xlu0 0
        %5644 = vperm.xlu0 %5643, %v5636
        %v5645 = vpop.permute.xlu0 %5644
        %v5647 = vmul.f32 %v5640, %v5203
        %v5648 = vmul.f32 %v5645, %v5204
        %v5649 = vpack.c.bf16 %v5648, %v5647
        %5650 = vmatpush.bf16.msra.mxu0 0
        %5651 = vmatpush.bf16.msra.mxu0 0
        %5652 = vmatpush.bf16.msra.mxu0 0
        %5653 = vmatpush.bf16.msra.mxu0 0
        %5654 = vmatpush.bf16.msra.mxu0 0
        %5655 = vmatpush.bf16.msra.mxu0 0
        %5656 = vmatpush.bf16.msra.mxu0 0
        %5657 = vmatpush.bf16.msra.mxu0 %v5649
        %5658 = vmatmul.bf16.gmra.mxu0 %v5444
        %v5659 = vpop.f32.mrf.mxu0
        %v5660 = vadd.f32 0.0, %v5659
        %v5661 = vpop.f32.mrf.mxu0
        %5662 = vdwg.mxu0
        %v5663 = vpack.c.bf16 %v5660, %v5660
        %v5664 = vld [vmem:[%s25] sm:$0xf]
        %5666 = vst [vmem:[#allocation1] ss:$4 sm:$0xff] %v5664
        %v5667 = vld.sshfl [vmem:[#allocation1] sm:$0xff pattern:$0x73625140]
        %v5668 = vld.sshfl [vmem:[#allocation1 + $0x8] sm:$0xff pattern:$0x73625140]
        %v5670 = vsel %vm5254, %v5663, 0
        %vm5672 = vcmask 1041408
        %v5673 = vsel %vm5672, %v5667, 0
        %v5675 = vsel %vm5672, %v5668, 0
        %5677 = vmatpush.bf16.msra.mxu0 0
        %5678 = vmatpush.bf16.msra.mxu0 0
        %5679 = vmatpush.bf16.msra.mxu0 0
        %5680 = vmatpush.bf16.msra.mxu0 0
        %5681 = vmatpush.bf16.msra.mxu0 0
        %5682 = vmatpush.bf16.msra.mxu0 0
        %5683 = vmatpush.bf16.msra.mxu0 0
        %5684 = vmatpush.bf16.msra.mxu0 %v5673
        %5685 = vmatmul.bf16.gmra.mxu0 %v5670
        %v5686 = vpop.f32.mrf.mxu0
        %v5687 = vadd.f32 0.0, %v5686
        %v5688 = vpop.f32.mrf.mxu0
        %5689 = vdwg.mxu0
        %5690 = vmatpush.bf16.msra.mxu0 0
        %5691 = vmatpush.bf16.msra.mxu0 0
        %5692 = vmatpush.bf16.msra.mxu0 0
        %5693 = vmatpush.bf16.msra.mxu0 0
        %5694 = vmatpush.bf16.msra.mxu0 0
        %5695 = vmatpush.bf16.msra.mxu0 0
        %5696 = vmatpush.bf16.msra.mxu0 0
        %5697 = vmatpush.bf16.msra.mxu0 %v5675
        %5698 = vmatmul.bf16.gmra.mxu0 %v5670
        %v5699 = vpop.f32.mrf.mxu0
        %v5700 = vadd.f32 0.0, %v5699
        %v5701 = vpop.f32.mrf.mxu0
        %5702 = vdwg.mxu0
        %v5703 = vadd.f32 %v5633, %v5687
        %v5704 = vadd.f32 %v5634, %v5700
        %v5705 = vld [vmem:[%s22] sm:$0xf]
        %5707 = vset.pattern.permute.xlu0 0
        %5708 = vperm.xlu0 %5707, %v5705
        %v5709 = vpop.permute.xlu0 %5708
        %v5711 = vadd.f32 %v5703, %v5709
        %v5712 = vadd.f32 %v5704, %v5709
        %v5715 = vrot.slane %v5712, 4
        %v5716 = vsel %vm1006, %v5711, %v5715
        %5718 = vst [vmem:[%s840] sm:$0xff] %v5716
        %p5719 = scmp.lt.s32.totalorder %s37, 1
        %s5720 = scalar_select %p5719, %s37, 1
        %s5721 = smul.addr %s5720, 2
        %s5722 = smul.addr %s5721, 4
        %s5723 = scalar_lea.vmem %s26, %s5722
        // Predicated region
        $region163: #{msknet_forward.1} parent=157 // pred_check
          %p5724 = pneg %p606
        $region164: #{msknet_forward.1} parent=157 // pred_check_branch
          %5726 = sbr.rel (%p5724) target = $region166
        $region165: #{msknet_forward.1} parent=157 // pred_region
          _
        $region166: #{msknet_forward.1} parent=157 // pred_fallthru
          _
      $region158: #{msknet_forward.1} parent=5 // pred_fallthru
        _
      %p5727 = scmp.le.s32.totalorder 2, %s32
      // Predicated region
      $region167: #{msknet_forward.1} parent=5 // pred_check
        %p5728 = pneg %p5727
      $region168: #{msknet_forward.1} parent=5 // pred_check_branch
        %5730 = sbr.rel (%p5728) target = $region170
      $region169: #{msknet_forward.1} parent=5 // pred_region
        %s5731 = ssub.s32 %s32, 2
        // Predicated region
        $region171: #{msknet_forward.1} parent=169 // pred_check
          %p5732 = pneg %p612
        $region172: #{msknet_forward.1} parent=169 // pred_check_branch
          %5734 = sbr.rel (%p5732) target = $region174
        $region173: #{msknet_forward.1} parent=169 // pred_region
          %p5735 = scmp.lt.s32.totalorder %s38, 1
          %s5736 = scalar_select %p5735, %s38, 1
          %s5737 = smul.addr %s5736, 2
          %s5738 = smul.addr %s5737, 4
          %s5739 = scalar_lea.vmem %s26, %s5738
        $region174: #{msknet_forward.1} parent=169 // pred_fallthru
          _
      $region170: #{msknet_forward.1} parent=5 // pred_fallthru
        _
    $region6: #{msknet_forward.1} parent=1 // loop_footer
      %s36 = sadd.s32 1, %s32
    $region7: #{msknet_forward.1} parent=1 // loop_footer_branch
      %31 = sbr.rel target = $region3
    $region8: #{msknet_forward.1} parent=1 // loop_exit
      _

</llo_original>
